<compile_context>
chip_gen: v5e
topology: v5e:2x2
jax: 0.10.0
libtpu: 0.0.40
codegen_flags: <defaults>
</compile_context>

<pallas_src>
import functools
import math

import jax
import jax.numpy as jnp
from jax.experimental import pallas as pl
from jax.experimental.pallas import tpu as pltpu

BN_EPS = 1e-5


def _round_up(x, m):
    return (x + m - 1) // m * m


def _pick_m_tile(m, tm_max=256):
    """Adaptive row tile: TM = min(tm_max, round_up(m, 8))."""
    if m <= tm_max:
        tm = max(8, _round_up(m, 8))
        return tm, tm
    return tm_max, _round_up(m, tm_max)


def _pick_div_tile(dp, cands=(512, 384, 256, 128)):
    """Largest 128-multiple tile that divides the (already padded) dim."""
    for t in cands:
        if dp % t == 0:
            return t
    return 128


# ----------------------------- Pallas kernel -------------------------------

def _fused_mm_kernel(x_ref, w_ref, s_ref, b_ref, *refs, relu, has_res, single_k):
    """Tiled matmul (bf16 in, f32 acc) + folded-BN affine + optional residual/ReLU.

    Grid = (groups, M tiles, N tiles[, K tiles]).  The K axis (innermost,
    arbitrary) only exists when the padded K spans multiple tiles; otherwise
    the accumulator scratch is skipped and the epilogue is applied directly to
    the dot output.
    """
    if has_res:
        r_ref = refs[0]
        refs = refs[1:]
    o_ref = refs[0]

    part = jnp.dot(x_ref[...], w_ref[...], preferred_element_type=jnp.float32)

    def _epilogue(acc):
        y = acc * s_ref[...] + b_ref[...]
        if has_res:
            y = y + r_ref[...]
        if relu:
            y = jnp.maximum(y, 0.0)
        o_ref[...] = y.astype(o_ref.dtype)

    if single_k:
        _epilogue(part)
    else:
        acc_ref = refs[1]
        k = pl.program_id(3)

        @pl.when(k == 0)
        def _():
            acc_ref[...] = part

        @pl.when(k > 0)
        def _():
            acc_ref[...] += part

        @pl.when(k == pl.num_programs(3) - 1)
        def _():
            _epilogue(acc_ref[...])


def fused_matmul_grouped(xg, w_pad, s_pad, b_pad, n_out, residual=None, relu=False):
    """y[g] = act((xg[g] @ w[g]) * s[g] + b[g] [+ res[g]]) in one pallas_call.

    xg:       (G, M, K)   float32 activations (cast to bf16 here, padded to Kp)
    w_pad:    (G, Kp, Np) bfloat16 weights (pre-padded at build time)
    s/b_pad:  (G, 1, Np)  float32 folded BN scale / bias
    residual: (G, M, n_out) float32 or None
    returns   (G, M, n_out) float32
    """
    G, M, K = xg.shape
    Kp, Np = w_pad.shape[1], w_pad.shape[2]
    TM, Mp = _pick_m_tile(M)
    TK = _pick_div_tile(Kp)
    TN = _pick_div_tile(Np)
    kt = Kp // TK
    single_k = kt == 1

    xp = xg.astype(jnp.bfloat16)
    if Mp != M or Kp != K:
        xp = jnp.pad(xp, ((0, 0), (0, Mp - M), (0, Kp - K)))

    has_res = residual is not None
    operands = [xp, w_pad, s_pad, b_pad]

    if single_k:
        grid = (G, Mp // TM, Np // TN)
        in_specs = [
            pl.BlockSpec((None, TM, TK), lambda g, i, j: (g, i, 0)),
            pl.BlockSpec((None, TK, TN), lambda g, i, j: (g, 0, j)),
            pl.BlockSpec((None, 1, TN), lambda g, i, j: (g, 0, j)),
            pl.BlockSpec((None, 1, TN), lambda g, i, j: (g, 0, j)),
        ]
        out_spec = pl.BlockSpec((None, TM, TN), lambda g, i, j: (g, i, j))
        semantics = ("parallel", "parallel", "parallel")
        scratch = []
    else:
        grid = (G, Mp // TM, Np // TN, kt)
        in_specs = [
            pl.BlockSpec((None, TM, TK), lambda g, i, j, k: (g, i, k)),
            pl.BlockSpec((None, TK, TN), lambda g, i, j, k: (g, k, j)),
            pl.BlockSpec((None, 1, TN), lambda g, i, j, k: (g, 0, j)),
            pl.BlockSpec((None, 1, TN), lambda g, i, j, k: (g, 0, j)),
        ]
        out_spec = pl.BlockSpec((None, TM, TN), lambda g, i, j, k: (g, i, j))
        semantics = ("parallel", "parallel", "parallel", "arbitrary")
        scratch = [pltpu.VMEM((TM, TN), jnp.float32)]

    if has_res:
        rp = residual.astype(jnp.float32)
        if Mp != M or Np != n_out:
            rp = jnp.pad(rp, ((0, 0), (0, Mp - M), (0, Np - n_out)))
        operands.append(rp)
        in_specs.append(out_spec)

    out = pl.pallas_call(
        functools.partial(_fused_mm_kernel, relu=relu, has_res=has_res,
                          single_k=single_k),
        out_shape=jax.ShapeDtypeStruct((G, Mp, Np), jnp.float32),
        grid_spec=pltpu.PrefetchScalarGridSpec(
            num_scalar_prefetch=0,
            grid=grid,
            in_specs=in_specs,
            out_specs=out_spec,
            scratch_shapes=scratch,
        ),
        compiler_params=pltpu.CompilerParams(dimension_semantics=semantics),
    )(*operands)

    if Mp != M or Np != n_out:
        out = out[:, :M, :n_out]
    return out


# ------------------------------- glue (JAX) --------------------------------

def _im2col_grouped(x, kh, kw, stride, padding, dilation, groups):
    """x: NHWC -> (groups, N*OH*OW, kh*kw*cin_g) patches (group-major channels)."""
    n, h, w, c = x.shape
    cg = c // groups
    if padding:
        x = jnp.pad(x, ((0, 0), (padding, padding), (padding, padding), (0, 0)))
    oh = (h + 2 * padding - dilation * (kh - 1) - 1) // stride + 1
    ow = (w + 2 * padding - dilation * (kw - 1) - 1) // stride + 1

    if kh == 1 and kw == 1:
        p = x[:, :(oh - 1) * stride + 1:stride, :(ow - 1) * stride + 1:stride, :]
        if groups == 1:
            p = p.reshape(1, n * oh * ow, c)
        else:
            p = p.reshape(n * oh * ow, groups, cg)
            p = jnp.transpose(p, (1, 0, 2))
        return p, (n, oh, ow)

    cols = []
    for i in range(kh):
        for j in range(kw):
            hs, ws = i * dilation, j * dilation
            cols.append(x[:, hs:hs + (oh - 1) * stride + 1:stride,
                            ws:ws + (ow - 1) * stride + 1:stride, :])
    p = jnp.stack(cols, axis=3)                              # (n, oh, ow, kh*kw, c)
    if groups == 1:
        p = p.reshape(1, n * oh * ow, kh * kw * c)
    else:
        p = p.reshape(n * oh * ow, kh * kw, groups, cg)
        p = jnp.transpose(p, (2, 0, 1, 3)).reshape(groups, n * oh * ow, kh * kw * cg)
    return p, (n, oh, ow)


def conv_bn_act(x, cp, *, stride=1, padding=0, dilation=1, relu=True, residual=None):
    """conv (no bias) + folded BN + optional residual add + optional ReLU. NHWC."""
    kh, kw, groups = cp["kh"], cp["kw"], cp["groups"]
    xg, (n, oh, ow) = _im2col_grouped(x, kh, kw, stride, padding, dilation, groups)
    res_g = None
    if residual is not None:
        assert groups == 1
        res_g = residual.reshape(1, n * oh * ow, cp["cout"])
    y = fused_matmul_grouped(xg, cp["w"], cp["scale"], cp["bias"], cp["cout_g"],
                             residual=res_g, relu=relu)
    if groups == 1:
        y = y.reshape(n, oh, ow, cp["cout"])
    else:
        y = jnp.transpose(y, (1, 0, 2)).reshape(n, oh, ow, groups * cp["cout_g"])
    return y


# ---------------------------- parameter building ---------------------------

def init_conv_bn(key, kh, kw, cin, cout, groups=1):
    """Kaiming conv weight + randomized inference-mode BN, pre-folded/padded."""
    kconv, kg, kb, km, kv = jax.random.split(key, 5)
    cin_g, cout_g = cin // groups, cout // groups
    fan_out = kh * kw * cout
    w = math.sqrt(2.0 / fan_out) * jax.random.normal(
        kconv, (kh, kw, cin_g, cout), jnp.float32)           # HWIO
    gamma = jax.random.uniform(kg, (cout,), jnp.float32, 0.5, 1.5)
    beta = 0.1 * jax.random.normal(kb, (cout,), jnp.float32)
    mean = 0.1 * jax.random.normal(km, (cout,), jnp.float32)
    var = jax.random.uniform(kv, (cout,), jnp.float32, 0.5, 1.5)

    scale = gamma / jnp.sqrt(var + BN_EPS)
    bias = beta - mean * scale

    # (kh, kw, cin_g, cout) -> (groups, kh*kw*cin_g, cout_g), pad + bf16 ONCE.
    wg = w.reshape(kh, kw, cin_g, groups, cout_g)
    wg = jnp.transpose(wg, (3, 0, 1, 2, 4)).reshape(groups, kh * kw * cin_g, cout_g)
    K, N = kh * kw * cin_g, cout_g
    Kp, Np = _round_up(K, 128), _round_up(N, 128)
    w_pad = jnp.pad(wg, ((0, 0), (0, Kp - K), (0, Np - N))).astype(jnp.bfloat16)
    sg = scale.reshape(groups, cout_g)[:, None, :]
    bg = bias.reshape(groups, cout_g)[:, None, :]
    s_pad = jnp.pad(sg, ((0, 0), (0, 0), (0, Np - N)))
    b_pad = jnp.pad(bg, ((0, 0), (0, 0), (0, Np - N)))

    return {"kh": kh, "kw": kw, "groups": groups, "cin": cin, "cout": cout,
            "cout_g": cout_g, "w": w_pad, "scale": s_pad, "bias": b_pad,
            # f32 originals, kept only for the pure-JAX reference check
            "w_hwio": w, "scale_full": scale, "bias_full": bias}


def init_bottleneck(key, inplanes, planes, stride=1, groups=1, base_width=64,
                    dilation=1):
    expansion = 4
    width = int(planes * (base_width / 64.0)) * groups
    k1, k2, k3, k4 = jax.random.split(key, 4)
    p = {"stride": stride, "dilation": dilation,
         "conv1": init_conv_bn(k1, 1, 1, inplanes, width, 1),
         "conv2": init_conv_bn(k2, 3, 3, width, width, groups),
         "conv3": init_conv_bn(k3, 1, 1, width, planes * expansion, 1)}
    if stride != 1 or inplanes != planes * expansion:
        p["down"] = init_conv_bn(k4, 1, 1, inplanes, planes * expansion, 1)
    return p


# --------------------------------- forward ---------------------------------

def bottleneck_forward(p, x):
    """Bottleneck.forward, NHWC float32 in/out."""
    identity = x
    out = conv_bn_act(x, p["conv1"], stride=1, padding=0, relu=True)
    out = conv_bn_act(out, p["conv2"], stride=p["stride"], padding=p["dilation"],
                      dilation=p["dilation"], relu=True)
    if "down" in p:
        identity = conv_bn_act(x, p["down"], stride=p["stride"], padding=0,
                               relu=False)
    out = conv_bn_act(out, p["conv3"], stride=1, padding=0, relu=True,
                      residual=identity)
    return out


# ------------------------- pure-JAX reference check -------------------------

def _ref_conv_bn(x, cp, stride, padding, dilation):
    xr = x.astype(jnp.bfloat16).astype(jnp.float32)
    wr = cp["w_hwio"].astype(jnp.bfloat16).astype(jnp.float32)
    y = jax.lax.conv_general_dilated(
        xr, wr, window_strides=(stride, stride),
        padding=[(padding, padding), (padding, padding)],
        rhs_dilation=(dilation, dilation),
        dimension_numbers=("NHWC", "HWIO", "NHWC"),
        feature_group_count=cp["groups"],
        precision=jax.lax.Precision.HIGHEST)
    return y * cp["scale_full"] + cp["bias_full"]


def bottleneck_reference(p, x):
    identity = x
    out = jnp.maximum(_ref_conv_bn(x, p["conv1"], 1, 0, 1), 0.0)
    out = jnp.maximum(
        _ref_conv_bn(out, p["conv2"], p["stride"], p["dilation"], p["dilation"]), 0.0)
    if "down" in p:
        identity = _ref_conv_bn(x, p["down"], p["stride"], 0, 1)
    out = _ref_conv_bn(out, p["conv3"], 1, 0, 1) + identity
    return jnp.maximum(out, 0.0)


# ----------------------------------- main -----------------------------------

if __name__ == "__main__":
    key = jax.random.PRNGKey(0)
    kp1, kp2, kx = jax.random.split(key, 3)

    # Block A: identity residual (inplanes == planes*4), stride=1, groups=1.
    blk_a = init_bottleneck(kp1, inplanes=64, planes=16, stride=1, groups=1,
                            base_width=64, dilation=1)
    # Block B: stride-2 downsample branch + ResNeXt-style grouped 3x3 (groups=2).
    blk_b = init_bottleneck(kp2, inplanes=64, planes=32, stride=2, groups=2,
                            base_width=64, dilation=1)

    x_nchw = jax.random.normal(kx, (2, 64, 16, 16), jnp.float32)  # PyTorch NCHW

    @jax.jit
    def run(xin):
        x = jnp.transpose(xin, (0, 2, 3, 1)).astype(jnp.float32)  # -> NHWC
        y = bottleneck_forward(blk_a, x)
        y = bottleneck_forward(blk_b, y)
        return jnp.transpose(y, (0, 3, 1, 2))                     # -> NCHW

    out = jax.block_until_ready(run(x_nchw))
    assert out.shape == (2, 128, 8, 8), out.shape
    assert bool(jnp.all(jnp.isfinite(out)))

    # Correctness vs a pure-JAX (lax.conv) reference using the same bf16-rounded
    # operands and the same folded-BN affine.
    xr = jnp.transpose(x_nchw, (0, 2, 3, 1)).astype(jnp.float32)
    ref = bottleneck_reference(blk_b, bottleneck_reference(blk_a, xr))
    ref = jnp.transpose(ref, (0, 3, 1, 2))
    err = float(jnp.max(jnp.abs(out - ref)))
    mag = float(jnp.max(jnp.abs(ref))) + 1e-6
    assert err <= 2e-2 * mag + 1e-3, (err, mag)

    print("KERNEL_OK")
</pallas_src>

<mosaic_0001>
module attributes {stable_mosaic.version = 11 : i64} {
  func.func @_fused_mm_kernel(%arg0: i32, %arg1: i32, %arg2: i32, %arg3: memref<1x256x128xbf16, #tpu.memory_space<vmem>>, %arg4: memref<1x128x128xbf16, #tpu.memory_space<vmem>>, %arg5: memref<1x1x128xf32, #tpu.memory_space<vmem>>, %arg6: memref<1x1x128xf32, #tpu.memory_space<vmem>>, %arg7: memref<1x256x128xf32, #tpu.memory_space<vmem>>) attributes {dimension_semantics = [#tpu.dimension_semantics<parallel>, #tpu.dimension_semantics<parallel>, #tpu.dimension_semantics<parallel>], iteration_bounds = array<i64: 1, 2, 1>, scalar_prefetch = 0 : i64, scratch_operands = 0 : i64, tpu.core_type = #tpu.core_type<tc>, window_params = [{transform_indices = @transform_0, window_bounds = array<i64: 1, 256, 128>}, {transform_indices = @transform_1, window_bounds = array<i64: 1, 128, 128>}, {transform_indices = @transform_2, window_bounds = array<i64: 1, 1, 128>}, {transform_indices = @transform_3, window_bounds = array<i64: 1, 1, 128>}, {transform_indices = @transform_4, window_bounds = array<i64: 1, 256, 128>}]} {
    %c0 = arith.constant 0 : index
    %c0_0 = arith.constant 0 : index
    %c0_1 = arith.constant 0 : index
    %0 = vector.load %arg3[%c0, %c0_0, %c0_1] : memref<1x256x128xbf16, #tpu.memory_space<vmem>>, vector<1x256x128xbf16>
    %1 = vector.shape_cast %0 : vector<1x256x128xbf16> to vector<256x128xbf16>
    %c0_2 = arith.constant 0 : index
    %c0_3 = arith.constant 0 : index
    %c0_4 = arith.constant 0 : index
    %2 = vector.load %arg4[%c0_2, %c0_3, %c0_4] : memref<1x128x128xbf16, #tpu.memory_space<vmem>>, vector<1x128x128xbf16>
    %3 = vector.shape_cast %2 : vector<1x128x128xbf16> to vector<128x128xbf16>
    %cst = arith.constant dense<0.000000e+00> : vector<256x128xf32>
    %4 = tpu.matmul %1, %3, %cst {dimension_numbers = #tpu.dot_dimension_numbers<[1], [0], [0], [1], [0, 0, 1, 1], [], []>} : vector<256x128xbf16>, vector<128x128xbf16>, vector<256x128xf32> -> vector<256x128xf32>
    %c0_5 = arith.constant 0 : index
    %c0_6 = arith.constant 0 : index
    %c0_7 = arith.constant 0 : index
    %5 = vector.load %arg5[%c0_5, %c0_6, %c0_7] : memref<1x1x128xf32, #tpu.memory_space<vmem>>, vector<1x1x128xf32>
    %6 = vector.shape_cast %5 : vector<1x1x128xf32> to vector<1x128xf32>
    %7 = vector.broadcast %6 : vector<1x128xf32> to vector<256x128xf32>
    %8 = arith.mulf %4, %7 : vector<256x128xf32>
    %c0_8 = arith.constant 0 : index
    %c0_9 = arith.constant 0 : index
    %c0_10 = arith.constant 0 : index
    %9 = vector.load %arg6[%c0_8, %c0_9, %c0_10] : memref<1x1x128xf32, #tpu.memory_space<vmem>>, vector<1x1x128xf32>
    %10 = vector.shape_cast %9 : vector<1x1x128xf32> to vector<1x128xf32>
    %11 = vector.broadcast %10 : vector<1x128xf32> to vector<256x128xf32>
    %12 = arith.addf %8, %11 : vector<256x128xf32>
    %cst_11 = arith.constant 0.000000e+00 : f32
    %13 = vector.broadcast %cst_11 : f32 to vector<256x128xf32>
    %14 = arith.maximumf %12, %13 : vector<256x128xf32>
    %c0_12 = arith.constant 0 : index
    %c0_13 = arith.constant 0 : index
    %c0_14 = arith.constant 0 : index
    %15 = vector.load %arg7[%c0_12, %c0_13, %c0_14] : memref<1x256x128xf32, #tpu.memory_space<vmem>>, vector<1x256x128xf32>
    %16 = vector.shape_cast %15 : vector<1x256x128xf32> to vector<256x128xf32>
    %17 = vector.shape_cast %14 : vector<256x128xf32> to vector<1x256x128xf32>
    tpu.vector_store %arg7[%c0_12, %c0_13, %c0_14], %17 {strides = array<i32>} : memref<1x256x128xf32, #tpu.memory_space<vmem>>, vector<1x256x128xf32>,
    return
  }
  func.func @transform_0(%arg0: i32, %arg1: i32, %arg2: i32) -> (i32, i32, i32) {
    %c0_i32 = arith.constant 0 : i32
    %c0_i32_0 = arith.constant 0 : i32
    return %arg0, %arg1, %c0_i32 : i32, i32, i32
  }
  func.func @transform_1(%arg0: i32, %arg1: i32, %arg2: i32) -> (i32, i32, i32) {
    %c0_i32 = arith.constant 0 : i32
    %c0_i32_0 = arith.constant 0 : i32
    return %arg0, %c0_i32, %arg2 : i32, i32, i32
  }
  func.func @transform_2(%arg0: i32, %arg1: i32, %arg2: i32) -> (i32, i32, i32) {
    %c0_i32 = arith.constant 0 : i32
    %c0_i32_0 = arith.constant 0 : i32
    return %arg0, %c0_i32, %arg2 : i32, i32, i32
  }
  func.func @transform_3(%arg0: i32, %arg1: i32, %arg2: i32) -> (i32, i32, i32) {
    %c0_i32 = arith.constant 0 : i32
    %c0_i32_0 = arith.constant 0 : i32
    return %arg0, %c0_i32, %arg2 : i32, i32, i32
  }
  func.func @transform_4(%arg0: i32, %arg1: i32, %arg2: i32) -> (i32, i32, i32) {
    %c0_i32 = arith.constant 0 : i32
    return %arg0, %arg1, %arg2 : i32, i32, i32
  }
}

module attributes {stable_mosaic.version = 11 : i64} {
  func.func @_fused_mm_kernel(%arg0: i32, %arg1: i32, %arg2: i32, %arg3: memref<1x256x256xbf16, #tpu.memory_space<vmem>>, %arg4: memref<1x256x128xbf16, #tpu.memory_space<vmem>>, %arg5: memref<1x1x128xf32, #tpu.memory_space<vmem>>, %arg6: memref<1x1x128xf32, #tpu.memory_space<vmem>>, %arg7: memref<1x256x128xf32, #tpu.memory_space<vmem>>) attributes {dimension_semantics = [#tpu.dimension_semantics<parallel>, #tpu.dimension_semantics<parallel>, #tpu.dimension_semantics<parallel>], iteration_bounds = array<i64: 1, 2, 1>, scalar_prefetch = 0 : i64, scratch_operands = 0 : i64, tpu.core_type = #tpu.core_type<tc>, window_params = [{transform_indices = @transform_0, window_bounds = array<i64: 1, 256, 256>}, {transform_indices = @transform_1, window_bounds = array<i64: 1, 256, 128>}, {transform_indices = @transform_2, window_bounds = array<i64: 1, 1, 128>}, {transform_indices = @transform_3, window_bounds = array<i64: 1, 1, 128>}, {transform_indices = @transform_4, window_bounds = array<i64: 1, 256, 128>}]} {
    %c0 = arith.constant 0 : index
    %c0_0 = arith.constant 0 : index
    %c0_1 = arith.constant 0 : index
    %0 = vector.load %arg3[%c0, %c0_0, %c0_1] : memref<1x256x256xbf16, #tpu.memory_space<vmem>>, vector<1x256x256xbf16>
    %1 = vector.shape_cast %0 : vector<1x256x256xbf16> to vector<256x256xbf16>
    %c0_2 = arith.constant 0 : index
    %c0_3 = arith.constant 0 : index
    %c0_4 = arith.constant 0 : index
    %2 = vector.load %arg4[%c0_2, %c0_3, %c0_4] : memref<1x256x128xbf16, #tpu.memory_space<vmem>>, vector<1x256x128xbf16>
    %3 = vector.shape_cast %2 : vector<1x256x128xbf16> to vector<256x128xbf16>
    %cst = arith.constant dense<0.000000e+00> : vector<256x128xf32>
    %4 = tpu.matmul %1, %3, %cst {dimension_numbers = #tpu.dot_dimension_numbers<[1], [0], [0], [1], [0, 0, 1, 1], [], []>} : vector<256x256xbf16>, vector<256x128xbf16>, vector<256x128xf32> -> vector<256x128xf32>
    %c0_5 = arith.constant 0 : index
    %c0_6 = arith.constant 0 : index
    %c0_7 = arith.constant 0 : index
    %5 = vector.load %arg5[%c0_5, %c0_6, %c0_7] : memref<1x1x128xf32, #tpu.memory_space<vmem>>, vector<1x1x128xf32>
    %6 = vector.shape_cast %5 : vector<1x1x128xf32> to vector<1x128xf32>
    %7 = vector.broadcast %6 : vector<1x128xf32> to vector<256x128xf32>
    %8 = arith.mulf %4, %7 : vector<256x128xf32>
    %c0_8 = arith.constant 0 : index
    %c0_9 = arith.constant 0 : index
    %c0_10 = arith.constant 0 : index
    %9 = vector.load %arg6[%c0_8, %c0_9, %c0_10] : memref<1x1x128xf32, #tpu.memory_space<vmem>>, vector<1x1x128xf32>
    %10 = vector.shape_cast %9 : vector<1x1x128xf32> to vector<1x128xf32>
    %11 = vector.broadcast %10 : vector<1x128xf32> to vector<256x128xf32>
    %12 = arith.addf %8, %11 : vector<256x128xf32>
    %cst_11 = arith.constant 0.000000e+00 : f32
    %13 = vector.broadcast %cst_11 : f32 to vector<256x128xf32>
    %14 = arith.maximumf %12, %13 : vector<256x128xf32>
    %c0_12 = arith.constant 0 : index
    %c0_13 = arith.constant 0 : index
    %c0_14 = arith.constant 0 : index
    %15 = vector.load %arg7[%c0_12, %c0_13, %c0_14] : memref<1x256x128xf32, #tpu.memory_space<vmem>>, vector<1x256x128xf32>
    %16 = vector.shape_cast %15 : vector<1x256x128xf32> to vector<256x128xf32>
    %17 = vector.shape_cast %14 : vector<256x128xf32> to vector<1x256x128xf32>
    tpu.vector_store %arg7[%c0_12, %c0_13, %c0_14], %17 {strides = array<i32>} : memref<1x256x128xf32, #tpu.memory_space<vmem>>, vector<1x256x128xf32>,
    return
  }
  func.func @transform_0(%arg0: i32, %arg1: i32, %arg2: i32) -> (i32, i32, i32) {
    %c0_i32 = arith.constant 0 : i32
    %c0_i32_0 = arith.constant 0 : i32
    return %arg0, %arg1, %c0_i32 : i32, i32, i32
  }
  func.func @transform_1(%arg0: i32, %arg1: i32, %arg2: i32) -> (i32, i32, i32) {
    %c0_i32 = arith.constant 0 : i32
    %c0_i32_0 = arith.constant 0 : i32
    return %arg0, %c0_i32, %arg2 : i32, i32, i32
  }
  func.func @transform_2(%arg0: i32, %arg1: i32, %arg2: i32) -> (i32, i32, i32) {
    %c0_i32 = arith.constant 0 : i32
    %c0_i32_0 = arith.constant 0 : i32
    return %arg0, %c0_i32, %arg2 : i32, i32, i32
  }
  func.func @transform_3(%arg0: i32, %arg1: i32, %arg2: i32) -> (i32, i32, i32) {
    %c0_i32 = arith.constant 0 : i32
    %c0_i32_0 = arith.constant 0 : i32
    return %arg0, %c0_i32, %arg2 : i32, i32, i32
  }
  func.func @transform_4(%arg0: i32, %arg1: i32, %arg2: i32) -> (i32, i32, i32) {
    %c0_i32 = arith.constant 0 : i32
    return %arg0, %arg1, %arg2 : i32, i32, i32
  }
}

module attributes {stable_mosaic.version = 11 : i64} {
  func.func @_fused_mm_kernel(%arg0: i32, %arg1: i32, %arg2: i32, %arg3: memref<1x256x128xbf16, #tpu.memory_space<vmem>>, %arg4: memref<1x128x128xbf16, #tpu.memory_space<vmem>>, %arg5: memref<1x1x128xf32, #tpu.memory_space<vmem>>, %arg6: memref<1x1x128xf32, #tpu.memory_space<vmem>>, %arg7: memref<1x256x128xf32, #tpu.memory_space<vmem>>, %arg8: memref<1x256x128xf32, #tpu.memory_space<vmem>>) attributes {dimension_semantics = [#tpu.dimension_semantics<parallel>, #tpu.dimension_semantics<parallel>, #tpu.dimension_semantics<parallel>], iteration_bounds = array<i64: 1, 2, 1>, scalar_prefetch = 0 : i64, scratch_operands = 0 : i64, tpu.core_type = #tpu.core_type<tc>, window_params = [{transform_indices = @transform_0, window_bounds = array<i64: 1, 256, 128>}, {transform_indices = @transform_1, window_bounds = array<i64: 1, 128, 128>}, {transform_indices = @transform_2, window_bounds = array<i64: 1, 1, 128>}, {transform_indices = @transform_3, window_bounds = array<i64: 1, 1, 128>}, {transform_indices = @transform_4, window_bounds = array<i64: 1, 256, 128>}, {transform_indices = @transform_5, window_bounds = array<i64: 1, 256, 128>}]} {
    %c0 = arith.constant 0 : index
    %c0_0 = arith.constant 0 : index
    %c0_1 = arith.constant 0 : index
    %0 = vector.load %arg3[%c0, %c0_0, %c0_1] : memref<1x256x128xbf16, #tpu.memory_space<vmem>>, vector<1x256x128xbf16>
    %1 = vector.shape_cast %0 : vector<1x256x128xbf16> to vector<256x128xbf16>
    %c0_2 = arith.constant 0 : index
    %c0_3 = arith.constant 0 : index
    %c0_4 = arith.constant 0 : index
    %2 = vector.load %arg4[%c0_2, %c0_3, %c0_4] : memref<1x128x128xbf16, #tpu.memory_space<vmem>>, vector<1x128x128xbf16>
    %3 = vector.shape_cast %2 : vector<1x128x128xbf16> to vector<128x128xbf16>
    %cst = arith.constant dense<0.000000e+00> : vector<256x128xf32>
    %4 = tpu.matmul %1, %3, %cst {dimension_numbers = #tpu.dot_dimension_numbers<[1], [0], [0], [1], [0, 0, 1, 1], [], []>} : vector<256x128xbf16>, vector<128x128xbf16>, vector<256x128xf32> -> vector<256x128xf32>
    %c0_5 = arith.constant 0 : index
    %c0_6 = arith.constant 0 : index
    %c0_7 = arith.constant 0 : index
    %5 = vector.load %arg5[%c0_5, %c0_6, %c0_7] : memref<1x1x128xf32, #tpu.memory_space<vmem>>, vector<1x1x128xf32>
    %6 = vector.shape_cast %5 : vector<1x1x128xf32> to vector<1x128xf32>
    %7 = vector.broadcast %6 : vector<1x128xf32> to vector<256x128xf32>
    %8 = arith.mulf %4, %7 : vector<256x128xf32>
    %c0_8 = arith.constant 0 : index
    %c0_9 = arith.constant 0 : index
    %c0_10 = arith.constant 0 : index
    %9 = vector.load %arg6[%c0_8, %c0_9, %c0_10] : memref<1x1x128xf32, #tpu.memory_space<vmem>>, vector<1x1x128xf32>
    %10 = vector.shape_cast %9 : vector<1x1x128xf32> to vector<1x128xf32>
    %11 = vector.broadcast %10 : vector<1x128xf32> to vector<256x128xf32>
    %12 = arith.addf %8, %11 : vector<256x128xf32>
    %c0_11 = arith.constant 0 : index
    %c0_12 = arith.constant 0 : index
    %c0_13 = arith.constant 0 : index
    %13 = vector.load %arg7[%c0_11, %c0_12, %c0_13] : memref<1x256x128xf32, #tpu.memory_space<vmem>>, vector<1x256x128xf32>
    %14 = vector.shape_cast %13 : vector<1x256x128xf32> to vector<256x128xf32>
    %15 = arith.addf %12, %14 : vector<256x128xf32>
    %cst_14 = arith.constant 0.000000e+00 : f32
    %16 = vector.broadcast %cst_14 : f32 to vector<256x128xf32>
    %17 = arith.maximumf %15, %16 : vector<256x128xf32>
    %c0_15 = arith.constant 0 : index
    %c0_16 = arith.constant 0 : index
    %c0_17 = arith.constant 0 : index
    %18 = vector.load %arg8[%c0_15, %c0_16, %c0_17] : memref<1x256x128xf32, #tpu.memory_space<vmem>>, vector<1x256x128xf32>
    %19 = vector.shape_cast %18 : vector<1x256x128xf32> to vector<256x128xf32>
    %20 = vector.shape_cast %17 : vector<256x128xf32> to vector<1x256x128xf32>
    tpu.vector_store %arg8[%c0_15, %c0_16, %c0_17], %20 {strides = array<i32>} : memref<1x256x128xf32, #tpu.memory_space<vmem>>, vector<1x256x128xf32>,
    return
  }
  func.func @transform_0(%arg0: i32, %arg1: i32, %arg2: i32) -> (i32, i32, i32) {
    %c0_i32 = arith.constant 0 : i32
    %c0_i32_0 = arith.constant 0 : i32
    return %arg0, %arg1, %c0_i32 : i32, i32, i32
  }
  func.func @transform_1(%arg0: i32, %arg1: i32, %arg2: i32) -> (i32, i32, i32) {
    %c0_i32 = arith.constant 0 : i32
    %c0_i32_0 = arith.constant 0 : i32
    return %arg0, %c0_i32, %arg2 : i32, i32, i32
  }
  func.func @transform_2(%arg0: i32, %arg1: i32, %arg2: i32) -> (i32, i32, i32) {
    %c0_i32 = arith.constant 0 : i32
    %c0_i32_0 = arith.constant 0 : i32
    return %arg0, %c0_i32, %arg2 : i32, i32, i32
  }
  func.func @transform_3(%arg0: i32, %arg1: i32, %arg2: i32) -> (i32, i32, i32) {
    %c0_i32 = arith.constant 0 : i32
    %c0_i32_0 = arith.constant 0 : i32
    return %arg0, %c0_i32, %arg2 : i32, i32, i32
  }
  func.func @transform_4(%arg0: i32, %arg1: i32, %arg2: i32) -> (i32, i32, i32) {
    %c0_i32 = arith.constant 0 : i32
    return %arg0, %arg1, %arg2 : i32, i32, i32
  }
  func.func @transform_5(%arg0: i32, %arg1: i32, %arg2: i32) -> (i32, i32, i32) {
    %c0_i32 = arith.constant 0 : i32
    return %arg0, %arg1, %arg2 : i32, i32, i32
  }
}

module attributes {stable_mosaic.version = 11 : i64} {
  func.func @_fused_mm_kernel(%arg0: i32, %arg1: i32, %arg2: i32, %arg3: memref<1x256x128xbf16, #tpu.memory_space<vmem>>, %arg4: memref<1x128x128xbf16, #tpu.memory_space<vmem>>, %arg5: memref<1x1x128xf32, #tpu.memory_space<vmem>>, %arg6: memref<1x1x128xf32, #tpu.memory_space<vmem>>, %arg7: memref<1x256x128xf32, #tpu.memory_space<vmem>>) attributes {dimension_semantics = [#tpu.dimension_semantics<parallel>, #tpu.dimension_semantics<parallel>, #tpu.dimension_semantics<parallel>], iteration_bounds = array<i64: 1, 2, 1>, scalar_prefetch = 0 : i64, scratch_operands = 0 : i64, tpu.core_type = #tpu.core_type<tc>, window_params = [{transform_indices = @transform_0, window_bounds = array<i64: 1, 256, 128>}, {transform_indices = @transform_1, window_bounds = array<i64: 1, 128, 128>}, {transform_indices = @transform_2, window_bounds = array<i64: 1, 1, 128>}, {transform_indices = @transform_3, window_bounds = array<i64: 1, 1, 128>}, {transform_indices = @transform_4, window_bounds = array<i64: 1, 256, 128>}]} {
    %c0 = arith.constant 0 : index
    %c0_0 = arith.constant 0 : index
    %c0_1 = arith.constant 0 : index
    %0 = vector.load %arg3[%c0, %c0_0, %c0_1] : memref<1x256x128xbf16, #tpu.memory_space<vmem>>, vector<1x256x128xbf16>
    %1 = vector.shape_cast %0 : vector<1x256x128xbf16> to vector<256x128xbf16>
    %c0_2 = arith.constant 0 : index
    %c0_3 = arith.constant 0 : index
    %c0_4 = arith.constant 0 : index
    %2 = vector.load %arg4[%c0_2, %c0_3, %c0_4] : memref<1x128x128xbf16, #tpu.memory_space<vmem>>, vector<1x128x128xbf16>
    %3 = vector.shape_cast %2 : vector<1x128x128xbf16> to vector<128x128xbf16>
    %cst = arith.constant dense<0.000000e+00> : vector<256x128xf32>
    %4 = tpu.matmul %1, %3, %cst {dimension_numbers = #tpu.dot_dimension_numbers<[1], [0], [0], [1], [0, 0, 1, 1], [], []>} : vector<256x128xbf16>, vector<128x128xbf16>, vector<256x128xf32> -> vector<256x128xf32>
    %c0_5 = arith.constant 0 : index
    %c0_6 = arith.constant 0 : index
    %c0_7 = arith.constant 0 : index
    %5 = vector.load %arg5[%c0_5, %c0_6, %c0_7] : memref<1x1x128xf32, #tpu.memory_space<vmem>>, vector<1x1x128xf32>
    %6 = vector.shape_cast %5 : vector<1x1x128xf32> to vector<1x128xf32>
    %7 = vector.broadcast %6 : vector<1x128xf32> to vector<256x128xf32>
    %8 = arith.mulf %4, %7 : vector<256x128xf32>
    %c0_8 = arith.constant 0 : index
    %c0_9 = arith.constant 0 : index
    %c0_10 = arith.constant 0 : index
    %9 = vector.load %arg6[%c0_8, %c0_9, %c0_10] : memref<1x1x128xf32, #tpu.memory_space<vmem>>, vector<1x1x128xf32>
    %10 = vector.shape_cast %9 : vector<1x1x128xf32> to vector<1x128xf32>
    %11 = vector.broadcast %10 : vector<1x128xf32> to vector<256x128xf32>
    %12 = arith.addf %8, %11 : vector<256x128xf32>
    %cst_11 = arith.constant 0.000000e+00 : f32
    %13 = vector.broadcast %cst_11 : f32 to vector<256x128xf32>
    %14 = arith.maximumf %12, %13 : vector<256x128xf32>
    %c0_12 = arith.constant 0 : index
    %c0_13 = arith.constant 0 : index
    %c0_14 = arith.constant 0 : index
    %15 = vector.load %arg7[%c0_12, %c0_13, %c0_14] : memref<1x256x128xf32, #tpu.memory_space<vmem>>, vector<1x256x128xf32>
    %16 = vector.shape_cast %15 : vector<1x256x128xf32> to vector<256x128xf32>
    %17 = vector.shape_cast %14 : vector<256x128xf32> to vector<1x256x128xf32>
    tpu.vector_store %arg7[%c0_12, %c0_13, %c0_14], %17 {strides = array<i32>} : memref<1x256x128xf32, #tpu.memory_space<vmem>>, vector<1x256x128xf32>,
    return
  }
  func.func @transform_0(%arg0: i32, %arg1: i32, %arg2: i32) -> (i32, i32, i32) {
    %c0_i32 = arith.constant 0 : i32
    %c0_i32_0 = arith.constant 0 : i32
    return %arg0, %arg1, %c0_i32 : i32, i32, i32
  }
  func.func @transform_1(%arg0: i32, %arg1: i32, %arg2: i32) -> (i32, i32, i32) {
    %c0_i32 = arith.constant 0 : i32
    %c0_i32_0 = arith.constant 0 : i32
    return %arg0, %c0_i32, %arg2 : i32, i32, i32
  }
  func.func @transform_2(%arg0: i32, %arg1: i32, %arg2: i32) -> (i32, i32, i32) {
    %c0_i32 = arith.constant 0 : i32
    %c0_i32_0 = arith.constant 0 : i32
    return %arg0, %c0_i32, %arg2 : i32, i32, i32
  }
  func.func @transform_3(%arg0: i32, %arg1: i32, %arg2: i32) -> (i32, i32, i32) {
    %c0_i32 = arith.constant 0 : i32
    %c0_i32_0 = arith.constant 0 : i32
    return %arg0, %c0_i32, %arg2 : i32, i32, i32
  }
  func.func @transform_4(%arg0: i32, %arg1: i32, %arg2: i32) -> (i32, i32, i32) {
    %c0_i32 = arith.constant 0 : i32
    return %arg0, %arg1, %arg2 : i32, i32, i32
  }
}

module attributes {stable_mosaic.version = 11 : i64} {
  func.func @_fused_mm_kernel(%arg0: i32, %arg1: i32, %arg2: i32, %arg3: memref<1x128x384xbf16, #tpu.memory_space<vmem>>, %arg4: memref<1x384x128xbf16, #tpu.memory_space<vmem>>, %arg5: memref<1x1x128xf32, #tpu.memory_space<vmem>>, %arg6: memref<1x1x128xf32, #tpu.memory_space<vmem>>, %arg7: memref<1x128x128xf32, #tpu.memory_space<vmem>>) attributes {dimension_semantics = [#tpu.dimension_semantics<parallel>, #tpu.dimension_semantics<parallel>, #tpu.dimension_semantics<parallel>], iteration_bounds = array<i64: 2, 1, 1>, scalar_prefetch = 0 : i64, scratch_operands = 0 : i64, tpu.core_type = #tpu.core_type<tc>, window_params = [{transform_indices = @transform_0, window_bounds = array<i64: 1, 128, 384>}, {transform_indices = @transform_1, window_bounds = array<i64: 1, 384, 128>}, {transform_indices = @transform_2, window_bounds = array<i64: 1, 1, 128>}, {transform_indices = @transform_3, window_bounds = array<i64: 1, 1, 128>}, {transform_indices = @transform_4, window_bounds = array<i64: 1, 128, 128>}]} {
    %c0 = arith.constant 0 : index
    %c0_0 = arith.constant 0 : index
    %c0_1 = arith.constant 0 : index
    %0 = vector.load %arg3[%c0, %c0_0, %c0_1] : memref<1x128x384xbf16, #tpu.memory_space<vmem>>, vector<1x128x384xbf16>
    %1 = vector.shape_cast %0 : vector<1x128x384xbf16> to vector<128x384xbf16>
    %c0_2 = arith.constant 0 : index
    %c0_3 = arith.constant 0 : index
    %c0_4 = arith.constant 0 : index
    %2 = vector.load %arg4[%c0_2, %c0_3, %c0_4] : memref<1x384x128xbf16, #tpu.memory_space<vmem>>, vector<1x384x128xbf16>
    %3 = vector.shape_cast %2 : vector<1x384x128xbf16> to vector<384x128xbf16>
    %cst = arith.constant dense<0.000000e+00> : vector<128x128xf32>
    %4 = tpu.matmul %1, %3, %cst {dimension_numbers = #tpu.dot_dimension_numbers<[1], [0], [0], [1], [0, 0, 1, 1], [], []>} : vector<128x384xbf16>, vector<384x128xbf16>, vector<128x128xf32> -> vector<128x128xf32>
    %c0_5 = arith.constant 0 : index
    %c0_6 = arith.constant 0 : index
    %c0_7 = arith.constant 0 : index
    %5 = vector.load %arg5[%c0_5, %c0_6, %c0_7] : memref<1x1x128xf32, #tpu.memory_space<vmem>>, vector<1x1x128xf32>
    %6 = vector.shape_cast %5 : vector<1x1x128xf32> to vector<1x128xf32>
    %7 = vector.broadcast %6 : vector<1x128xf32> to vector<128x128xf32>
    %8 = arith.mulf %4, %7 : vector<128x128xf32>
    %c0_8 = arith.constant 0 : index
    %c0_9 = arith.constant 0 : index
    %c0_10 = arith.constant 0 : index
    %9 = vector.load %arg6[%c0_8, %c0_9, %c0_10] : memref<1x1x128xf32, #tpu.memory_space<vmem>>, vector<1x1x128xf32>
    %10 = vector.shape_cast %9 : vector<1x1x128xf32> to vector<1x128xf32>
    %11 = vector.broadcast %10 : vector<1x128xf32> to vector<128x128xf32>
    %12 = arith.addf %8, %11 : vector<128x128xf32>
    %cst_11 = arith.constant 0.000000e+00 : f32
    %13 = vector.broadcast %cst_11 : f32 to vector<128x128xf32>
    %14 = arith.maximumf %12, %13 : vector<128x128xf32>
    %c0_12 = arith.constant 0 : index
    %c0_13 = arith.constant 0 : index
    %c0_14 = arith.constant 0 : index
    %15 = vector.load %arg7[%c0_12, %c0_13, %c0_14] : memref<1x128x128xf32, #tpu.memory_space<vmem>>, vector<1x128x128xf32>
    %16 = vector.shape_cast %15 : vector<1x128x128xf32> to vector<128x128xf32>
    %17 = vector.shape_cast %14 : vector<128x128xf32> to vector<1x128x128xf32>
    tpu.vector_store %arg7[%c0_12, %c0_13, %c0_14], %17 {strides = array<i32>} : memref<1x128x128xf32, #tpu.memory_space<vmem>>, vector<1x128x128xf32>,
    return
  }
  func.func @transform_0(%arg0: i32, %arg1: i32, %arg2: i32) -> (i32, i32, i32) {
    %c0_i32 = arith.constant 0 : i32
    %c0_i32_0 = arith.constant 0 : i32
    return %arg0, %arg1, %c0_i32 : i32, i32, i32
  }
  func.func @transform_1(%arg0: i32, %arg1: i32, %arg2: i32) -> (i32, i32, i32) {
    %c0_i32 = arith.constant 0 : i32
    %c0_i32_0 = arith.constant 0 : i32
    return %arg0, %c0_i32, %arg2 : i32, i32, i32
  }
  func.func @transform_2(%arg0: i32, %arg1: i32, %arg2: i32) -> (i32, i32, i32) {
    %c0_i32 = arith.constant 0 : i32
    %c0_i32_0 = arith.constant 0 : i32
    return %arg0, %c0_i32, %arg2 : i32, i32, i32
  }
  func.func @transform_3(%arg0: i32, %arg1: i32, %arg2: i32) -> (i32, i32, i32) {
    %c0_i32 = arith.constant 0 : i32
    %c0_i32_0 = arith.constant 0 : i32
    return %arg0, %c0_i32, %arg2 : i32, i32, i32
  }
  func.func @transform_4(%arg0: i32, %arg1: i32, %arg2: i32) -> (i32, i32, i32) {
    %c0_i32 = arith.constant 0 : i32
    return %arg0, %arg1, %arg2 : i32, i32, i32
  }
}

module attributes {stable_mosaic.version = 11 : i64} {
  func.func @_fused_mm_kernel(%arg0: i32, %arg1: i32, %arg2: i32, %arg3: memref<1x128x128xbf16, #tpu.memory_space<vmem>>, %arg4: memref<1x128x128xbf16, #tpu.memory_space<vmem>>, %arg5: memref<1x1x128xf32, #tpu.memory_space<vmem>>, %arg6: memref<1x1x128xf32, #tpu.memory_space<vmem>>, %arg7: memref<1x128x128xf32, #tpu.memory_space<vmem>>) attributes {dimension_semantics = [#tpu.dimension_semantics<parallel>, #tpu.dimension_semantics<parallel>, #tpu.dimension_semantics<parallel>], iteration_bounds = array<i64: 1, 1, 1>, scalar_prefetch = 0 : i64, scratch_operands = 0 : i64, tpu.core_type = #tpu.core_type<tc>, window_params = [{transform_indices = @transform_0, window_bounds = array<i64: 1, 128, 128>}, {transform_indices = @transform_1, window_bounds = array<i64: 1, 128, 128>}, {transform_indices = @transform_2, window_bounds = array<i64: 1, 1, 128>}, {transform_indices = @transform_3, window_bounds = array<i64: 1, 1, 128>}, {transform_indices = @transform_4, window_bounds = array<i64: 1, 128, 128>}]} {
    %c0 = arith.constant 0 : index
    %c0_0 = arith.constant 0 : index
    %c0_1 = arith.constant 0 : index
    %0 = vector.load %arg3[%c0, %c0_0, %c0_1] : memref<1x128x128xbf16, #tpu.memory_space<vmem>>, vector<1x128x128xbf16>
    %1 = vector.shape_cast %0 : vector<1x128x128xbf16> to vector<128x128xbf16>
    %c0_2 = arith.constant 0 : index
    %c0_3 = arith.constant 0 : index
    %c0_4 = arith.constant 0 : index
    %2 = vector.load %arg4[%c0_2, %c0_3, %c0_4] : memref<1x128x128xbf16, #tpu.memory_space<vmem>>, vector<1x128x128xbf16>
    %3 = vector.shape_cast %2 : vector<1x128x128xbf16> to vector<128x128xbf16>
    %cst = arith.constant dense<0.000000e+00> : vector<128x128xf32>
    %4 = tpu.matmul %1, %3, %cst {dimension_numbers = #tpu.dot_dimension_numbers<[1], [0], [0], [1], [0, 0, 1, 1], [], []>} : vector<128x128xbf16>, vector<128x128xbf16>, vector<128x128xf32> -> vector<128x128xf32>
    %c0_5 = arith.constant 0 : index
    %c0_6 = arith.constant 0 : index
    %c0_7 = arith.constant 0 : index
    %5 = vector.load %arg5[%c0_5, %c0_6, %c0_7] : memref<1x1x128xf32, #tpu.memory_space<vmem>>, vector<1x1x128xf32>
    %6 = vector.shape_cast %5 : vector<1x1x128xf32> to vector<1x128xf32>
    %7 = vector.broadcast %6 : vector<1x128xf32> to vector<128x128xf32>
    %8 = arith.mulf %4, %7 : vector<128x128xf32>
    %c0_8 = arith.constant 0 : index
    %c0_9 = arith.constant 0 : index
    %c0_10 = arith.constant 0 : index
    %9 = vector.load %arg6[%c0_8, %c0_9, %c0_10] : memref<1x1x128xf32, #tpu.memory_space<vmem>>, vector<1x1x128xf32>
    %10 = vector.shape_cast %9 : vector<1x1x128xf32> to vector<1x128xf32>
    %11 = vector.broadcast %10 : vector<1x128xf32> to vector<128x128xf32>
    %12 = arith.addf %8, %11 : vector<128x128xf32>
    %c0_11 = arith.constant 0 : index
    %c0_12 = arith.constant 0 : index
    %c0_13 = arith.constant 0 : index
    %13 = vector.load %arg7[%c0_11, %c0_12, %c0_13] : memref<1x128x128xf32, #tpu.memory_space<vmem>>, vector<1x128x128xf32>
    %14 = vector.shape_cast %13 : vector<1x128x128xf32> to vector<128x128xf32>
    %15 = vector.shape_cast %12 : vector<128x128xf32> to vector<1x128x128xf32>
    tpu.vector_store %arg7[%c0_11, %c0_12, %c0_13], %15 {strides = array<i32>} : memref<1x128x128xf32, #tpu.memory_space<vmem>>, vector<1x128x128xf32>,
    return
  }
  func.func @transform_0(%arg0: i32, %arg1: i32, %arg2: i32) -> (i32, i32, i32) {
    %c0_i32 = arith.constant 0 : i32
    %c0_i32_0 = arith.constant 0 : i32
    return %arg0, %arg1, %c0_i32 : i32, i32, i32
  }
  func.func @transform_1(%arg0: i32, %arg1: i32, %arg2: i32) -> (i32, i32, i32) {
    %c0_i32 = arith.constant 0 : i32
    %c0_i32_0 = arith.constant 0 : i32
    return %arg0, %c0_i32, %arg2 : i32, i32, i32
  }
  func.func @transform_2(%arg0: i32, %arg1: i32, %arg2: i32) -> (i32, i32, i32) {
    %c0_i32 = arith.constant 0 : i32
    %c0_i32_0 = arith.constant 0 : i32
    return %arg0, %c0_i32, %arg2 : i32, i32, i32
  }
  func.func @transform_3(%arg0: i32, %arg1: i32, %arg2: i32) -> (i32, i32, i32) {
    %c0_i32 = arith.constant 0 : i32
    %c0_i32_0 = arith.constant 0 : i32
    return %arg0, %c0_i32, %arg2 : i32, i32, i32
  }
  func.func @transform_4(%arg0: i32, %arg1: i32, %arg2: i32) -> (i32, i32, i32) {
    %c0_i32 = arith.constant 0 : i32
    return %arg0, %arg1, %arg2 : i32, i32, i32
  }
}

module attributes {stable_mosaic.version = 11 : i64} {
  func.func @_fused_mm_kernel(%arg0: i32, %arg1: i32, %arg2: i32, %arg3: memref<1x128x128xbf16, #tpu.memory_space<vmem>>, %arg4: memref<1x128x128xbf16, #tpu.memory_space<vmem>>, %arg5: memref<1x1x128xf32, #tpu.memory_space<vmem>>, %arg6: memref<1x1x128xf32, #tpu.memory_space<vmem>>, %arg7: memref<1x128x128xf32, #tpu.memory_space<vmem>>, %arg8: memref<1x128x128xf32, #tpu.memory_space<vmem>>) attributes {dimension_semantics = [#tpu.dimension_semantics<parallel>, #tpu.dimension_semantics<parallel>, #tpu.dimension_semantics<parallel>], iteration_bounds = array<i64: 1, 1, 1>, scalar_prefetch = 0 : i64, scratch_operands = 0 : i64, tpu.core_type = #tpu.core_type<tc>, window_params = [{transform_indices = @transform_0, window_bounds = array<i64: 1, 128, 128>}, {transform_indices = @transform_1, window_bounds = array<i64: 1, 128, 128>}, {transform_indices = @transform_2, window_bounds = array<i64: 1, 1, 128>}, {transform_indices = @transform_3, window_bounds = array<i64: 1, 1, 128>}, {transform_indices = @transform_4, window_bounds = array<i64: 1, 128, 128>}, {transform_indices = @transform_5, window_bounds = array<i64: 1, 128, 128>}]} {
    %c0 = arith.constant 0 : index
    %c0_0 = arith.constant 0 : index
    %c0_1 = arith.constant 0 : index
    %0 = vector.load %arg3[%c0, %c0_0, %c0_1] : memref<1x128x128xbf16, #tpu.memory_space<vmem>>, vector<1x128x128xbf16>
    %1 = vector.shape_cast %0 : vector<1x128x128xbf16> to vector<128x128xbf16>
    %c0_2 = arith.constant 0 : index
    %c0_3 = arith.constant 0 : index
    %c0_4 = arith.constant 0 : index
    %2 = vector.load %arg4[%c0_2, %c0_3, %c0_4] : memref<1x128x128xbf16, #tpu.memory_space<vmem>>, vector<1x128x128xbf16>
    %3 = vector.shape_cast %2 : vector<1x128x128xbf16> to vector<128x128xbf16>
    %cst = arith.constant dense<0.000000e+00> : vector<128x128xf32>
    %4 = tpu.matmul %1, %3, %cst {dimension_numbers = #tpu.dot_dimension_numbers<[1], [0], [0], [1], [0, 0, 1, 1], [], []>} : vector<128x128xbf16>, vector<128x128xbf16>, vector<128x128xf32> -> vector<128x128xf32>
    %c0_5 = arith.constant 0 : index
    %c0_6 = arith.constant 0 : index
    %c0_7 = arith.constant 0 : index
    %5 = vector.load %arg5[%c0_5, %c0_6, %c0_7] : memref<1x1x128xf32, #tpu.memory_space<vmem>>, vector<1x1x128xf32>
    %6 = vector.shape_cast %5 : vector<1x1x128xf32> to vector<1x128xf32>
    %7 = vector.broadcast %6 : vector<1x128xf32> to vector<128x128xf32>
    %8 = arith.mulf %4, %7 : vector<128x128xf32>
    %c0_8 = arith.constant 0 : index
    %c0_9 = arith.constant 0 : index
    %c0_10 = arith.constant 0 : index
    %9 = vector.load %arg6[%c0_8, %c0_9, %c0_10] : memref<1x1x128xf32, #tpu.memory_space<vmem>>, vector<1x1x128xf32>
    %10 = vector.shape_cast %9 : vector<1x1x128xf32> to vector<1x128xf32>
    %11 = vector.broadcast %10 : vector<1x128xf32> to vector<128x128xf32>
    %12 = arith.addf %8, %11 : vector<128x128xf32>
    %c0_11 = arith.constant 0 : index
    %c0_12 = arith.constant 0 : index
    %c0_13 = arith.constant 0 : index
    %13 = vector.load %arg7[%c0_11, %c0_12, %c0_13] : memref<1x128x128xf32, #tpu.memory_space<vmem>>, vector<1x128x128xf32>
    %14 = vector.shape_cast %13 : vector<1x128x128xf32> to vector<128x128xf32>
    %15 = arith.addf %12, %14 : vector<128x128xf32>
    %cst_14 = arith.constant 0.000000e+00 : f32
    %16 = vector.broadcast %cst_14 : f32 to vector<128x128xf32>
    %17 = arith.maximumf %15, %16 : vector<128x128xf32>
    %c0_15 = arith.constant 0 : index
    %c0_16 = arith.constant 0 : index
    %c0_17 = arith.constant 0 : index
    %18 = vector.load %arg8[%c0_15, %c0_16, %c0_17] : memref<1x128x128xf32, #tpu.memory_space<vmem>>, vector<1x128x128xf32>
    %19 = vector.shape_cast %18 : vector<1x128x128xf32> to vector<128x128xf32>
    %20 = vector.shape_cast %17 : vector<128x128xf32> to vector<1x128x128xf32>
    tpu.vector_store %arg8[%c0_15, %c0_16, %c0_17], %20 {strides = array<i32>} : memref<1x128x128xf32, #tpu.memory_space<vmem>>, vector<1x128x128xf32>,
    return
  }
  func.func @transform_0(%arg0: i32, %arg1: i32, %arg2: i32) -> (i32, i32, i32) {
    %c0_i32 = arith.constant 0 : i32
    %c0_i32_0 = arith.constant 0 : i32
    return %arg0, %arg1, %c0_i32 : i32, i32, i32
  }
  func.func @transform_1(%arg0: i32, %arg1: i32, %arg2: i32) -> (i32, i32, i32) {
    %c0_i32 = arith.constant 0 : i32
    %c0_i32_0 = arith.constant 0 : i32
    return %arg0, %c0_i32, %arg2 : i32, i32, i32
  }
  func.func @transform_2(%arg0: i32, %arg1: i32, %arg2: i32) -> (i32, i32, i32) {
    %c0_i32 = arith.constant 0 : i32
    %c0_i32_0 = arith.constant 0 : i32
    return %arg0, %c0_i32, %arg2 : i32, i32, i32
  }
  func.func @transform_3(%arg0: i32, %arg1: i32, %arg2: i32) -> (i32, i32, i32) {
    %c0_i32 = arith.constant 0 : i32
    %c0_i32_0 = arith.constant 0 : i32
    return %arg0, %c0_i32, %arg2 : i32, i32, i32
  }
  func.func @transform_4(%arg0: i32, %arg1: i32, %arg2: i32) -> (i32, i32, i32) {
    %c0_i32 = arith.constant 0 : i32
    return %arg0, %arg1, %arg2 : i32, i32, i32
  }
  func.func @transform_5(%arg0: i32, %arg1: i32, %arg2: i32) -> (i32, i32, i32) {
    %c0_i32 = arith.constant 0 : i32
    return %arg0, %arg1, %arg2 : i32, i32, i32
  }
}

</mosaic_0001>

<llo_original>
// kernel: run.7
$region0: #{run.7}
  #allocation0 [shape = 'u32[]', space=smem, size = 0x4, offset = 0x4, fixed_abs, tag = 'smem constant byte address 0x4 - core index']
  #allocation1 [shape = 'u32[72,128]{1,0:T(1,128)}', space=vmem, size = 0x9000, scoped, tag = 'internal scratch']
  %s0 = inlined_call_operand.vmem [shape: bf16[1,512,128], index: 0, kind: input, shape index: {}]
  %s1 = inlined_call_operand.hbm [shape: bf16[1,128,128], index: 1, kind: input, shape index: {}]
  %s2 = inlined_call_operand.hbm [shape: f32[1,1,128], index: 2, kind: input, shape index: {}]
  %s3 = inlined_call_operand.hbm [shape: f32[1,1,128], index: 3, kind: input, shape index: {}]
  %s4 = inlined_call_operand.vmem [shape: f32[1,512,128], index: 4, kind: output, shape index: {}]
  %s5 = sld [smem:[#allocation0]]
  $region61: #{run.7} parent=0
    _
  %s7 = ssub.s32 1, %s5
  %s8 = scalar_select 0, %s7, %s5
  $region1: #{run.7} parent=0
    #allocation2 [shape = 'u8[32768]{0}', space=vmem, size = 0x8000, scoped, tag = 'input window, operand 1, single buffered']
    #allocation3 [shape = 's32[2]{0}', space=sflag, size = 0x8, scoped, tag = 'scoped memory for run.7']
    #allocation4 [shape = 'u8[512]{0}', space=vmem, size = 0x400, scoped, tag = 'input window, operand 2, single buffered']
    #allocation5 [shape = 's32[1]{0}', space=sflag, size = 0x4, scoped, tag = 'scoped memory for run.7']
    #allocation6 [shape = 'u8[512]{0}', space=vmem, size = 0x400, scoped, tag = 'input window, operand 3, single buffered']
    %9 = vsyncpa [#allocation3], 0
    %10 = vsyncpa [#allocation5], 0
    loop: start=0, step=1, limit=4
    $region2: #{run.7} parent=1 // loop_pre_header
      _
    $region3: #{run.7} parent=1 // loop_header
      %s12 = sphi 0, %s16
      %p13 = scmp.ge.s32.totalorder %s12, 4
      %s19 = sphi 0, %s38
      %s20 = sphi 0, %s34
      %s21 = sphi 0, %s30
      %s22 = sphi 0, %s19
      %s23 = sphi 0, %s20
      %s24 = sphi 0, %s21
      %s25 = sphi 0, %s22
      %s26 = sphi 0, %s23
      %s27 = sphi 0, %s24
      %s43 = sphi 0, %s45
      %s46 = sphi 0, %s43
      %s47 = sphi 0, %s46
      %s63 = sphi 0, %s47
      %s71 = sphi 0, %s73
      %s74 = sphi 0, %s71
      %s75 = sphi 0, %s74
      %s91 = sphi 0, %s75
      %s99 = sphi 0, %s101
      %s102 = sphi 0, %s99
      %s103 = sphi 0, %s102
      %s119 = sphi 0, %s103
      %s127 = sphi 0, %s129
      %s130 = sphi 0, %s127
      %s131 = sphi 0, %s130
      %s147 = sphi 0, %s131
      %s157 = sphi 0, %s159
      %s160 = sphi 0, %s157
      %s161 = sphi 0, %s160
      %s177 = sphi 0, %s161
    $region4: #{run.7} parent=1 // loop_header_branch
      %15 = sbr.rel (%p13) target = $region8
    $region5: #{run.7} parent=1 // loop_body
      %s17 = ssub.s32 %s12, 1
      %s18 = ssub.s32 %s12, 2
      %s28 = sadd.s32 1, %s21
      %p29 = scmp.ge.s32.totalorder %s28, 1
      %s30 = scalar_select %p29, 0, %s28
      %s31 = sadd.s32 1, %s20
      %s32 = scalar_select %p29, %s31, %s20
      %p33 = scmp.ge.s32.totalorder %s32, 2
      %s34 = scalar_select %p33, 0, %s32
      %s35 = sadd.s32 1, %s19
      %s36 = scalar_select %p33, %s35, %s19
      %p37 = scmp.ge.s32.totalorder %s36, 1
      %s38 = scalar_select %p37, 0, %s36
      %s39 = ssub.s32 %s19, %s38
      %s40 = ssub.s32 %s20, %s34
      %s41 = sor.u32 %s39, %s40
      %p42 = scmp.eq.s32.totalorder %s41, 0
      %s44 = sadd.s32 %s43, 1
      %s45 = scalar_select %p42, %s43, %s44
      %p48 = pneg %p42
      %p49 = scmp.eq.s32.totalorder %s12, 1
      %p50 = por %p48, %p49
      %p51 = scmp.ne.s32.totalorder %s43, %s46
      %p52 = scmp.eq.s32.totalorder %s12, 0
      %p53 = por %p51, %p52
      %p54 = scmp.ne.s32.totalorder %s43, %s46
      %p55 = scmp.eq.s32.totalorder %s17, 1
      %p56 = por %p54, %p55
      %p57 = scmp.ne.s32.totalorder %s46, %s47
      %p58 = scmp.eq.s32.totalorder %s17, 0
      %p59 = por %p57, %p58
      %p60 = scmp.ne.s32.totalorder %s46, %s47
      %p61 = scmp.eq.s32.totalorder %s18, 1
      %p62 = por %p60, %p61
      %p64 = scmp.ne.s32.totalorder %s47, %s63
      %p65 = scmp.eq.s32.totalorder %s18, 0
      %p66 = por %p64, %p65
      %s67 = ssub.s32 %s19, %s38
      %s68 = ssub.s32 %s21, %s30
      %s69 = sor.u32 %s67, %s68
      %p70 = scmp.eq.s32.totalorder %s69, 0
      %s72 = sadd.s32 %s71, 1
      %s73 = scalar_select %p70, %s71, %s72
      %p76 = pneg %p70
      %p77 = scmp.eq.s32.totalorder %s12, 1
      %p78 = por %p76, %p77
      %p79 = scmp.ne.s32.totalorder %s71, %s74
      %p80 = scmp.eq.s32.totalorder %s12, 0
      %p81 = por %p79, %p80
      %p82 = scmp.ne.s32.totalorder %s71, %s74
      %p83 = scmp.eq.s32.totalorder %s17, 1
      %p84 = por %p82, %p83
      %p85 = scmp.ne.s32.totalorder %s74, %s75
      %p86 = scmp.eq.s32.totalorder %s17, 0
      %p87 = por %p85, %p86
      %p88 = scmp.ne.s32.totalorder %s74, %s75
      %p89 = scmp.eq.s32.totalorder %s18, 1
      %p90 = por %p88, %p89
      %p92 = scmp.ne.s32.totalorder %s75, %s91
      %p93 = scmp.eq.s32.totalorder %s18, 0
      %p94 = por %p92, %p93
      %s95 = ssub.s32 %s19, %s38
      %s96 = ssub.s32 %s21, %s30
      %s97 = sor.u32 %s95, %s96
      %p98 = scmp.eq.s32.totalorder %s97, 0
      %s100 = sadd.s32 %s99, 1
      %s101 = scalar_select %p98, %s99, %s100
      %p104 = pneg %p98
      %p105 = scmp.eq.s32.totalorder %s12, 1
      %p106 = por %p104, %p105
      %p107 = scmp.ne.s32.totalorder %s99, %s102
      %p108 = scmp.eq.s32.totalorder %s12, 0
      %p109 = por %p107, %p108
      %p110 = scmp.ne.s32.totalorder %s99, %s102
      %p111 = scmp.eq.s32.totalorder %s17, 1
      %p112 = por %p110, %p111
      %p113 = scmp.ne.s32.totalorder %s102, %s103
      %p114 = scmp.eq.s32.totalorder %s17, 0
      %p115 = por %p113, %p114
      %p116 = scmp.ne.s32.totalorder %s102, %s103
      %p117 = scmp.eq.s32.totalorder %s18, 1
      %p118 = por %p116, %p117
      %p120 = scmp.ne.s32.totalorder %s103, %s119
      %p121 = scmp.eq.s32.totalorder %s18, 0
      %p122 = por %p120, %p121
      %s123 = ssub.s32 %s19, %s38
      %s124 = ssub.s32 %s21, %s30
      %s125 = sor.u32 %s123, %s124
      %p126 = scmp.eq.s32.totalorder %s125, 0
      %s128 = sadd.s32 %s127, 1
      %s129 = scalar_select %p126, %s127, %s128
      %p132 = pneg %p126
      %p133 = scmp.eq.s32.totalorder %s12, 1
      %p134 = por %p132, %p133
      %p135 = scmp.ne.s32.totalorder %s127, %s130
      %p136 = scmp.eq.s32.totalorder %s12, 0
      %p137 = por %p135, %p136
      %p138 = scmp.ne.s32.totalorder %s127, %s130
      %p139 = scmp.eq.s32.totalorder %s17, 1
      %p140 = por %p138, %p139
      %p141 = scmp.ne.s32.totalorder %s130, %s131
      %p142 = scmp.eq.s32.totalorder %s17, 0
      %p143 = por %p141, %p142
      %p144 = scmp.ne.s32.totalorder %s130, %s131
      %p145 = scmp.eq.s32.totalorder %s18, 1
      %p146 = por %p144, %p145
      %p148 = scmp.ne.s32.totalorder %s131, %s147
      %p149 = scmp.eq.s32.totalorder %s18, 0
      %p150 = por %p148, %p149
      %s151 = ssub.s32 %s19, %s38
      %s152 = ssub.s32 %s20, %s34
      %s153 = sor.u32 %s151, %s152
      %s154 = ssub.s32 %s21, %s30
      %s155 = sor.u32 %s153, %s154
      %p156 = scmp.eq.s32.totalorder %s155, 0
      %s158 = sadd.s32 %s157, 1
      %s159 = scalar_select %p156, %s157, %s158
      %p162 = pneg %p156
      %p163 = scmp.eq.s32.totalorder %s12, 1
      %p164 = por %p162, %p163
      %p165 = scmp.ne.s32.totalorder %s157, %s160
      %p166 = scmp.eq.s32.totalorder %s12, 0
      %p167 = por %p165, %p166
      %p168 = scmp.ne.s32.totalorder %s157, %s160
      %p169 = scmp.eq.s32.totalorder %s17, 1
      %p170 = por %p168, %p169
      %p171 = scmp.ne.s32.totalorder %s160, %s161
      %p172 = scmp.eq.s32.totalorder %s17, 0
      %p173 = por %p171, %p172
      %p174 = scmp.ne.s32.totalorder %s160, %s161
      %p175 = scmp.eq.s32.totalorder %s18, 1
      %p176 = por %p174, %p175
      %p178 = scmp.ne.s32.totalorder %s161, %s177
      %p179 = scmp.eq.s32.totalorder %s18, 0
      %p180 = por %p178, %p179
      %p181 = scmp.le.s32.totalorder 1, %s12
      %p182 = scmp.lt.s32.totalorder %s12, 3
      %p183 = pnand %p181, %p182
      %p184 = pneg %p183
      // Predicated region
      $region9: #{run.7} parent=5 // pred_check
        _
      $region10: #{run.7} parent=5 // pred_check_branch
        %186 = sbr.rel (%p183) target = $region12
      $region11: #{run.7} parent=5 // pred_region
        %s187 = ssub.s32 %s12, 1
        // Predicated region
        $region13: #{run.7} parent=11 // pred_check
          %p188 = pneg %p87
        $region14: #{run.7} parent=11 // pred_check_branch
          %190 = sbr.rel (%p188) target = $region16
        $region15: #{run.7} parent=11 // pred_region
          %192 = vsyncadd [#allocation3], 0
          %s193 = smul.addr %s22, 16
          %s194 = sadd.s32 %s24, %s193
          %s195 = smul.addr %s194, 4
          %s196 = scalar_lea.hbm %s1, %s195
          %s197 = sshll.u32 %s196, 4
          %s198 = int_to_ptr.hbm [resolvable:$true] %s197
          %s199 = sshll.u32 [#allocation2], 4
          %s200 = int_to_ptr.vmem [resolvable:$true] %s199
          %205 = dma.hbm_to_vmem [thread:$0]  %s198, 1024, %s200, [#allocation3], 64, 64, 4
        $region16: #{run.7} parent=11 // pred_fallthru
          _
        // Predicated region
        $region17: #{run.7} parent=11 // pred_check
          %p206 = pneg %p115
        $region18: #{run.7} parent=11 // pred_check_branch
          %208 = sbr.rel (%p206) target = $region20
        $region19: #{run.7} parent=11 // pred_region
          %210 = vsyncadd [#allocation5], 0
          %s211 = sadd.s32 %s24, %s22
          %s212 = scalar_lea.hbm %s2, %s211
          %s214 = sshll.u32 %s212, 4
          %s215 = int_to_ptr.hbm [resolvable:$true] %s214
          %s216 = sshll.u32 [#allocation4], 4
          %s217 = int_to_ptr.vmem [resolvable:$true] %s216
          %219 = dma.hbm_to_vmem [thread:$0]  %s215, 16, %s217, [#allocation5]
        $region20: #{run.7} parent=11 // pred_fallthru
          _
        // Predicated region
        $region21: #{run.7} parent=11 // pred_check
          %p220 = pneg %p143
        $region22: #{run.7} parent=11 // pred_check_branch
          %222 = sbr.rel (%p220) target = $region24
        $region23: #{run.7} parent=11 // pred_region
          %224 = vsyncadd [#allocation5], 0
          %s225 = sadd.s32 %s24, %s22
          %s226 = scalar_lea.hbm %s3, %s225
          %s228 = sshll.u32 %s226, 4
          %s229 = int_to_ptr.hbm [resolvable:$true] %s228
          %s230 = sshll.u32 [#allocation6], 4
          %s231 = int_to_ptr.vmem [resolvable:$true] %s230
          %233 = dma.hbm_to_vmem [thread:$0]  %s229, 16, %s231, [#allocation5]
        $region24: #{run.7} parent=11 // pred_fallthru
          _
      $region12: #{run.7} parent=5 // pred_fallthru
        _
      %p234 = scmp.lt.s32.totalorder %s12, 2
      // Predicated region
      $region25: #{run.7} parent=5 // pred_check
        %p235 = pneg %p234
      $region26: #{run.7} parent=5 // pred_check_branch
        %237 = sbr.rel (%p235) target = $region28
      $region27: #{run.7} parent=5 // pred_region
        // Predicated region
        $region29: #{run.7} parent=27 // pred_check
          %p238 = pneg %p53
        $region30: #{run.7} parent=27 // pred_check_branch
          %240 = sbr.rel (%p238) target = $region32
        $region31: #{run.7} parent=27 // pred_region
          %s241 = smul.u32 32, %s20
          %p242 = scmp.lt.s32.totalorder %s19, 0
          %s243 = scalar_select %p242, %s19, 0
          %p244 = scmp.lt.s32.totalorder %s241, 63
          %s245 = scalar_select %p244, %s241, 63
          %s246 = smul.addr %s243, 64
          %s247 = sadd.s32 %s245, %s246
          %s248 = smul.addr %s247, 4
          %s249 = scalar_lea.vmem %s0, %s248
          %s250 = smul.u32 32, %s20
        $region32: #{run.7} parent=27 // pred_fallthru
          _
      $region28: #{run.7} parent=5 // pred_fallthru
        _
      %p251 = scmp.le.s32.totalorder 1, %s12
      %p252 = scmp.lt.s32.totalorder %s12, 3
      %p253 = pnand %p251, %p252
      %p254 = pneg %p253
      // Predicated region
      $region33: #{run.7} parent=5 // pred_check
        _
      $region34: #{run.7} parent=5 // pred_check_branch
        %256 = sbr.rel (%p253) target = $region36
      $region35: #{run.7} parent=5 // pred_region
        %s257 = ssub.s32 %s12, 1
        // Predicated region
        $region37: #{run.7} parent=35 // pred_check
          %p258 = pneg %p87
        $region38: #{run.7} parent=35 // pred_check_branch
          %260 = sbr.rel (%p258) target = $region40
        $region39: #{run.7} parent=35 // pred_region
          %262 = dma.done [#allocation3], 1024
        $region40: #{run.7} parent=35 // pred_fallthru
          _
        // Predicated region
        $region41: #{run.7} parent=35 // pred_check
          %p263 = pneg %p115
        $region42: #{run.7} parent=35 // pred_check_branch
          %265 = sbr.rel (%p263) target = $region44
        $region43: #{run.7} parent=35 // pred_region
          %267 = dma.done [#allocation5], 16
        $region44: #{run.7} parent=35 // pred_fallthru
          _
        // Predicated region
        $region45: #{run.7} parent=35 // pred_check
          %p268 = pneg %p143
        $region46: #{run.7} parent=35 // pred_check_branch
          %270 = sbr.rel (%p268) target = $region48
        $region47: #{run.7} parent=35 // pred_region
          %272 = dma.done [#allocation5], 16
        $region48: #{run.7} parent=35 // pred_fallthru
          _
        %s273 = smul.u32 32, %s23
        %p274 = scmp.lt.s32.totalorder %s22, 0
        %s275 = scalar_select %p274, %s22, 0
        %p276 = scmp.lt.s32.totalorder %s273, 63
        %s277 = scalar_select %p276, %s273, 63
        %s278 = smul.addr %s275, 64
        %s279 = sadd.s32 %s277, %s278
        %s280 = smul.addr %s279, 4
        %s281 = scalar_lea.vmem %s0, %s280
        %p282 = pneg %p59
        %p283 = pneg %p56
        %p284 = pneg %p87
        %p285 = pneg %p84
        %p286 = pneg %p115
        %p287 = pneg %p112
        %p288 = pneg %p143
        %p289 = pneg %p140
        %p290 = pneg %p173
        %p291 = pneg %p170
        %s292 = smul.u32 32, %s23
        %p293 = scmp.lt.s32.totalorder %s22, 0
        %s294 = scalar_select %p293, %s22, 0
        %p295 = scmp.lt.s32.totalorder %s292, 63
        %s296 = scalar_select %p295, %s292, 63
        %p297 = scmp.lt.s32.totalorder %s24, 0
        %s298 = scalar_select %p297, %s24, 0
        %s299 = sadd.s32 %s298, %s296
        %s300 = smul.addr %s294, 64
        %s301 = sadd.s32 %s299, %s300
        %s302 = smul.addr %s301, 8
        %s303 = scalar_lea.vmem %s4, %s302
        %s304 = smul.u32 32, %s23
        %p305 = scmp.lt.s32.totalorder %s22, 0
        %s306 = scalar_select %p305, %s22, 0
        %p307 = scmp.lt.s32.totalorder %s304, 63
        %s308 = scalar_select %p307, %s304, 63
        %s309 = smul.addr %s306, 64
        %s310 = sadd.s32 %s308, %s309
        %s311 = smul.addr %s310, 4
        %s312 = scalar_lea.vmem %s0, %s311
        %s313 = smul.u32 32, %s23
        %s314 = smul.u32 32, %s23
        %p315 = scmp.lt.s32.totalorder %s22, 0
        %s316 = scalar_select %p315, %s22, 0
        %p317 = scmp.lt.s32.totalorder %s314, 63
        %s318 = scalar_select %p317, %s314, 63
        %p319 = scmp.lt.s32.totalorder %s24, 0
        %s320 = scalar_select %p319, %s24, 0
        %s321 = sadd.s32 %s320, %s318
        %s322 = smul.addr %s316, 64
        %s323 = sadd.s32 %s321, %s322
        %s324 = smul.addr %s323, 8
        %s325 = scalar_lea.vmem %s4, %s324
        %s326 = smul.u32 32, %s23
        %v327 = vld [vmem:[%s312] sm:$0xf]
        %v328 = vld [vmem:[%s312 + $0x4] sm:$0xf]
        %v329 = vld [vmem:[%s312 + $0x8] sm:$0xf]
        %v330 = vld [vmem:[%s312 + $0xc] sm:$0xf]
        %v331 = vld [vmem:[%s312 + $0x10] sm:$0xf]
        %v332 = vld [vmem:[%s312 + $0x14] sm:$0xf]
        %v333 = vld [vmem:[%s312 + $0x18] sm:$0xf]
        %v334 = vld [vmem:[%s312 + $0x1c] sm:$0xf]
        %v335 = vld [vmem:[%s312 + $0x20] sm:$0xf]
        %v336 = vld [vmem:[%s312 + $0x24] sm:$0xf]
        %v337 = vld [vmem:[%s312 + $0x28] sm:$0xf]
        %v338 = vld [vmem:[%s312 + $0x2c] sm:$0xf]
        %v339 = vld [vmem:[%s312 + $0x30] sm:$0xf]
        %v340 = vld [vmem:[%s312 + $0x34] sm:$0xf]
        %v341 = vld [vmem:[%s312 + $0x38] sm:$0xf]
        %v342 = vld [vmem:[%s312 + $0x3c] sm:$0xf]
        %v343 = vld [vmem:[%s312 + $0x40] sm:$0xf]
        %v344 = vld [vmem:[%s312 + $0x44] sm:$0xf]
        %v345 = vld [vmem:[%s312 + $0x48] sm:$0xf]
        %v346 = vld [vmem:[%s312 + $0x4c] sm:$0xf]
        %v347 = vld [vmem:[%s312 + $0x50] sm:$0xf]
        %v348 = vld [vmem:[%s312 + $0x54] sm:$0xf]
        %v349 = vld [vmem:[%s312 + $0x58] sm:$0xf]
        %v350 = vld [vmem:[%s312 + $0x5c] sm:$0xf]
        %v351 = vld [vmem:[%s312 + $0x60] sm:$0xf]
        %v352 = vld [vmem:[%s312 + $0x64] sm:$0xf]
        %v353 = vld [vmem:[%s312 + $0x68] sm:$0xf]
        %v354 = vld [vmem:[%s312 + $0x6c] sm:$0xf]
        %v355 = vld [vmem:[%s312 + $0x70] sm:$0xf]
        %v356 = vld [vmem:[%s312 + $0x74] sm:$0xf]
        %v357 = vld [vmem:[%s312 + $0x78] sm:$0xf]
        %v358 = vld [vmem:[%s312 + $0x7c] sm:$0xf]
        %v359 = vld [vmem:[#allocation2] sm:$0xf]
        %v360 = vld [vmem:[#allocation2 + $0x4] sm:$0xf]
        %v361 = vld [vmem:[#allocation2 + $0x8] sm:$0xf]
        %v362 = vld [vmem:[#allocation2 + $0xc] sm:$0xf]
        %v363 = vld [vmem:[#allocation2 + $0x10] sm:$0xf]
        %v364 = vld [vmem:[#allocation2 + $0x14] sm:$0xf]
        %v365 = vld [vmem:[#allocation2 + $0x18] sm:$0xf]
        %v366 = vld [vmem:[#allocation2 + $0x1c] sm:$0xf]
        %v367 = vld [vmem:[#allocation2 + $0x20] sm:$0xf]
        %v368 = vld [vmem:[#allocation2 + $0x24] sm:$0xf]
        %v369 = vld [vmem:[#allocation2 + $0x28] sm:$0xf]
        %v370 = vld [vmem:[#allocation2 + $0x2c] sm:$0xf]
        %v371 = vld [vmem:[#allocation2 + $0x30] sm:$0xf]
        %v372 = vld [vmem:[#allocation2 + $0x34] sm:$0xf]
        %v373 = vld [vmem:[#allocation2 + $0x38] sm:$0xf]
        %v374 = vld [vmem:[#allocation2 + $0x3c] sm:$0xf]
        %v407 = vunpack.c.l.b16 %v327
        %v408 = vunpack.c.l.b16 %v328
        %v409 = vunpack.c.l.b16 %v329
        %v410 = vunpack.c.l.b16 %v330
        %v411 = vunpack.c.l.b16 %v331
        %v412 = vunpack.c.l.b16 %v332
        %v413 = vunpack.c.l.b16 %v333
        %v414 = vunpack.c.l.b16 %v334
        %v415 = vunpack.c.l.b16 %v335
        %v416 = vunpack.c.l.b16 %v336
        %v417 = vunpack.c.l.b16 %v337
        %v418 = vunpack.c.l.b16 %v338
        %v419 = vunpack.c.l.b16 %v339
        %v420 = vunpack.c.l.b16 %v340
        %v421 = vunpack.c.l.b16 %v341
        %v422 = vunpack.c.l.b16 %v342
        %v423 = vunpack.c.l.b16 %v343
        %v424 = vunpack.c.l.b16 %v344
        %v425 = vunpack.c.l.b16 %v345
        %v426 = vunpack.c.l.b16 %v346
        %v427 = vunpack.c.l.b16 %v347
        %v428 = vunpack.c.l.b16 %v348
        %v429 = vunpack.c.l.b16 %v349
        %v430 = vunpack.c.l.b16 %v350
        %v431 = vunpack.c.l.b16 %v351
        %v432 = vunpack.c.l.b16 %v352
        %v433 = vunpack.c.l.b16 %v353
        %v434 = vunpack.c.l.b16 %v354
        %v435 = vunpack.c.l.b16 %v355
        %v436 = vunpack.c.l.b16 %v356
        %v437 = vunpack.c.l.b16 %v357
        %v438 = vunpack.c.l.b16 %v358
        %v439 = vpack.c.b16 %v408, %v407
        %v440 = vpack.c.b16 %v410, %v409
        %v441 = vpack.c.b16 %v412, %v411
        %v442 = vpack.c.b16 %v414, %v413
        %v443 = vpack.c.b16 %v416, %v415
        %v444 = vpack.c.b16 %v418, %v417
        %v445 = vpack.c.b16 %v420, %v419
        %v446 = vpack.c.b16 %v422, %v421
        %v447 = vpack.c.b16 %v424, %v423
        %v448 = vpack.c.b16 %v426, %v425
        %v449 = vpack.c.b16 %v428, %v427
        %v450 = vpack.c.b16 %v430, %v429
        %v451 = vpack.c.b16 %v432, %v431
        %v452 = vpack.c.b16 %v434, %v433
        %v453 = vpack.c.b16 %v436, %v435
        %v454 = vpack.c.b16 %v438, %v437
        %v487 = vunpack.c.l.b16 %v359
        %v488 = vunpack.c.l.b16 %v360
        %v489 = vunpack.c.l.b16 %v361
        %v490 = vunpack.c.l.b16 %v362
        %v491 = vunpack.c.l.b16 %v363
        %v492 = vunpack.c.l.b16 %v364
        %v493 = vunpack.c.l.b16 %v365
        %v494 = vunpack.c.l.b16 %v366
        %v495 = vunpack.c.l.b16 %v367
        %v496 = vunpack.c.l.b16 %v368
        %v497 = vunpack.c.l.b16 %v369
        %v498 = vunpack.c.l.b16 %v370
        %v499 = vunpack.c.l.b16 %v371
        %v500 = vunpack.c.l.b16 %v372
        %v501 = vunpack.c.l.b16 %v373
        %v502 = vunpack.c.l.b16 %v374
        %v503 = vpack.c.b16 %v488, %v487
        %v504 = vpack.c.b16 %v490, %v489
        %v505 = vpack.c.b16 %v492, %v491
        %v506 = vpack.c.b16 %v494, %v493
        %v507 = vpack.c.b16 %v496, %v495
        %v508 = vpack.c.b16 %v498, %v497
        %v509 = vpack.c.b16 %v500, %v499
        %v510 = vpack.c.b16 %v502, %v501
        %519 = vmatpush.bf16.msra.mxu0 %v510
        %520 = vmatpush.bf16.msra.mxu0 %v509
        %521 = vmatpush.bf16.msra.mxu0 %v508
        %522 = vmatpush.bf16.msra.mxu0 %v507
        %523 = vmatpush.bf16.msra.mxu0 %v506
        %524 = vmatpush.bf16.msra.mxu0 %v505
        %525 = vmatpush.bf16.msra.mxu0 %v504
        %526 = vmatpush.bf16.msra.mxu0 %v503
        %527 = vmatmul.bf16.gmra.mxu0 %v439
        %v528 = vpop.f32.mrf.mxu0
        %v529 = vadd.f32 0.0, %v528
        %v530 = vpop.f32.mrf.mxu0
        %v531 = vadd.f32 0.0, %v530
        %532 = vmatmul.bf16.gmra.mxu0 %v440
        %v533 = vpop.f32.mrf.mxu0
        %v534 = vadd.f32 0.0, %v533
        %v535 = vpop.f32.mrf.mxu0
        %v536 = vadd.f32 0.0, %v535
        %537 = vmatmul.bf16.gmra.mxu0 %v441
        %v538 = vpop.f32.mrf.mxu0
        %v539 = vadd.f32 0.0, %v538
        %v540 = vpop.f32.mrf.mxu0
        %v541 = vadd.f32 0.0, %v540
        %542 = vmatmul.bf16.gmra.mxu0 %v442
        %v543 = vpop.f32.mrf.mxu0
        %v544 = vadd.f32 0.0, %v543
        %v545 = vpop.f32.mrf.mxu0
        %v546 = vadd.f32 0.0, %v545
        %547 = vmatmul.bf16.gmra.mxu0 %v443
        %v548 = vpop.f32.mrf.mxu0
        %v549 = vadd.f32 0.0, %v548
        %v550 = vpop.f32.mrf.mxu0
        %v551 = vadd.f32 0.0, %v550
        %552 = vmatmul.bf16.gmra.mxu0 %v444
        %v553 = vpop.f32.mrf.mxu0
        %v554 = vadd.f32 0.0, %v553
        %v555 = vpop.f32.mrf.mxu0
        %v556 = vadd.f32 0.0, %v555
        %557 = vmatmul.bf16.gmra.mxu0 %v445
        %v558 = vpop.f32.mrf.mxu0
        %v559 = vadd.f32 0.0, %v558
        %v560 = vpop.f32.mrf.mxu0
        %v561 = vadd.f32 0.0, %v560
        %562 = vmatmul.bf16.gmra.mxu0 %v446
        %v563 = vpop.f32.mrf.mxu0
        %v564 = vadd.f32 0.0, %v563
        %v565 = vpop.f32.mrf.mxu0
        %v566 = vadd.f32 0.0, %v565
        %567 = vmatmul.bf16.gmra.mxu0 %v447
        %v568 = vpop.f32.mrf.mxu0
        %v569 = vadd.f32 0.0, %v568
        %v570 = vpop.f32.mrf.mxu0
        %v571 = vadd.f32 0.0, %v570
        %572 = vmatmul.bf16.gmra.mxu0 %v448
        %v573 = vpop.f32.mrf.mxu0
        %v574 = vadd.f32 0.0, %v573
        %v575 = vpop.f32.mrf.mxu0
        %v576 = vadd.f32 0.0, %v575
        %577 = vmatmul.bf16.gmra.mxu0 %v449
        %v578 = vpop.f32.mrf.mxu0
        %v579 = vadd.f32 0.0, %v578
        %v580 = vpop.f32.mrf.mxu0
        %v581 = vadd.f32 0.0, %v580
        %582 = vmatmul.bf16.gmra.mxu0 %v450
        %v583 = vpop.f32.mrf.mxu0
        %v584 = vadd.f32 0.0, %v583
        %v585 = vpop.f32.mrf.mxu0
        %v586 = vadd.f32 0.0, %v585
        %587 = vmatmul.bf16.gmra.mxu0 %v451
        %v588 = vpop.f32.mrf.mxu0
        %v589 = vadd.f32 0.0, %v588
        %v590 = vpop.f32.mrf.mxu0
        %v591 = vadd.f32 0.0, %v590
        %592 = vmatmul.bf16.gmra.mxu0 %v452
        %v593 = vpop.f32.mrf.mxu0
        %v594 = vadd.f32 0.0, %v593
        %v595 = vpop.f32.mrf.mxu0
        %v596 = vadd.f32 0.0, %v595
        %597 = vmatmul.bf16.gmra.mxu0 %v453
        %v598 = vpop.f32.mrf.mxu0
        %v599 = vadd.f32 0.0, %v598
        %v600 = vpop.f32.mrf.mxu0
        %v601 = vadd.f32 0.0, %v600
        %602 = vmatmul.bf16.gmra.mxu0 %v454
        %v603 = vpop.f32.mrf.mxu0
        %v604 = vadd.f32 0.0, %v603
        %v605 = vpop.f32.mrf.mxu0
        %v606 = vadd.f32 0.0, %v605
        %607 = vdwg.mxu0
        %v608 = vld [vmem:[#allocation4] sm:$0x1]
        %v610 = vperm.slane %v608, 0
        %v612 = vmul.f32 %v529, %v610
        %v613 = vmul.f32 %v531, %v610
        %v614 = vmul.f32 %v534, %v610
        %v615 = vmul.f32 %v536, %v610
        %v616 = vmul.f32 %v539, %v610
        %v617 = vmul.f32 %v541, %v610
        %v618 = vmul.f32 %v544, %v610
        %v619 = vmul.f32 %v546, %v610
        %v620 = vmul.f32 %v549, %v610
        %v621 = vmul.f32 %v551, %v610
        %v622 = vmul.f32 %v554, %v610
        %v623 = vmul.f32 %v556, %v610
        %v624 = vmul.f32 %v559, %v610
        %v625 = vmul.f32 %v561, %v610
        %v626 = vmul.f32 %v564, %v610
        %v627 = vmul.f32 %v566, %v610
        %v628 = vmul.f32 %v569, %v610
        %v629 = vmul.f32 %v571, %v610
        %v630 = vmul.f32 %v574, %v610
        %v631 = vmul.f32 %v576, %v610
        %v632 = vmul.f32 %v579, %v610
        %v633 = vmul.f32 %v581, %v610
        %v634 = vmul.f32 %v584, %v610
        %v635 = vmul.f32 %v586, %v610
        %v636 = vmul.f32 %v589, %v610
        %v637 = vmul.f32 %v591, %v610
        %v638 = vmul.f32 %v594, %v610
        %v639 = vmul.f32 %v596, %v610
        %v640 = vmul.f32 %v599, %v610
        %v641 = vmul.f32 %v601, %v610
        %v642 = vmul.f32 %v604, %v610
        %v643 = vmul.f32 %v606, %v610
        %v644 = vld [vmem:[#allocation6] sm:$0x1]
        %v646 = vperm.slane %v644, 0
        %v648 = vadd.f32 %v612, %v646
        %v649 = vadd.f32 %v613, %v646
        %v650 = vadd.f32 %v614, %v646
        %v651 = vadd.f32 %v615, %v646
        %v652 = vadd.f32 %v616, %v646
        %v653 = vadd.f32 %v617, %v646
        %v654 = vadd.f32 %v618, %v646
        %v655 = vadd.f32 %v619, %v646
        %v656 = vadd.f32 %v620, %v646
        %v657 = vadd.f32 %v621, %v646
        %v658 = vadd.f32 %v622, %v646
        %v659 = vadd.f32 %v623, %v646
        %v660 = vadd.f32 %v624, %v646
        %v661 = vadd.f32 %v625, %v646
        %v662 = vadd.f32 %v626, %v646
        %v663 = vadd.f32 %v627, %v646
        %v664 = vadd.f32 %v628, %v646
        %v665 = vadd.f32 %v629, %v646
        %v666 = vadd.f32 %v630, %v646
        %v667 = vadd.f32 %v631, %v646
        %v668 = vadd.f32 %v632, %v646
        %v669 = vadd.f32 %v633, %v646
        %v670 = vadd.f32 %v634, %v646
        %v671 = vadd.f32 %v635, %v646
        %v672 = vadd.f32 %v636, %v646
        %v673 = vadd.f32 %v637, %v646
        %v674 = vadd.f32 %v638, %v646
        %v675 = vadd.f32 %v639, %v646
        %v676 = vadd.f32 %v640, %v646
        %v677 = vadd.f32 %v641, %v646
        %v678 = vadd.f32 %v642, %v646
        %v679 = vadd.f32 %v643, %v646
        %v680 = vmax.f32 %v648, 0.0
        %v681 = vmax.f32 %v649, 0.0
        %v682 = vmax.f32 %v650, 0.0
        %v683 = vmax.f32 %v651, 0.0
        %v684 = vmax.f32 %v652, 0.0
        %v685 = vmax.f32 %v653, 0.0
        %v686 = vmax.f32 %v654, 0.0
        %v687 = vmax.f32 %v655, 0.0
        %v688 = vmax.f32 %v656, 0.0
        %v689 = vmax.f32 %v657, 0.0
        %v690 = vmax.f32 %v658, 0.0
        %v691 = vmax.f32 %v659, 0.0
        %v692 = vmax.f32 %v660, 0.0
        %v693 = vmax.f32 %v661, 0.0
        %v694 = vmax.f32 %v662, 0.0
        %v695 = vmax.f32 %v663, 0.0
        %v696 = vmax.f32 %v664, 0.0
        %v697 = vmax.f32 %v665, 0.0
        %v698 = vmax.f32 %v666, 0.0
        %v699 = vmax.f32 %v667, 0.0
        %v700 = vmax.f32 %v668, 0.0
        %v701 = vmax.f32 %v669, 0.0
        %v702 = vmax.f32 %v670, 0.0
        %v703 = vmax.f32 %v671, 0.0
        %v704 = vmax.f32 %v672, 0.0
        %v705 = vmax.f32 %v673, 0.0
        %v706 = vmax.f32 %v674, 0.0
        %v707 = vmax.f32 %v675, 0.0
        %v708 = vmax.f32 %v676, 0.0
        %v709 = vmax.f32 %v677, 0.0
        %v710 = vmax.f32 %v678, 0.0
        %v711 = vmax.f32 %v679, 0.0
        %712 = vst [vmem:[%s325] sm:$0xff] %v680
        %713 = vst [vmem:[%s325 + $0x8] sm:$0xff] %v681
        %714 = vst [vmem:[%s325 + $0x10] sm:$0xff] %v682
        %715 = vst [vmem:[%s325 + $0x18] sm:$0xff] %v683
        %716 = vst [vmem:[%s325 + $0x20] sm:$0xff] %v684
        %717 = vst [vmem:[%s325 + $0x28] sm:$0xff] %v685
        %718 = vst [vmem:[%s325 + $0x30] sm:$0xff] %v686
        %719 = vst [vmem:[%s325 + $0x38] sm:$0xff] %v687
        %720 = vst [vmem:[%s325 + $0x40] sm:$0xff] %v688
        %721 = vst [vmem:[%s325 + $0x48] sm:$0xff] %v689
        %722 = vst [vmem:[%s325 + $0x50] sm:$0xff] %v690
        %723 = vst [vmem:[%s325 + $0x58] sm:$0xff] %v691
        %724 = vst [vmem:[%s325 + $0x60] sm:$0xff] %v692
        %725 = vst [vmem:[%s325 + $0x68] sm:$0xff] %v693
        %726 = vst [vmem:[%s325 + $0x70] sm:$0xff] %v694
        %727 = vst [vmem:[%s325 + $0x78] sm:$0xff] %v695
        %728 = vst [vmem:[%s325 + $0x80] sm:$0xff] %v696
        %729 = vst [vmem:[%s325 + $0x88] sm:$0xff] %v697
        %730 = vst [vmem:[%s325 + $0x90] sm:$0xff] %v698
        %731 = vst [vmem:[%s325 + $0x98] sm:$0xff] %v699
        %732 = vst [vmem:[%s325 + $0xa0] sm:$0xff] %v700
        %733 = vst [vmem:[%s325 + $0xa8] sm:$0xff] %v701
        %734 = vst [vmem:[%s325 + $0xb0] sm:$0xff] %v702
        %735 = vst [vmem:[%s325 + $0xb8] sm:$0xff] %v703
        %736 = vst [vmem:[%s325 + $0xc0] sm:$0xff] %v704
        %737 = vst [vmem:[%s325 + $0xc8] sm:$0xff] %v705
        %738 = vst [vmem:[%s325 + $0xd0] sm:$0xff] %v706
        %739 = vst [vmem:[%s325 + $0xd8] sm:$0xff] %v707
        %740 = vst [vmem:[%s325 + $0xe0] sm:$0xff] %v708
        %741 = vst [vmem:[%s325 + $0xe8] sm:$0xff] %v709
        %742 = vst [vmem:[%s325 + $0xf0] sm:$0xff] %v710
        %743 = vst [vmem:[%s325 + $0xf8] sm:$0xff] %v711
        %s744 = smul.u32 32, %s23
        %p745 = scmp.lt.s32.totalorder %s22, 0
        %s746 = scalar_select %p745, %s22, 0
        %p747 = scmp.lt.s32.totalorder %s744, 63
        %s748 = scalar_select %p747, %s744, 63
        %p749 = scmp.lt.s32.totalorder %s24, 0
        %s750 = scalar_select %p749, %s24, 0
        %s751 = sadd.s32 %s750, %s748
        %s752 = smul.addr %s746, 64
        %s753 = sadd.s32 %s751, %s752
        %s754 = smul.addr %s753, 8
        %s755 = scalar_lea.vmem %s4, %s754
        // Predicated region
        $region49: #{run.7} parent=35 // pred_check
          %p756 = pneg %p170
        $region50: #{run.7} parent=35 // pred_check_branch
          %758 = sbr.rel (%p756) target = $region52
        $region51: #{run.7} parent=35 // pred_region
          %s759 = smul.u32 32, %s23
        $region52: #{run.7} parent=35 // pred_fallthru
          _
      $region36: #{run.7} parent=5 // pred_fallthru
        _
      %p760 = scmp.le.s32.totalorder 2, %s12
      // Predicated region
      $region53: #{run.7} parent=5 // pred_check
        %p761 = pneg %p760
      $region54: #{run.7} parent=5 // pred_check_branch
        %763 = sbr.rel (%p761) target = $region56
      $region55: #{run.7} parent=5 // pred_region
        %s764 = ssub.s32 %s12, 2
        // Predicated region
        $region57: #{run.7} parent=55 // pred_check
          %p765 = pneg %p176
        $region58: #{run.7} parent=55 // pred_check_branch
          %767 = sbr.rel (%p765) target = $region60
        $region59: #{run.7} parent=55 // pred_region
          %s768 = smul.u32 32, %s26
          %p769 = scmp.lt.s32.totalorder %s25, 0
          %s770 = scalar_select %p769, %s25, 0
          %p771 = scmp.lt.s32.totalorder %s768, 63
          %s772 = scalar_select %p771, %s768, 63
          %p773 = scmp.lt.s32.totalorder %s27, 0
          %s774 = scalar_select %p773, %s27, 0
          %s775 = sadd.s32 %s774, %s772
          %s776 = smul.addr %s770, 64
          %s777 = sadd.s32 %s775, %s776
          %s778 = smul.addr %s777, 8
          %s779 = scalar_lea.vmem %s4, %s778
        $region60: #{run.7} parent=55 // pred_fallthru
          _
      $region56: #{run.7} parent=5 // pred_fallthru
        _
    $region6: #{run.7} parent=1 // loop_footer
      %s16 = sadd.s32 1, %s12
    $region7: #{run.7} parent=1 // loop_footer_branch
      %11 = sbr.rel target = $region3
    $region8: #{run.7} parent=1 // loop_exit
      _
    %780 = vsyncpa [#allocation3], 1
    %s781 = scalar_lea.sflag [#allocation3], 1
    %782 = vsyncpa %s781, 1
    %783 = vsyncpa [#allocation5], 1

// kernel: run.8
$region0: #{run.8}
  #allocation0 [shape = 'u32[]', space=smem, size = 0x4, offset = 0x4, fixed_abs, tag = 'smem constant byte address 0x4 - core index']
  #allocation1 [shape = 'u32[72,128]{1,0:T(1,128)}', space=vmem, size = 0x9000, scoped, tag = 'internal scratch']
  %s0 = inlined_call_operand.vmem [shape: bf16[1,512,256], index: 0, kind: input, shape index: {}]
  %s1 = inlined_call_operand.vmem [shape: bf16[1,256,128], index: 1, kind: input, shape index: {}]
  %s2 = inlined_call_operand.vmem [shape: f32[1,1,128], index: 2, kind: input, shape index: {}]
  %s3 = inlined_call_operand.vmem [shape: f32[1,1,128], index: 3, kind: input, shape index: {}]
  %s4 = inlined_call_operand.vmem [shape: f32[1,512,128], index: 4, kind: output, shape index: {}]
  %s5 = sld [smem:[#allocation0]]
  $region49: #{run.8} parent=0
    _
  %s7 = ssub.s32 1, %s5
  %s8 = scalar_select 0, %s7, %s5
  loop: start=0, step=1, limit=4
  $region2: #{run.8} parent=0 // loop_pre_header
    _
  $region3: #{run.8} parent=0 // loop_header
    %s10 = sphi 0, %s14
    %p11 = scmp.ge.s32.totalorder %s10, 4
    %s17 = sphi 0, %s36
    %s18 = sphi 0, %s32
    %s19 = sphi 0, %s28
    %s20 = sphi 0, %s17
    %s21 = sphi 0, %s18
    %s22 = sphi 0, %s19
    %s23 = sphi 0, %s20
    %s24 = sphi 0, %s21
    %s25 = sphi 0, %s22
    %s41 = sphi 0, %s43
    %s44 = sphi 0, %s41
    %s45 = sphi 0, %s44
    %s61 = sphi 0, %s45
    %s69 = sphi 0, %s71
    %s72 = sphi 0, %s69
    %s73 = sphi 0, %s72
    %s89 = sphi 0, %s73
    %s97 = sphi 0, %s99
    %s100 = sphi 0, %s97
    %s101 = sphi 0, %s100
    %s117 = sphi 0, %s101
    %s125 = sphi 0, %s127
    %s128 = sphi 0, %s125
    %s129 = sphi 0, %s128
    %s145 = sphi 0, %s129
    %s155 = sphi 0, %s157
    %s158 = sphi 0, %s155
    %s159 = sphi 0, %s158
    %s175 = sphi 0, %s159
  $region4: #{run.8} parent=0 // loop_header_branch
    %13 = sbr.rel (%p11) target = $region8
  $region5: #{run.8} parent=0 // loop_body
    %s15 = ssub.s32 %s10, 1
    %s16 = ssub.s32 %s10, 2
    %s26 = sadd.s32 1, %s19
    %p27 = scmp.ge.s32.totalorder %s26, 1
    %s28 = scalar_select %p27, 0, %s26
    %s29 = sadd.s32 1, %s18
    %s30 = scalar_select %p27, %s29, %s18
    %p31 = scmp.ge.s32.totalorder %s30, 2
    %s32 = scalar_select %p31, 0, %s30
    %s33 = sadd.s32 1, %s17
    %s34 = scalar_select %p31, %s33, %s17
    %p35 = scmp.ge.s32.totalorder %s34, 1
    %s36 = scalar_select %p35, 0, %s34
    %s37 = ssub.s32 %s17, %s36
    %s38 = ssub.s32 %s18, %s32
    %s39 = sor.u32 %s37, %s38
    %p40 = scmp.eq.s32.totalorder %s39, 0
    %s42 = sadd.s32 %s41, 1
    %s43 = scalar_select %p40, %s41, %s42
    %p46 = pneg %p40
    %p47 = scmp.eq.s32.totalorder %s10, 1
    %p48 = por %p46, %p47
    %p49 = scmp.ne.s32.totalorder %s41, %s44
    %p50 = scmp.eq.s32.totalorder %s10, 0
    %p51 = por %p49, %p50
    %p52 = scmp.ne.s32.totalorder %s41, %s44
    %p53 = scmp.eq.s32.totalorder %s15, 1
    %p54 = por %p52, %p53
    %p55 = scmp.ne.s32.totalorder %s44, %s45
    %p56 = scmp.eq.s32.totalorder %s15, 0
    %p57 = por %p55, %p56
    %p58 = scmp.ne.s32.totalorder %s44, %s45
    %p59 = scmp.eq.s32.totalorder %s16, 1
    %p60 = por %p58, %p59
    %p62 = scmp.ne.s32.totalorder %s45, %s61
    %p63 = scmp.eq.s32.totalorder %s16, 0
    %p64 = por %p62, %p63
    %s65 = ssub.s32 %s17, %s36
    %s66 = ssub.s32 %s19, %s28
    %s67 = sor.u32 %s65, %s66
    %p68 = scmp.eq.s32.totalorder %s67, 0
    %s70 = sadd.s32 %s69, 1
    %s71 = scalar_select %p68, %s69, %s70
    %p74 = pneg %p68
    %p75 = scmp.eq.s32.totalorder %s10, 1
    %p76 = por %p74, %p75
    %p77 = scmp.ne.s32.totalorder %s69, %s72
    %p78 = scmp.eq.s32.totalorder %s10, 0
    %p79 = por %p77, %p78
    %p80 = scmp.ne.s32.totalorder %s69, %s72
    %p81 = scmp.eq.s32.totalorder %s15, 1
    %p82 = por %p80, %p81
    %p83 = scmp.ne.s32.totalorder %s72, %s73
    %p84 = scmp.eq.s32.totalorder %s15, 0
    %p85 = por %p83, %p84
    %p86 = scmp.ne.s32.totalorder %s72, %s73
    %p87 = scmp.eq.s32.totalorder %s16, 1
    %p88 = por %p86, %p87
    %p90 = scmp.ne.s32.totalorder %s73, %s89
    %p91 = scmp.eq.s32.totalorder %s16, 0
    %p92 = por %p90, %p91
    %s93 = ssub.s32 %s17, %s36
    %s94 = ssub.s32 %s19, %s28
    %s95 = sor.u32 %s93, %s94
    %p96 = scmp.eq.s32.totalorder %s95, 0
    %s98 = sadd.s32 %s97, 1
    %s99 = scalar_select %p96, %s97, %s98
    %p102 = pneg %p96
    %p103 = scmp.eq.s32.totalorder %s10, 1
    %p104 = por %p102, %p103
    %p105 = scmp.ne.s32.totalorder %s97, %s100
    %p106 = scmp.eq.s32.totalorder %s10, 0
    %p107 = por %p105, %p106
    %p108 = scmp.ne.s32.totalorder %s97, %s100
    %p109 = scmp.eq.s32.totalorder %s15, 1
    %p110 = por %p108, %p109
    %p111 = scmp.ne.s32.totalorder %s100, %s101
    %p112 = scmp.eq.s32.totalorder %s15, 0
    %p113 = por %p111, %p112
    %p114 = scmp.ne.s32.totalorder %s100, %s101
    %p115 = scmp.eq.s32.totalorder %s16, 1
    %p116 = por %p114, %p115
    %p118 = scmp.ne.s32.totalorder %s101, %s117
    %p119 = scmp.eq.s32.totalorder %s16, 0
    %p120 = por %p118, %p119
    %s121 = ssub.s32 %s17, %s36
    %s122 = ssub.s32 %s19, %s28
    %s123 = sor.u32 %s121, %s122
    %p124 = scmp.eq.s32.totalorder %s123, 0
    %s126 = sadd.s32 %s125, 1
    %s127 = scalar_select %p124, %s125, %s126
    %p130 = pneg %p124
    %p131 = scmp.eq.s32.totalorder %s10, 1
    %p132 = por %p130, %p131
    %p133 = scmp.ne.s32.totalorder %s125, %s128
    %p134 = scmp.eq.s32.totalorder %s10, 0
    %p135 = por %p133, %p134
    %p136 = scmp.ne.s32.totalorder %s125, %s128
    %p137 = scmp.eq.s32.totalorder %s15, 1
    %p138 = por %p136, %p137
    %p139 = scmp.ne.s32.totalorder %s128, %s129
    %p140 = scmp.eq.s32.totalorder %s15, 0
    %p141 = por %p139, %p140
    %p142 = scmp.ne.s32.totalorder %s128, %s129
    %p143 = scmp.eq.s32.totalorder %s16, 1
    %p144 = por %p142, %p143
    %p146 = scmp.ne.s32.totalorder %s129, %s145
    %p147 = scmp.eq.s32.totalorder %s16, 0
    %p148 = por %p146, %p147
    %s149 = ssub.s32 %s17, %s36
    %s150 = ssub.s32 %s18, %s32
    %s151 = sor.u32 %s149, %s150
    %s152 = ssub.s32 %s19, %s28
    %s153 = sor.u32 %s151, %s152
    %p154 = scmp.eq.s32.totalorder %s153, 0
    %s156 = sadd.s32 %s155, 1
    %s157 = scalar_select %p154, %s155, %s156
    %p160 = pneg %p154
    %p161 = scmp.eq.s32.totalorder %s10, 1
    %p162 = por %p160, %p161
    %p163 = scmp.ne.s32.totalorder %s155, %s158
    %p164 = scmp.eq.s32.totalorder %s10, 0
    %p165 = por %p163, %p164
    %p166 = scmp.ne.s32.totalorder %s155, %s158
    %p167 = scmp.eq.s32.totalorder %s15, 1
    %p168 = por %p166, %p167
    %p169 = scmp.ne.s32.totalorder %s158, %s159
    %p170 = scmp.eq.s32.totalorder %s15, 0
    %p171 = por %p169, %p170
    %p172 = scmp.ne.s32.totalorder %s158, %s159
    %p173 = scmp.eq.s32.totalorder %s16, 1
    %p174 = por %p172, %p173
    %p176 = scmp.ne.s32.totalorder %s159, %s175
    %p177 = scmp.eq.s32.totalorder %s16, 0
    %p178 = por %p176, %p177
    %p179 = scmp.le.s32.totalorder 1, %s10
    %p180 = scmp.lt.s32.totalorder %s10, 3
    %p181 = pnand %p179, %p180
    %p182 = pneg %p181
    // Predicated region
    $region9: #{run.8} parent=5 // pred_check
      _
    $region10: #{run.8} parent=5 // pred_check_branch
      %184 = sbr.rel (%p181) target = $region12
    $region11: #{run.8} parent=5 // pred_region
      %s185 = ssub.s32 %s10, 1
      // Predicated region
      $region13: #{run.8} parent=11 // pred_check
        %p186 = pneg %p85
      $region14: #{run.8} parent=11 // pred_check_branch
        %188 = sbr.rel (%p186) target = $region16
      $region15: #{run.8} parent=11 // pred_region
        %p189 = scmp.lt.s32.totalorder %s20, 0
        %s190 = scalar_select %p189, %s20, 0
        %p191 = scmp.lt.s32.totalorder %s22, 0
        %s192 = scalar_select %p191, %s22, 0
        %s193 = smul.addr %s190, 32
        %s194 = sadd.s32 %s192, %s193
        %s195 = smul.addr %s194, 4
        %s196 = scalar_lea.vmem %s1, %s195
      $region16: #{run.8} parent=11 // pred_fallthru
        _
      // Predicated region
      $region17: #{run.8} parent=11 // pred_check
        %p197 = pneg %p113
      $region18: #{run.8} parent=11 // pred_check_branch
        %199 = sbr.rel (%p197) target = $region20
      $region19: #{run.8} parent=11 // pred_region
        %p200 = scmp.lt.s32.totalorder %s20, 0
        %s201 = scalar_select %p200, %s20, 0
        %p202 = scmp.lt.s32.totalorder %s22, 0
        %s203 = scalar_select %p202, %s22, 0
        %s204 = sadd.s32 %s203, %s201
        %s205 = scalar_lea.vmem %s2, %s204
      $region20: #{run.8} parent=11 // pred_fallthru
        _
      // Predicated region
      $region21: #{run.8} parent=11 // pred_check
        %p206 = pneg %p141
      $region22: #{run.8} parent=11 // pred_check_branch
        %208 = sbr.rel (%p206) target = $region24
      $region23: #{run.8} parent=11 // pred_region
        %p209 = scmp.lt.s32.totalorder %s20, 0
        %s210 = scalar_select %p209, %s20, 0
        %p211 = scmp.lt.s32.totalorder %s22, 0
        %s212 = scalar_select %p211, %s22, 0
        %s213 = sadd.s32 %s212, %s210
        %s214 = scalar_lea.vmem %s3, %s213
      $region24: #{run.8} parent=11 // pred_fallthru
        _
    $region12: #{run.8} parent=5 // pred_fallthru
      _
    %p215 = scmp.lt.s32.totalorder %s10, 2
    // Predicated region
    $region25: #{run.8} parent=5 // pred_check
      %p216 = pneg %p215
    $region26: #{run.8} parent=5 // pred_check_branch
      %218 = sbr.rel (%p216) target = $region28
    $region27: #{run.8} parent=5 // pred_region
      // Predicated region
      $region29: #{run.8} parent=27 // pred_check
        %p219 = pneg %p51
      $region30: #{run.8} parent=27 // pred_check_branch
        %221 = sbr.rel (%p219) target = $region32
      $region31: #{run.8} parent=27 // pred_region
        %s222 = smul.u32 32, %s18
        %p223 = scmp.lt.s32.totalorder %s17, 0
        %s224 = scalar_select %p223, %s17, 0
        %p225 = scmp.lt.s32.totalorder %s222, 63
        %s226 = scalar_select %p225, %s222, 63
        %s227 = smul.addr %s226, 2
        %s228 = smul.addr %s224, 128
        %s229 = sadd.s32 %s227, %s228
        %s230 = smul.addr %s229, 4
        %s231 = scalar_lea.vmem %s0, %s230
        %s232 = smul.u32 32, %s18
      $region32: #{run.8} parent=27 // pred_fallthru
        _
    $region28: #{run.8} parent=5 // pred_fallthru
      _
    %p233 = scmp.le.s32.totalorder 1, %s10
    %p234 = scmp.lt.s32.totalorder %s10, 3
    %p235 = pnand %p233, %p234
    %p236 = pneg %p235
    // Predicated region
    $region33: #{run.8} parent=5 // pred_check
      _
    $region34: #{run.8} parent=5 // pred_check_branch
      %238 = sbr.rel (%p235) target = $region36
    $region35: #{run.8} parent=5 // pred_region
      %s239 = ssub.s32 %s10, 1
      %s240 = smul.u32 32, %s21
      %p241 = scmp.lt.s32.totalorder %s20, 0
      %s242 = scalar_select %p241, %s20, 0
      %p243 = scmp.lt.s32.totalorder %s240, 63
      %s244 = scalar_select %p243, %s240, 63
      %s245 = smul.addr %s244, 2
      %s246 = smul.addr %s242, 128
      %s247 = sadd.s32 %s245, %s246
      %s248 = smul.addr %s247, 4
      %s249 = scalar_lea.vmem %s0, %s248
      %p250 = pneg %p57
      %p251 = pneg %p54
      %p252 = scmp.lt.s32.totalorder %s20, 0
      %s253 = scalar_select %p252, %s20, 0
      %p254 = scmp.lt.s32.totalorder %s22, 0
      %s255 = scalar_select %p254, %s22, 0
      %s256 = smul.addr %s253, 32
      %s257 = sadd.s32 %s255, %s256
      %s258 = smul.addr %s257, 4
      %s259 = scalar_lea.vmem %s1, %s258
      %p260 = pneg %p85
      %p261 = pneg %p82
      %p262 = scmp.lt.s32.totalorder %s20, 0
      %s263 = scalar_select %p262, %s20, 0
      %p264 = scmp.lt.s32.totalorder %s22, 0
      %s265 = scalar_select %p264, %s22, 0
      %s266 = sadd.s32 %s265, %s263
      %s267 = scalar_lea.vmem %s2, %s266
      %p268 = pneg %p113
      %p269 = pneg %p110
      %p270 = scmp.lt.s32.totalorder %s20, 0
      %s271 = scalar_select %p270, %s20, 0
      %p272 = scmp.lt.s32.totalorder %s22, 0
      %s273 = scalar_select %p272, %s22, 0
      %s274 = sadd.s32 %s273, %s271
      %s275 = scalar_lea.vmem %s3, %s274
      %p276 = pneg %p141
      %p277 = pneg %p138
      %p278 = pneg %p171
      %p279 = pneg %p168
      %s280 = smul.u32 32, %s21
      %p281 = scmp.lt.s32.totalorder %s20, 0
      %s282 = scalar_select %p281, %s20, 0
      %p283 = scmp.lt.s32.totalorder %s280, 63
      %s284 = scalar_select %p283, %s280, 63
      %p285 = scmp.lt.s32.totalorder %s22, 0
      %s286 = scalar_select %p285, %s22, 0
      %s287 = sadd.s32 %s286, %s284
      %s288 = smul.addr %s282, 64
      %s289 = sadd.s32 %s287, %s288
      %s290 = smul.addr %s289, 8
      %s291 = scalar_lea.vmem %s4, %s290
      %s292 = smul.u32 32, %s21
      %p293 = scmp.lt.s32.totalorder %s20, 0
      %s294 = scalar_select %p293, %s20, 0
      %p295 = scmp.lt.s32.totalorder %s292, 63
      %s296 = scalar_select %p295, %s292, 63
      %s297 = smul.addr %s296, 2
      %s298 = smul.addr %s294, 128
      %s299 = sadd.s32 %s297, %s298
      %s300 = smul.addr %s299, 4
      %s301 = scalar_lea.vmem %s0, %s300
      %s302 = smul.u32 32, %s21
      %p303 = scmp.lt.s32.totalorder %s20, 0
      %s304 = scalar_select %p303, %s20, 0
      %p305 = scmp.lt.s32.totalorder %s22, 0
      %s306 = scalar_select %p305, %s22, 0
      %s307 = smul.addr %s304, 32
      %s308 = sadd.s32 %s306, %s307
      %s309 = smul.addr %s308, 4
      %s310 = scalar_lea.vmem %s1, %s309
      %p311 = scmp.lt.s32.totalorder %s20, 0
      %s312 = scalar_select %p311, %s20, 0
      %p313 = scmp.lt.s32.totalorder %s22, 0
      %s314 = scalar_select %p313, %s22, 0
      %s315 = sadd.s32 %s314, %s312
      %s316 = scalar_lea.vmem %s2, %s315
      %p317 = scmp.lt.s32.totalorder %s20, 0
      %s318 = scalar_select %p317, %s20, 0
      %p319 = scmp.lt.s32.totalorder %s22, 0
      %s320 = scalar_select %p319, %s22, 0
      %s321 = sadd.s32 %s320, %s318
      %s322 = scalar_lea.vmem %s3, %s321
      %s323 = smul.u32 32, %s21
      %p324 = scmp.lt.s32.totalorder %s20, 0
      %s325 = scalar_select %p324, %s20, 0
      %p326 = scmp.lt.s32.totalorder %s323, 63
      %s327 = scalar_select %p326, %s323, 63
      %p328 = scmp.lt.s32.totalorder %s22, 0
      %s329 = scalar_select %p328, %s22, 0
      %s330 = sadd.s32 %s329, %s327
      %s331 = smul.addr %s325, 64
      %s332 = sadd.s32 %s330, %s331
      %s333 = smul.addr %s332, 8
      %s334 = scalar_lea.vmem %s4, %s333
      %s335 = smul.u32 32, %s21
      %v336 = vld [vmem:[%s301] sm:$0xff]
      %v337 = vld [vmem:[%s301 + $0x8] sm:$0xff]
      %v338 = vld [vmem:[%s301 + $0x10] sm:$0xff]
      %v339 = vld [vmem:[%s301 + $0x18] sm:$0xff]
      %v340 = vld [vmem:[%s301 + $0x20] sm:$0xff]
      %v341 = vld [vmem:[%s301 + $0x28] sm:$0xff]
      %v342 = vld [vmem:[%s301 + $0x30] sm:$0xff]
      %v343 = vld [vmem:[%s301 + $0x38] sm:$0xff]
      %v344 = vld [vmem:[%s301 + $0x40] sm:$0xff]
      %v345 = vld [vmem:[%s301 + $0x48] sm:$0xff]
      %v346 = vld [vmem:[%s301 + $0x50] sm:$0xff]
      %v347 = vld [vmem:[%s301 + $0x58] sm:$0xff]
      %v348 = vld [vmem:[%s301 + $0x60] sm:$0xff]
      %v349 = vld [vmem:[%s301 + $0x68] sm:$0xff]
      %v350 = vld [vmem:[%s301 + $0x70] sm:$0xff]
      %v351 = vld [vmem:[%s301 + $0x78] sm:$0xff]
      %v352 = vld [vmem:[%s301 + $0x80] sm:$0xff]
      %v353 = vld [vmem:[%s301 + $0x88] sm:$0xff]
      %v354 = vld [vmem:[%s301 + $0x90] sm:$0xff]
      %v355 = vld [vmem:[%s301 + $0x98] sm:$0xff]
      %v356 = vld [vmem:[%s301 + $0xa0] sm:$0xff]
      %v357 = vld [vmem:[%s301 + $0xa8] sm:$0xff]
      %v358 = vld [vmem:[%s301 + $0xb0] sm:$0xff]
      %v359 = vld [vmem:[%s301 + $0xb8] sm:$0xff]
      %v360 = vld [vmem:[%s301 + $0xc0] sm:$0xff]
      %v361 = vld [vmem:[%s301 + $0xc8] sm:$0xff]
      %v362 = vld [vmem:[%s301 + $0xd0] sm:$0xff]
      %v363 = vld [vmem:[%s301 + $0xd8] sm:$0xff]
      %v364 = vld [vmem:[%s301 + $0xe0] sm:$0xff]
      %v365 = vld [vmem:[%s301 + $0xe8] sm:$0xff]
      %v366 = vld [vmem:[%s301 + $0xf0] sm:$0xff]
      %v367 = vld [vmem:[%s301 + $0xf8] sm:$0xff]
      %v368 = vld [vmem:[%s310] sm:$0xf]
      %v369 = vld [vmem:[%s310 + $0x4] sm:$0xf]
      %v370 = vld [vmem:[%s310 + $0x8] sm:$0xf]
      %v371 = vld [vmem:[%s310 + $0xc] sm:$0xf]
      %v372 = vld [vmem:[%s310 + $0x10] sm:$0xf]
      %v373 = vld [vmem:[%s310 + $0x14] sm:$0xf]
      %v374 = vld [vmem:[%s310 + $0x18] sm:$0xf]
      %v375 = vld [vmem:[%s310 + $0x1c] sm:$0xf]
      %v376 = vld [vmem:[%s310 + $0x20] sm:$0xf]
      %v377 = vld [vmem:[%s310 + $0x24] sm:$0xf]
      %v378 = vld [vmem:[%s310 + $0x28] sm:$0xf]
      %v379 = vld [vmem:[%s310 + $0x2c] sm:$0xf]
      %v380 = vld [vmem:[%s310 + $0x30] sm:$0xf]
      %v381 = vld [vmem:[%s310 + $0x34] sm:$0xf]
      %v382 = vld [vmem:[%s310 + $0x38] sm:$0xf]
      %v383 = vld [vmem:[%s310 + $0x3c] sm:$0xf]
      %v384 = vld [vmem:[%s310 + $0x40] sm:$0xf]
      %v385 = vld [vmem:[%s310 + $0x44] sm:$0xf]
      %v386 = vld [vmem:[%s310 + $0x48] sm:$0xf]
      %v387 = vld [vmem:[%s310 + $0x4c] sm:$0xf]
      %v388 = vld [vmem:[%s310 + $0x50] sm:$0xf]
      %v389 = vld [vmem:[%s310 + $0x54] sm:$0xf]
      %v390 = vld [vmem:[%s310 + $0x58] sm:$0xf]
      %v391 = vld [vmem:[%s310 + $0x5c] sm:$0xf]
      %v392 = vld [vmem:[%s310 + $0x60] sm:$0xf]
      %v393 = vld [vmem:[%s310 + $0x64] sm:$0xf]
      %v394 = vld [vmem:[%s310 + $0x68] sm:$0xf]
      %v395 = vld [vmem:[%s310 + $0x6c] sm:$0xf]
      %v396 = vld [vmem:[%s310 + $0x70] sm:$0xf]
      %v397 = vld [vmem:[%s310 + $0x74] sm:$0xf]
      %v398 = vld [vmem:[%s310 + $0x78] sm:$0xf]
      %v399 = vld [vmem:[%s310 + $0x7c] sm:$0xf]
      %v432 = vunpack.c.l.b16 %v336
      %v433 = vunpack.c.h.b16 %v336
      %v434 = vunpack.c.l.b16 %v337
      %v435 = vunpack.c.h.b16 %v337
      %v436 = vunpack.c.l.b16 %v338
      %v437 = vunpack.c.h.b16 %v338
      %v438 = vunpack.c.l.b16 %v339
      %v439 = vunpack.c.h.b16 %v339
      %v440 = vunpack.c.l.b16 %v340
      %v441 = vunpack.c.h.b16 %v340
      %v442 = vunpack.c.l.b16 %v341
      %v443 = vunpack.c.h.b16 %v341
      %v444 = vunpack.c.l.b16 %v342
      %v445 = vunpack.c.h.b16 %v342
      %v446 = vunpack.c.l.b16 %v343
      %v447 = vunpack.c.h.b16 %v343
      %v448 = vunpack.c.l.b16 %v344
      %v449 = vunpack.c.h.b16 %v344
      %v450 = vunpack.c.l.b16 %v345
      %v451 = vunpack.c.h.b16 %v345
      %v452 = vunpack.c.l.b16 %v346
      %v453 = vunpack.c.h.b16 %v346
      %v454 = vunpack.c.l.b16 %v347
      %v455 = vunpack.c.h.b16 %v347
      %v456 = vunpack.c.l.b16 %v348
      %v457 = vunpack.c.h.b16 %v348
      %v458 = vunpack.c.l.b16 %v349
      %v459 = vunpack.c.h.b16 %v349
      %v460 = vunpack.c.l.b16 %v350
      %v461 = vunpack.c.h.b16 %v350
      %v462 = vunpack.c.l.b16 %v351
      %v463 = vunpack.c.h.b16 %v351
      %v464 = vunpack.c.l.b16 %v352
      %v465 = vunpack.c.h.b16 %v352
      %v466 = vunpack.c.l.b16 %v353
      %v467 = vunpack.c.h.b16 %v353
      %v468 = vunpack.c.l.b16 %v354
      %v469 = vunpack.c.h.b16 %v354
      %v470 = vunpack.c.l.b16 %v355
      %v471 = vunpack.c.h.b16 %v355
      %v472 = vunpack.c.l.b16 %v356
      %v473 = vunpack.c.h.b16 %v356
      %v474 = vunpack.c.l.b16 %v357
      %v475 = vunpack.c.h.b16 %v357
      %v476 = vunpack.c.l.b16 %v358
      %v477 = vunpack.c.h.b16 %v358
      %v478 = vunpack.c.l.b16 %v359
      %v479 = vunpack.c.h.b16 %v359
      %v480 = vunpack.c.l.b16 %v360
      %v481 = vunpack.c.h.b16 %v360
      %v482 = vunpack.c.l.b16 %v361
      %v483 = vunpack.c.h.b16 %v361
      %v484 = vunpack.c.l.b16 %v362
      %v485 = vunpack.c.h.b16 %v362
      %v486 = vunpack.c.l.b16 %v363
      %v487 = vunpack.c.h.b16 %v363
      %v488 = vunpack.c.l.b16 %v364
      %v489 = vunpack.c.h.b16 %v364
      %v490 = vunpack.c.l.b16 %v365
      %v491 = vunpack.c.h.b16 %v365
      %v492 = vunpack.c.l.b16 %v366
      %v493 = vunpack.c.h.b16 %v366
      %v494 = vunpack.c.l.b16 %v367
      %v495 = vunpack.c.h.b16 %v367
      %v496 = vpack.c.b16 %v434, %v432
      %v497 = vpack.c.b16 %v435, %v433
      %v498 = vpack.c.b16 %v438, %v436
      %v499 = vpack.c.b16 %v439, %v437
      %v500 = vpack.c.b16 %v442, %v440
      %v501 = vpack.c.b16 %v443, %v441
      %v502 = vpack.c.b16 %v446, %v444
      %v503 = vpack.c.b16 %v447, %v445
      %v504 = vpack.c.b16 %v450, %v448
      %v505 = vpack.c.b16 %v451, %v449
      %v506 = vpack.c.b16 %v454, %v452
      %v507 = vpack.c.b16 %v455, %v453
      %v508 = vpack.c.b16 %v458, %v456
      %v509 = vpack.c.b16 %v459, %v457
      %v510 = vpack.c.b16 %v462, %v460
      %v511 = vpack.c.b16 %v463, %v461
      %v512 = vpack.c.b16 %v466, %v464
      %v513 = vpack.c.b16 %v467, %v465
      %v514 = vpack.c.b16 %v470, %v468
      %v515 = vpack.c.b16 %v471, %v469
      %v516 = vpack.c.b16 %v474, %v472
      %v517 = vpack.c.b16 %v475, %v473
      %v518 = vpack.c.b16 %v478, %v476
      %v519 = vpack.c.b16 %v479, %v477
      %v520 = vpack.c.b16 %v482, %v480
      %v521 = vpack.c.b16 %v483, %v481
      %v522 = vpack.c.b16 %v486, %v484
      %v523 = vpack.c.b16 %v487, %v485
      %v524 = vpack.c.b16 %v490, %v488
      %v525 = vpack.c.b16 %v491, %v489
      %v526 = vpack.c.b16 %v494, %v492
      %v527 = vpack.c.b16 %v495, %v493
      %v592 = vunpack.c.l.b16 %v368
      %v593 = vunpack.c.l.b16 %v369
      %v594 = vunpack.c.l.b16 %v370
      %v595 = vunpack.c.l.b16 %v371
      %v596 = vunpack.c.l.b16 %v372
      %v597 = vunpack.c.l.b16 %v373
      %v598 = vunpack.c.l.b16 %v374
      %v599 = vunpack.c.l.b16 %v375
      %v600 = vunpack.c.l.b16 %v376
      %v601 = vunpack.c.l.b16 %v377
      %v602 = vunpack.c.l.b16 %v378
      %v603 = vunpack.c.l.b16 %v379
      %v604 = vunpack.c.l.b16 %v380
      %v605 = vunpack.c.l.b16 %v381
      %v606 = vunpack.c.l.b16 %v382
      %v607 = vunpack.c.l.b16 %v383
      %v608 = vunpack.c.l.b16 %v384
      %v609 = vunpack.c.l.b16 %v385
      %v610 = vunpack.c.l.b16 %v386
      %v611 = vunpack.c.l.b16 %v387
      %v612 = vunpack.c.l.b16 %v388
      %v613 = vunpack.c.l.b16 %v389
      %v614 = vunpack.c.l.b16 %v390
      %v615 = vunpack.c.l.b16 %v391
      %v616 = vunpack.c.l.b16 %v392
      %v617 = vunpack.c.l.b16 %v393
      %v618 = vunpack.c.l.b16 %v394
      %v619 = vunpack.c.l.b16 %v395
      %v620 = vunpack.c.l.b16 %v396
      %v621 = vunpack.c.l.b16 %v397
      %v622 = vunpack.c.l.b16 %v398
      %v623 = vunpack.c.l.b16 %v399
      %v624 = vpack.c.b16 %v593, %v592
      %v625 = vpack.c.b16 %v595, %v594
      %v626 = vpack.c.b16 %v597, %v596
      %v627 = vpack.c.b16 %v599, %v598
      %v628 = vpack.c.b16 %v601, %v600
      %v629 = vpack.c.b16 %v603, %v602
      %v630 = vpack.c.b16 %v605, %v604
      %v631 = vpack.c.b16 %v607, %v606
      %v632 = vpack.c.b16 %v609, %v608
      %v633 = vpack.c.b16 %v611, %v610
      %v634 = vpack.c.b16 %v613, %v612
      %v635 = vpack.c.b16 %v615, %v614
      %v636 = vpack.c.b16 %v617, %v616
      %v637 = vpack.c.b16 %v619, %v618
      %v638 = vpack.c.b16 %v621, %v620
      %v639 = vpack.c.b16 %v623, %v622
      %656 = vmatpush.bf16.msra.mxu0 %v631
      %657 = vmatpush.bf16.msra.mxu0 %v630
      %658 = vmatpush.bf16.msra.mxu0 %v629
      %659 = vmatpush.bf16.msra.mxu0 %v628
      %660 = vmatpush.bf16.msra.mxu0 %v627
      %661 = vmatpush.bf16.msra.mxu0 %v626
      %662 = vmatpush.bf16.msra.mxu0 %v625
      %663 = vmatpush.bf16.msra.mxu0 %v624
      %664 = vmatmul.bf16.gmra.mxu0 %v496
      %v665 = vpop.f32.mrf.mxu0
      %v666 = vadd.f32 0.0, %v665
      %v667 = vpop.f32.mrf.mxu0
      %v668 = vadd.f32 0.0, %v667
      %669 = vmatmul.bf16.gmra.mxu0 %v498
      %v670 = vpop.f32.mrf.mxu0
      %v671 = vadd.f32 0.0, %v670
      %v672 = vpop.f32.mrf.mxu0
      %v673 = vadd.f32 0.0, %v672
      %674 = vmatmul.bf16.gmra.mxu0 %v500
      %v675 = vpop.f32.mrf.mxu0
      %v676 = vadd.f32 0.0, %v675
      %v677 = vpop.f32.mrf.mxu0
      %v678 = vadd.f32 0.0, %v677
      %679 = vmatmul.bf16.gmra.mxu0 %v502
      %v680 = vpop.f32.mrf.mxu0
      %v681 = vadd.f32 0.0, %v680
      %v682 = vpop.f32.mrf.mxu0
      %v683 = vadd.f32 0.0, %v682
      %684 = vmatmul.bf16.gmra.mxu0 %v504
      %v685 = vpop.f32.mrf.mxu0
      %v686 = vadd.f32 0.0, %v685
      %v687 = vpop.f32.mrf.mxu0
      %v688 = vadd.f32 0.0, %v687
      %689 = vmatmul.bf16.gmra.mxu0 %v506
      %v690 = vpop.f32.mrf.mxu0
      %v691 = vadd.f32 0.0, %v690
      %v692 = vpop.f32.mrf.mxu0
      %v693 = vadd.f32 0.0, %v692
      %694 = vmatmul.bf16.gmra.mxu0 %v508
      %v695 = vpop.f32.mrf.mxu0
      %v696 = vadd.f32 0.0, %v695
      %v697 = vpop.f32.mrf.mxu0
      %v698 = vadd.f32 0.0, %v697
      %699 = vmatmul.bf16.gmra.mxu0 %v510
      %v700 = vpop.f32.mrf.mxu0
      %v701 = vadd.f32 0.0, %v700
      %v702 = vpop.f32.mrf.mxu0
      %v703 = vadd.f32 0.0, %v702
      %704 = vmatmul.bf16.gmra.mxu0 %v512
      %v705 = vpop.f32.mrf.mxu0
      %v706 = vadd.f32 0.0, %v705
      %v707 = vpop.f32.mrf.mxu0
      %v708 = vadd.f32 0.0, %v707
      %709 = vmatmul.bf16.gmra.mxu0 %v514
      %v710 = vpop.f32.mrf.mxu0
      %v711 = vadd.f32 0.0, %v710
      %v712 = vpop.f32.mrf.mxu0
      %v713 = vadd.f32 0.0, %v712
      %714 = vmatmul.bf16.gmra.mxu0 %v516
      %v715 = vpop.f32.mrf.mxu0
      %v716 = vadd.f32 0.0, %v715
      %v717 = vpop.f32.mrf.mxu0
      %v718 = vadd.f32 0.0, %v717
      %719 = vmatmul.bf16.gmra.mxu0 %v518
      %v720 = vpop.f32.mrf.mxu0
      %v721 = vadd.f32 0.0, %v720
      %v722 = vpop.f32.mrf.mxu0
      %v723 = vadd.f32 0.0, %v722
      %724 = vmatmul.bf16.gmra.mxu0 %v520
      %v725 = vpop.f32.mrf.mxu0
      %v726 = vadd.f32 0.0, %v725
      %v727 = vpop.f32.mrf.mxu0
      %v728 = vadd.f32 0.0, %v727
      %729 = vmatmul.bf16.gmra.mxu0 %v522
      %v730 = vpop.f32.mrf.mxu0
      %v731 = vadd.f32 0.0, %v730
      %v732 = vpop.f32.mrf.mxu0
      %v733 = vadd.f32 0.0, %v732
      %734 = vmatmul.bf16.gmra.mxu0 %v524
      %v735 = vpop.f32.mrf.mxu0
      %v736 = vadd.f32 0.0, %v735
      %v737 = vpop.f32.mrf.mxu0
      %v738 = vadd.f32 0.0, %v737
      %739 = vmatmul.bf16.gmra.mxu0 %v526
      %v740 = vpop.f32.mrf.mxu0
      %v741 = vadd.f32 0.0, %v740
      %v742 = vpop.f32.mrf.mxu0
      %v743 = vadd.f32 0.0, %v742
      %744 = vdwg.mxu0
      %745 = vmatpush.bf16.msra.mxu0 %v639
      %746 = vmatpush.bf16.msra.mxu0 %v638
      %747 = vmatpush.bf16.msra.mxu0 %v637
      %748 = vmatpush.bf16.msra.mxu0 %v636
      %749 = vmatpush.bf16.msra.mxu0 %v635
      %750 = vmatpush.bf16.msra.mxu0 %v634
      %751 = vmatpush.bf16.msra.mxu0 %v633
      %752 = vmatpush.bf16.msra.mxu0 %v632
      %753 = vmatmul.bf16.gmra.mxu0 %v497
      %v754 = vpop.f32.mrf.mxu0
      %v755 = vadd.f32 %v666, %v754
      %v756 = vpop.f32.mrf.mxu0
      %v757 = vadd.f32 %v668, %v756
      %758 = vmatmul.bf16.gmra.mxu0 %v499
      %v759 = vpop.f32.mrf.mxu0
      %v760 = vadd.f32 %v671, %v759
      %v761 = vpop.f32.mrf.mxu0
      %v762 = vadd.f32 %v673, %v761
      %763 = vmatmul.bf16.gmra.mxu0 %v501
      %v764 = vpop.f32.mrf.mxu0
      %v765 = vadd.f32 %v676, %v764
      %v766 = vpop.f32.mrf.mxu0
      %v767 = vadd.f32 %v678, %v766
      %768 = vmatmul.bf16.gmra.mxu0 %v503
      %v769 = vpop.f32.mrf.mxu0
      %v770 = vadd.f32 %v681, %v769
      %v771 = vpop.f32.mrf.mxu0
      %v772 = vadd.f32 %v683, %v771
      %773 = vmatmul.bf16.gmra.mxu0 %v505
      %v774 = vpop.f32.mrf.mxu0
      %v775 = vadd.f32 %v686, %v774
      %v776 = vpop.f32.mrf.mxu0
      %v777 = vadd.f32 %v688, %v776
      %778 = vmatmul.bf16.gmra.mxu0 %v507
      %v779 = vpop.f32.mrf.mxu0
      %v780 = vadd.f32 %v691, %v779
      %v781 = vpop.f32.mrf.mxu0
      %v782 = vadd.f32 %v693, %v781
      %783 = vmatmul.bf16.gmra.mxu0 %v509
      %v784 = vpop.f32.mrf.mxu0
      %v785 = vadd.f32 %v696, %v784
      %v786 = vpop.f32.mrf.mxu0
      %v787 = vadd.f32 %v698, %v786
      %788 = vmatmul.bf16.gmra.mxu0 %v511
      %v789 = vpop.f32.mrf.mxu0
      %v790 = vadd.f32 %v701, %v789
      %v791 = vpop.f32.mrf.mxu0
      %v792 = vadd.f32 %v703, %v791
      %793 = vmatmul.bf16.gmra.mxu0 %v513
      %v794 = vpop.f32.mrf.mxu0
      %v795 = vadd.f32 %v706, %v794
      %v796 = vpop.f32.mrf.mxu0
      %v797 = vadd.f32 %v708, %v796
      %798 = vmatmul.bf16.gmra.mxu0 %v515
      %v799 = vpop.f32.mrf.mxu0
      %v800 = vadd.f32 %v711, %v799
      %v801 = vpop.f32.mrf.mxu0
      %v802 = vadd.f32 %v713, %v801
      %803 = vmatmul.bf16.gmra.mxu0 %v517
      %v804 = vpop.f32.mrf.mxu0
      %v805 = vadd.f32 %v716, %v804
      %v806 = vpop.f32.mrf.mxu0
      %v807 = vadd.f32 %v718, %v806
      %808 = vmatmul.bf16.gmra.mxu0 %v519
      %v809 = vpop.f32.mrf.mxu0
      %v810 = vadd.f32 %v721, %v809
      %v811 = vpop.f32.mrf.mxu0
      %v812 = vadd.f32 %v723, %v811
      %813 = vmatmul.bf16.gmra.mxu0 %v521
      %v814 = vpop.f32.mrf.mxu0
      %v815 = vadd.f32 %v726, %v814
      %v816 = vpop.f32.mrf.mxu0
      %v817 = vadd.f32 %v728, %v816
      %818 = vmatmul.bf16.gmra.mxu0 %v523
      %v819 = vpop.f32.mrf.mxu0
      %v820 = vadd.f32 %v731, %v819
      %v821 = vpop.f32.mrf.mxu0
      %v822 = vadd.f32 %v733, %v821
      %823 = vmatmul.bf16.gmra.mxu0 %v525
      %v824 = vpop.f32.mrf.mxu0
      %v825 = vadd.f32 %v736, %v824
      %v826 = vpop.f32.mrf.mxu0
      %v827 = vadd.f32 %v738, %v826
      %828 = vmatmul.bf16.gmra.mxu0 %v527
      %v829 = vpop.f32.mrf.mxu0
      %v830 = vadd.f32 %v741, %v829
      %v831 = vpop.f32.mrf.mxu0
      %v832 = vadd.f32 %v743, %v831
      %833 = vdwg.mxu0
      %v834 = vld [vmem:[%s316] sm:$0x1]
      %v836 = vperm.slane %v834, 0
      %v838 = vmul.f32 %v755, %v836
      %v839 = vmul.f32 %v757, %v836
      %v840 = vmul.f32 %v760, %v836
      %v841 = vmul.f32 %v762, %v836
      %v842 = vmul.f32 %v765, %v836
      %v843 = vmul.f32 %v767, %v836
      %v844 = vmul.f32 %v770, %v836
      %v845 = vmul.f32 %v772, %v836
      %v846 = vmul.f32 %v775, %v836
      %v847 = vmul.f32 %v777, %v836
      %v848 = vmul.f32 %v780, %v836
      %v849 = vmul.f32 %v782, %v836
      %v850 = vmul.f32 %v785, %v836
      %v851 = vmul.f32 %v787, %v836
      %v852 = vmul.f32 %v790, %v836
      %v853 = vmul.f32 %v792, %v836
      %v854 = vmul.f32 %v795, %v836
      %v855 = vmul.f32 %v797, %v836
      %v856 = vmul.f32 %v800, %v836
      %v857 = vmul.f32 %v802, %v836
      %v858 = vmul.f32 %v805, %v836
      %v859 = vmul.f32 %v807, %v836
      %v860 = vmul.f32 %v810, %v836
      %v861 = vmul.f32 %v812, %v836
      %v862 = vmul.f32 %v815, %v836
      %v863 = vmul.f32 %v817, %v836
      %v864 = vmul.f32 %v820, %v836
      %v865 = vmul.f32 %v822, %v836
      %v866 = vmul.f32 %v825, %v836
      %v867 = vmul.f32 %v827, %v836
      %v868 = vmul.f32 %v830, %v836
      %v869 = vmul.f32 %v832, %v836
      %v870 = vld [vmem:[%s322] sm:$0x1]
      %v872 = vperm.slane %v870, 0
      %v874 = vadd.f32 %v838, %v872
      %v875 = vadd.f32 %v839, %v872
      %v876 = vadd.f32 %v840, %v872
      %v877 = vadd.f32 %v841, %v872
      %v878 = vadd.f32 %v842, %v872
      %v879 = vadd.f32 %v843, %v872
      %v880 = vadd.f32 %v844, %v872
      %v881 = vadd.f32 %v845, %v872
      %v882 = vadd.f32 %v846, %v872
      %v883 = vadd.f32 %v847, %v872
      %v884 = vadd.f32 %v848, %v872
      %v885 = vadd.f32 %v849, %v872
      %v886 = vadd.f32 %v850, %v872
      %v887 = vadd.f32 %v851, %v872
      %v888 = vadd.f32 %v852, %v872
      %v889 = vadd.f32 %v853, %v872
      %v890 = vadd.f32 %v854, %v872
      %v891 = vadd.f32 %v855, %v872
      %v892 = vadd.f32 %v856, %v872
      %v893 = vadd.f32 %v857, %v872
      %v894 = vadd.f32 %v858, %v872
      %v895 = vadd.f32 %v859, %v872
      %v896 = vadd.f32 %v860, %v872
      %v897 = vadd.f32 %v861, %v872
      %v898 = vadd.f32 %v862, %v872
      %v899 = vadd.f32 %v863, %v872
      %v900 = vadd.f32 %v864, %v872
      %v901 = vadd.f32 %v865, %v872
      %v902 = vadd.f32 %v866, %v872
      %v903 = vadd.f32 %v867, %v872
      %v904 = vadd.f32 %v868, %v872
      %v905 = vadd.f32 %v869, %v872
      %v906 = vmax.f32 %v874, 0.0
      %v907 = vmax.f32 %v875, 0.0
      %v908 = vmax.f32 %v876, 0.0
      %v909 = vmax.f32 %v877, 0.0
      %v910 = vmax.f32 %v878, 0.0
      %v911 = vmax.f32 %v879, 0.0
      %v912 = vmax.f32 %v880, 0.0
      %v913 = vmax.f32 %v881, 0.0
      %v914 = vmax.f32 %v882, 0.0
      %v915 = vmax.f32 %v883, 0.0
      %v916 = vmax.f32 %v884, 0.0
      %v917 = vmax.f32 %v885, 0.0
      %v918 = vmax.f32 %v886, 0.0
      %v919 = vmax.f32 %v887, 0.0
      %v920 = vmax.f32 %v888, 0.0
      %v921 = vmax.f32 %v889, 0.0
      %v922 = vmax.f32 %v890, 0.0
      %v923 = vmax.f32 %v891, 0.0
      %v924 = vmax.f32 %v892, 0.0
      %v925 = vmax.f32 %v893, 0.0
      %v926 = vmax.f32 %v894, 0.0
      %v927 = vmax.f32 %v895, 0.0
      %v928 = vmax.f32 %v896, 0.0
      %v929 = vmax.f32 %v897, 0.0
      %v930 = vmax.f32 %v898, 0.0
      %v931 = vmax.f32 %v899, 0.0
      %v932 = vmax.f32 %v900, 0.0
      %v933 = vmax.f32 %v901, 0.0
      %v934 = vmax.f32 %v902, 0.0
      %v935 = vmax.f32 %v903, 0.0
      %v936 = vmax.f32 %v904, 0.0
      %v937 = vmax.f32 %v905, 0.0
      %938 = vst [vmem:[%s334] sm:$0xff] %v906
      %939 = vst [vmem:[%s334 + $0x8] sm:$0xff] %v907
      %940 = vst [vmem:[%s334 + $0x10] sm:$0xff] %v908
      %941 = vst [vmem:[%s334 + $0x18] sm:$0xff] %v909
      %942 = vst [vmem:[%s334 + $0x20] sm:$0xff] %v910
      %943 = vst [vmem:[%s334 + $0x28] sm:$0xff] %v911
      %944 = vst [vmem:[%s334 + $0x30] sm:$0xff] %v912
      %945 = vst [vmem:[%s334 + $0x38] sm:$0xff] %v913
      %946 = vst [vmem:[%s334 + $0x40] sm:$0xff] %v914
      %947 = vst [vmem:[%s334 + $0x48] sm:$0xff] %v915
      %948 = vst [vmem:[%s334 + $0x50] sm:$0xff] %v916
      %949 = vst [vmem:[%s334 + $0x58] sm:$0xff] %v917
      %950 = vst [vmem:[%s334 + $0x60] sm:$0xff] %v918
      %951 = vst [vmem:[%s334 + $0x68] sm:$0xff] %v919
      %952 = vst [vmem:[%s334 + $0x70] sm:$0xff] %v920
      %953 = vst [vmem:[%s334 + $0x78] sm:$0xff] %v921
      %954 = vst [vmem:[%s334 + $0x80] sm:$0xff] %v922
      %955 = vst [vmem:[%s334 + $0x88] sm:$0xff] %v923
      %956 = vst [vmem:[%s334 + $0x90] sm:$0xff] %v924
      %957 = vst [vmem:[%s334 + $0x98] sm:$0xff] %v925
      %958 = vst [vmem:[%s334 + $0xa0] sm:$0xff] %v926
      %959 = vst [vmem:[%s334 + $0xa8] sm:$0xff] %v927
      %960 = vst [vmem:[%s334 + $0xb0] sm:$0xff] %v928
      %961 = vst [vmem:[%s334 + $0xb8] sm:$0xff] %v929
      %962 = vst [vmem:[%s334 + $0xc0] sm:$0xff] %v930
      %963 = vst [vmem:[%s334 + $0xc8] sm:$0xff] %v931
      %964 = vst [vmem:[%s334 + $0xd0] sm:$0xff] %v932
      %965 = vst [vmem:[%s334 + $0xd8] sm:$0xff] %v933
      %966 = vst [vmem:[%s334 + $0xe0] sm:$0xff] %v934
      %967 = vst [vmem:[%s334 + $0xe8] sm:$0xff] %v935
      %968 = vst [vmem:[%s334 + $0xf0] sm:$0xff] %v936
      %969 = vst [vmem:[%s334 + $0xf8] sm:$0xff] %v937
      %s970 = smul.u32 32, %s21
      %p971 = scmp.lt.s32.totalorder %s20, 0
      %s972 = scalar_select %p971, %s20, 0
      %p973 = scmp.lt.s32.totalorder %s970, 63
      %s974 = scalar_select %p973, %s970, 63
      %p975 = scmp.lt.s32.totalorder %s22, 0
      %s976 = scalar_select %p975, %s22, 0
      %s977 = sadd.s32 %s976, %s974
      %s978 = smul.addr %s972, 64
      %s979 = sadd.s32 %s977, %s978
      %s980 = smul.addr %s979, 8
      %s981 = scalar_lea.vmem %s4, %s980
      // Predicated region
      $region37: #{run.8} parent=35 // pred_check
        %p982 = pneg %p168
      $region38: #{run.8} parent=35 // pred_check_branch
        %984 = sbr.rel (%p982) target = $region40
      $region39: #{run.8} parent=35 // pred_region
        %s985 = smul.u32 32, %s21
      $region40: #{run.8} parent=35 // pred_fallthru
        _
    $region36: #{run.8} parent=5 // pred_fallthru
      _
    %p986 = scmp.le.s32.totalorder 2, %s10
    // Predicated region
    $region41: #{run.8} parent=5 // pred_check
      %p987 = pneg %p986
    $region42: #{run.8} parent=5 // pred_check_branch
      %989 = sbr.rel (%p987) target = $region44
    $region43: #{run.8} parent=5 // pred_region
      %s990 = ssub.s32 %s10, 2
      // Predicated region
      $region45: #{run.8} parent=43 // pred_check
        %p991 = pneg %p174
      $region46: #{run.8} parent=43 // pred_check_branch
        %993 = sbr.rel (%p991) target = $region48
      $region47: #{run.8} parent=43 // pred_region
        %s994 = smul.u32 32, %s24
        %p995 = scmp.lt.s32.totalorder %s23, 0
        %s996 = scalar_select %p995, %s23, 0
        %p997 = scmp.lt.s32.totalorder %s994, 63
        %s998 = scalar_select %p997, %s994, 63
        %p999 = scmp.lt.s32.totalorder %s25, 0
        %s1000 = scalar_select %p999, %s25, 0
        %s1001 = sadd.s32 %s1000, %s998
        %s1002 = smul.addr %s996, 64
        %s1003 = sadd.s32 %s1001, %s1002
        %s1004 = smul.addr %s1003, 8
        %s1005 = scalar_lea.vmem %s4, %s1004
      $region48: #{run.8} parent=43 // pred_fallthru
        _
    $region44: #{run.8} parent=5 // pred_fallthru
      _
  $region6: #{run.8} parent=0 // loop_footer
    %s14 = sadd.s32 1, %s10
  $region7: #{run.8} parent=0 // loop_footer_branch
    %9 = sbr.rel target = $region3
  $region8: #{run.8} parent=0 // loop_exit
    _

// kernel: run.9
$region0: #{run.9}
  #allocation0 [shape = 'u32[]', space=smem, size = 0x4, offset = 0x4, fixed_abs, tag = 'smem constant byte address 0x4 - core index']
  #allocation1 [shape = 'u32[72,128]{1,0:T(1,128)}', space=vmem, size = 0x9000, scoped, tag = 'internal scratch']
  %s0 = inlined_call_operand.vmem [shape: bf16[1,512,128], index: 0, kind: input, shape index: {}]
  %s1 = inlined_call_operand.vmem [shape: bf16[1,128,128], index: 1, kind: input, shape index: {}]
  %s2 = inlined_call_operand.vmem [shape: f32[1,1,128], index: 2, kind: input, shape index: {}]
  %s3 = inlined_call_operand.vmem [shape: f32[1,1,128], index: 3, kind: input, shape index: {}]
  %s4 = inlined_call_operand.vmem [shape: f32[1,512,128], index: 4, kind: input, shape index: {}]
  %s5 = inlined_call_operand.vmem [shape: f32[1,512,128], index: 5, kind: output, shape index: {}]
  %s6 = sld [smem:[#allocation0]]
  $region53: #{run.9} parent=0
    _
  %s8 = ssub.s32 1, %s6
  %s9 = scalar_select 0, %s8, %s6
  loop: start=0, step=1, limit=4
  $region2: #{run.9} parent=0 // loop_pre_header
    _
  $region3: #{run.9} parent=0 // loop_header
    %s11 = sphi 0, %s15
    %p12 = scmp.ge.s32.totalorder %s11, 4
    %s18 = sphi 0, %s37
    %s19 = sphi 0, %s33
    %s20 = sphi 0, %s29
    %s21 = sphi 0, %s18
    %s22 = sphi 0, %s19
    %s23 = sphi 0, %s20
    %s24 = sphi 0, %s21
    %s25 = sphi 0, %s22
    %s26 = sphi 0, %s23
    %s42 = sphi 0, %s44
    %s45 = sphi 0, %s42
    %s46 = sphi 0, %s45
    %s62 = sphi 0, %s46
    %s70 = sphi 0, %s72
    %s73 = sphi 0, %s70
    %s74 = sphi 0, %s73
    %s90 = sphi 0, %s74
    %s98 = sphi 0, %s100
    %s101 = sphi 0, %s98
    %s102 = sphi 0, %s101
    %s118 = sphi 0, %s102
    %s126 = sphi 0, %s128
    %s129 = sphi 0, %s126
    %s130 = sphi 0, %s129
    %s146 = sphi 0, %s130
    %s156 = sphi 0, %s158
    %s159 = sphi 0, %s156
    %s160 = sphi 0, %s159
    %s176 = sphi 0, %s160
    %s186 = sphi 0, %s188
    %s189 = sphi 0, %s186
    %s190 = sphi 0, %s189
    %s206 = sphi 0, %s190
  $region4: #{run.9} parent=0 // loop_header_branch
    %14 = sbr.rel (%p12) target = $region8
  $region5: #{run.9} parent=0 // loop_body
    %s16 = ssub.s32 %s11, 1
    %s17 = ssub.s32 %s11, 2
    %s27 = sadd.s32 1, %s20
    %p28 = scmp.ge.s32.totalorder %s27, 1
    %s29 = scalar_select %p28, 0, %s27
    %s30 = sadd.s32 1, %s19
    %s31 = scalar_select %p28, %s30, %s19
    %p32 = scmp.ge.s32.totalorder %s31, 2
    %s33 = scalar_select %p32, 0, %s31
    %s34 = sadd.s32 1, %s18
    %s35 = scalar_select %p32, %s34, %s18
    %p36 = scmp.ge.s32.totalorder %s35, 1
    %s37 = scalar_select %p36, 0, %s35
    %s38 = ssub.s32 %s18, %s37
    %s39 = ssub.s32 %s19, %s33
    %s40 = sor.u32 %s38, %s39
    %p41 = scmp.eq.s32.totalorder %s40, 0
    %s43 = sadd.s32 %s42, 1
    %s44 = scalar_select %p41, %s42, %s43
    %p47 = pneg %p41
    %p48 = scmp.eq.s32.totalorder %s11, 1
    %p49 = por %p47, %p48
    %p50 = scmp.ne.s32.totalorder %s42, %s45
    %p51 = scmp.eq.s32.totalorder %s11, 0
    %p52 = por %p50, %p51
    %p53 = scmp.ne.s32.totalorder %s42, %s45
    %p54 = scmp.eq.s32.totalorder %s16, 1
    %p55 = por %p53, %p54
    %p56 = scmp.ne.s32.totalorder %s45, %s46
    %p57 = scmp.eq.s32.totalorder %s16, 0
    %p58 = por %p56, %p57
    %p59 = scmp.ne.s32.totalorder %s45, %s46
    %p60 = scmp.eq.s32.totalorder %s17, 1
    %p61 = por %p59, %p60
    %p63 = scmp.ne.s32.totalorder %s46, %s62
    %p64 = scmp.eq.s32.totalorder %s17, 0
    %p65 = por %p63, %p64
    %s66 = ssub.s32 %s18, %s37
    %s67 = ssub.s32 %s20, %s29
    %s68 = sor.u32 %s66, %s67
    %p69 = scmp.eq.s32.totalorder %s68, 0
    %s71 = sadd.s32 %s70, 1
    %s72 = scalar_select %p69, %s70, %s71
    %p75 = pneg %p69
    %p76 = scmp.eq.s32.totalorder %s11, 1
    %p77 = por %p75, %p76
    %p78 = scmp.ne.s32.totalorder %s70, %s73
    %p79 = scmp.eq.s32.totalorder %s11, 0
    %p80 = por %p78, %p79
    %p81 = scmp.ne.s32.totalorder %s70, %s73
    %p82 = scmp.eq.s32.totalorder %s16, 1
    %p83 = por %p81, %p82
    %p84 = scmp.ne.s32.totalorder %s73, %s74
    %p85 = scmp.eq.s32.totalorder %s16, 0
    %p86 = por %p84, %p85
    %p87 = scmp.ne.s32.totalorder %s73, %s74
    %p88 = scmp.eq.s32.totalorder %s17, 1
    %p89 = por %p87, %p88
    %p91 = scmp.ne.s32.totalorder %s74, %s90
    %p92 = scmp.eq.s32.totalorder %s17, 0
    %p93 = por %p91, %p92
    %s94 = ssub.s32 %s18, %s37
    %s95 = ssub.s32 %s20, %s29
    %s96 = sor.u32 %s94, %s95
    %p97 = scmp.eq.s32.totalorder %s96, 0
    %s99 = sadd.s32 %s98, 1
    %s100 = scalar_select %p97, %s98, %s99
    %p103 = pneg %p97
    %p104 = scmp.eq.s32.totalorder %s11, 1
    %p105 = por %p103, %p104
    %p106 = scmp.ne.s32.totalorder %s98, %s101
    %p107 = scmp.eq.s32.totalorder %s11, 0
    %p108 = por %p106, %p107
    %p109 = scmp.ne.s32.totalorder %s98, %s101
    %p110 = scmp.eq.s32.totalorder %s16, 1
    %p111 = por %p109, %p110
    %p112 = scmp.ne.s32.totalorder %s101, %s102
    %p113 = scmp.eq.s32.totalorder %s16, 0
    %p114 = por %p112, %p113
    %p115 = scmp.ne.s32.totalorder %s101, %s102
    %p116 = scmp.eq.s32.totalorder %s17, 1
    %p117 = por %p115, %p116
    %p119 = scmp.ne.s32.totalorder %s102, %s118
    %p120 = scmp.eq.s32.totalorder %s17, 0
    %p121 = por %p119, %p120
    %s122 = ssub.s32 %s18, %s37
    %s123 = ssub.s32 %s20, %s29
    %s124 = sor.u32 %s122, %s123
    %p125 = scmp.eq.s32.totalorder %s124, 0
    %s127 = sadd.s32 %s126, 1
    %s128 = scalar_select %p125, %s126, %s127
    %p131 = pneg %p125
    %p132 = scmp.eq.s32.totalorder %s11, 1
    %p133 = por %p131, %p132
    %p134 = scmp.ne.s32.totalorder %s126, %s129
    %p135 = scmp.eq.s32.totalorder %s11, 0
    %p136 = por %p134, %p135
    %p137 = scmp.ne.s32.totalorder %s126, %s129
    %p138 = scmp.eq.s32.totalorder %s16, 1
    %p139 = por %p137, %p138
    %p140 = scmp.ne.s32.totalorder %s129, %s130
    %p141 = scmp.eq.s32.totalorder %s16, 0
    %p142 = por %p140, %p141
    %p143 = scmp.ne.s32.totalorder %s129, %s130
    %p144 = scmp.eq.s32.totalorder %s17, 1
    %p145 = por %p143, %p144
    %p147 = scmp.ne.s32.totalorder %s130, %s146
    %p148 = scmp.eq.s32.totalorder %s17, 0
    %p149 = por %p147, %p148
    %s150 = ssub.s32 %s18, %s37
    %s151 = ssub.s32 %s19, %s33
    %s152 = sor.u32 %s150, %s151
    %s153 = ssub.s32 %s20, %s29
    %s154 = sor.u32 %s152, %s153
    %p155 = scmp.eq.s32.totalorder %s154, 0
    %s157 = sadd.s32 %s156, 1
    %s158 = scalar_select %p155, %s156, %s157
    %p161 = pneg %p155
    %p162 = scmp.eq.s32.totalorder %s11, 1
    %p163 = por %p161, %p162
    %p164 = scmp.ne.s32.totalorder %s156, %s159
    %p165 = scmp.eq.s32.totalorder %s11, 0
    %p166 = por %p164, %p165
    %p167 = scmp.ne.s32.totalorder %s156, %s159
    %p168 = scmp.eq.s32.totalorder %s16, 1
    %p169 = por %p167, %p168
    %p170 = scmp.ne.s32.totalorder %s159, %s160
    %p171 = scmp.eq.s32.totalorder %s16, 0
    %p172 = por %p170, %p171
    %p173 = scmp.ne.s32.totalorder %s159, %s160
    %p174 = scmp.eq.s32.totalorder %s17, 1
    %p175 = por %p173, %p174
    %p177 = scmp.ne.s32.totalorder %s160, %s176
    %p178 = scmp.eq.s32.totalorder %s17, 0
    %p179 = por %p177, %p178
    %s180 = ssub.s32 %s18, %s37
    %s181 = ssub.s32 %s19, %s33
    %s182 = sor.u32 %s180, %s181
    %s183 = ssub.s32 %s20, %s29
    %s184 = sor.u32 %s182, %s183
    %p185 = scmp.eq.s32.totalorder %s184, 0
    %s187 = sadd.s32 %s186, 1
    %s188 = scalar_select %p185, %s186, %s187
    %p191 = pneg %p185
    %p192 = scmp.eq.s32.totalorder %s11, 1
    %p193 = por %p191, %p192
    %p194 = scmp.ne.s32.totalorder %s186, %s189
    %p195 = scmp.eq.s32.totalorder %s11, 0
    %p196 = por %p194, %p195
    %p197 = scmp.ne.s32.totalorder %s186, %s189
    %p198 = scmp.eq.s32.totalorder %s16, 1
    %p199 = por %p197, %p198
    %p200 = scmp.ne.s32.totalorder %s189, %s190
    %p201 = scmp.eq.s32.totalorder %s16, 0
    %p202 = por %p200, %p201
    %p203 = scmp.ne.s32.totalorder %s189, %s190
    %p204 = scmp.eq.s32.totalorder %s17, 1
    %p205 = por %p203, %p204
    %p207 = scmp.ne.s32.totalorder %s190, %s206
    %p208 = scmp.eq.s32.totalorder %s17, 0
    %p209 = por %p207, %p208
    %p210 = scmp.le.s32.totalorder 1, %s11
    %p211 = scmp.lt.s32.totalorder %s11, 3
    %p212 = pnand %p210, %p211
    %p213 = pneg %p212
    // Predicated region
    $region9: #{run.9} parent=5 // pred_check
      _
    $region10: #{run.9} parent=5 // pred_check_branch
      %215 = sbr.rel (%p212) target = $region12
    $region11: #{run.9} parent=5 // pred_region
      %s216 = ssub.s32 %s11, 1
      // Predicated region
      $region13: #{run.9} parent=11 // pred_check
        %p217 = pneg %p86
      $region14: #{run.9} parent=11 // pred_check_branch
        %219 = sbr.rel (%p217) target = $region16
      $region15: #{run.9} parent=11 // pred_region
        %p220 = scmp.lt.s32.totalorder %s21, 0
        %s221 = scalar_select %p220, %s21, 0
        %p222 = scmp.lt.s32.totalorder %s23, 0
        %s223 = scalar_select %p222, %s23, 0
        %s224 = smul.addr %s221, 16
        %s225 = sadd.s32 %s223, %s224
        %s226 = smul.addr %s225, 4
        %s227 = scalar_lea.vmem %s1, %s226
      $region16: #{run.9} parent=11 // pred_fallthru
        _
      // Predicated region
      $region17: #{run.9} parent=11 // pred_check
        %p228 = pneg %p114
      $region18: #{run.9} parent=11 // pred_check_branch
        %230 = sbr.rel (%p228) target = $region20
      $region19: #{run.9} parent=11 // pred_region
        %p231 = scmp.lt.s32.totalorder %s21, 0
        %s232 = scalar_select %p231, %s21, 0
        %p233 = scmp.lt.s32.totalorder %s23, 0
        %s234 = scalar_select %p233, %s23, 0
        %s235 = sadd.s32 %s234, %s232
        %s236 = scalar_lea.vmem %s2, %s235
      $region20: #{run.9} parent=11 // pred_fallthru
        _
      // Predicated region
      $region21: #{run.9} parent=11 // pred_check
        %p237 = pneg %p142
      $region22: #{run.9} parent=11 // pred_check_branch
        %239 = sbr.rel (%p237) target = $region24
      $region23: #{run.9} parent=11 // pred_region
        %p240 = scmp.lt.s32.totalorder %s21, 0
        %s241 = scalar_select %p240, %s21, 0
        %p242 = scmp.lt.s32.totalorder %s23, 0
        %s243 = scalar_select %p242, %s23, 0
        %s244 = sadd.s32 %s243, %s241
        %s245 = scalar_lea.vmem %s3, %s244
      $region24: #{run.9} parent=11 // pred_fallthru
        _
    $region12: #{run.9} parent=5 // pred_fallthru
      _
    %p246 = scmp.lt.s32.totalorder %s11, 2
    // Predicated region
    $region25: #{run.9} parent=5 // pred_check
      %p247 = pneg %p246
    $region26: #{run.9} parent=5 // pred_check_branch
      %249 = sbr.rel (%p247) target = $region28
    $region27: #{run.9} parent=5 // pred_region
      // Predicated region
      $region29: #{run.9} parent=27 // pred_check
        %p250 = pneg %p52
      $region30: #{run.9} parent=27 // pred_check_branch
        %252 = sbr.rel (%p250) target = $region32
      $region31: #{run.9} parent=27 // pred_region
        %s253 = smul.u32 32, %s19
        %p254 = scmp.lt.s32.totalorder %s18, 0
        %s255 = scalar_select %p254, %s18, 0
        %p256 = scmp.lt.s32.totalorder %s253, 63
        %s257 = scalar_select %p256, %s253, 63
        %s258 = smul.addr %s255, 64
        %s259 = sadd.s32 %s257, %s258
        %s260 = smul.addr %s259, 4
        %s261 = scalar_lea.vmem %s0, %s260
        %s262 = smul.u32 32, %s19
      $region32: #{run.9} parent=27 // pred_fallthru
        _
      // Predicated region
      $region33: #{run.9} parent=27 // pred_check
        %p263 = pneg %p166
      $region34: #{run.9} parent=27 // pred_check_branch
        %265 = sbr.rel (%p263) target = $region36
      $region35: #{run.9} parent=27 // pred_region
        %s266 = smul.u32 32, %s19
        %p267 = scmp.lt.s32.totalorder %s18, 0
        %s268 = scalar_select %p267, %s18, 0
        %p269 = scmp.lt.s32.totalorder %s266, 63
        %s270 = scalar_select %p269, %s266, 63
        %p271 = scmp.lt.s32.totalorder %s20, 0
        %s272 = scalar_select %p271, %s20, 0
        %s273 = sadd.s32 %s272, %s270
        %s274 = smul.addr %s268, 64
        %s275 = sadd.s32 %s273, %s274
        %s276 = smul.addr %s275, 8
        %s277 = scalar_lea.vmem %s4, %s276
        %s278 = smul.u32 32, %s19
      $region36: #{run.9} parent=27 // pred_fallthru
        _
    $region28: #{run.9} parent=5 // pred_fallthru
      _
    %p279 = scmp.le.s32.totalorder 1, %s11
    %p280 = scmp.lt.s32.totalorder %s11, 3
    %p281 = pnand %p279, %p280
    %p282 = pneg %p281
    // Predicated region
    $region37: #{run.9} parent=5 // pred_check
      _
    $region38: #{run.9} parent=5 // pred_check_branch
      %284 = sbr.rel (%p281) target = $region40
    $region39: #{run.9} parent=5 // pred_region
      %s285 = ssub.s32 %s11, 1
      %s286 = smul.u32 32, %s22
      %p287 = scmp.lt.s32.totalorder %s21, 0
      %s288 = scalar_select %p287, %s21, 0
      %p289 = scmp.lt.s32.totalorder %s286, 63
      %s290 = scalar_select %p289, %s286, 63
      %s291 = smul.addr %s288, 64
      %s292 = sadd.s32 %s290, %s291
      %s293 = smul.addr %s292, 4
      %s294 = scalar_lea.vmem %s0, %s293
      %p295 = pneg %p58
      %p296 = pneg %p55
      %p297 = scmp.lt.s32.totalorder %s21, 0
      %s298 = scalar_select %p297, %s21, 0
      %p299 = scmp.lt.s32.totalorder %s23, 0
      %s300 = scalar_select %p299, %s23, 0
      %s301 = smul.addr %s298, 16
      %s302 = sadd.s32 %s300, %s301
      %s303 = smul.addr %s302, 4
      %s304 = scalar_lea.vmem %s1, %s303
      %p305 = pneg %p86
      %p306 = pneg %p83
      %p307 = scmp.lt.s32.totalorder %s21, 0
      %s308 = scalar_select %p307, %s21, 0
      %p309 = scmp.lt.s32.totalorder %s23, 0
      %s310 = scalar_select %p309, %s23, 0
      %s311 = sadd.s32 %s310, %s308
      %s312 = scalar_lea.vmem %s2, %s311
      %p313 = pneg %p114
      %p314 = pneg %p111
      %p315 = scmp.lt.s32.totalorder %s21, 0
      %s316 = scalar_select %p315, %s21, 0
      %p317 = scmp.lt.s32.totalorder %s23, 0
      %s318 = scalar_select %p317, %s23, 0
      %s319 = sadd.s32 %s318, %s316
      %s320 = scalar_lea.vmem %s3, %s319
      %p321 = pneg %p142
      %p322 = pneg %p139
      %s323 = smul.u32 32, %s22
      %p324 = scmp.lt.s32.totalorder %s21, 0
      %s325 = scalar_select %p324, %s21, 0
      %p326 = scmp.lt.s32.totalorder %s323, 63
      %s327 = scalar_select %p326, %s323, 63
      %p328 = scmp.lt.s32.totalorder %s23, 0
      %s329 = scalar_select %p328, %s23, 0
      %s330 = sadd.s32 %s329, %s327
      %s331 = smul.addr %s325, 64
      %s332 = sadd.s32 %s330, %s331
      %s333 = smul.addr %s332, 8
      %s334 = scalar_lea.vmem %s4, %s333
      %p335 = pneg %p172
      %p336 = pneg %p169
      %p337 = pneg %p202
      %p338 = pneg %p199
      %s339 = smul.u32 32, %s22
      %p340 = scmp.lt.s32.totalorder %s21, 0
      %s341 = scalar_select %p340, %s21, 0
      %p342 = scmp.lt.s32.totalorder %s339, 63
      %s343 = scalar_select %p342, %s339, 63
      %p344 = scmp.lt.s32.totalorder %s23, 0
      %s345 = scalar_select %p344, %s23, 0
      %s346 = sadd.s32 %s345, %s343
      %s347 = smul.addr %s341, 64
      %s348 = sadd.s32 %s346, %s347
      %s349 = smul.addr %s348, 8
      %s350 = scalar_lea.vmem %s5, %s349
      %s351 = smul.u32 32, %s22
      %p352 = scmp.lt.s32.totalorder %s21, 0
      %s353 = scalar_select %p352, %s21, 0
      %p354 = scmp.lt.s32.totalorder %s351, 63
      %s355 = scalar_select %p354, %s351, 63
      %s356 = smul.addr %s353, 64
      %s357 = sadd.s32 %s355, %s356
      %s358 = smul.addr %s357, 4
      %s359 = scalar_lea.vmem %s0, %s358
      %s360 = smul.u32 32, %s22
      %p361 = scmp.lt.s32.totalorder %s21, 0
      %s362 = scalar_select %p361, %s21, 0
      %p363 = scmp.lt.s32.totalorder %s23, 0
      %s364 = scalar_select %p363, %s23, 0
      %s365 = smul.addr %s362, 16
      %s366 = sadd.s32 %s364, %s365
      %s367 = smul.addr %s366, 4
      %s368 = scalar_lea.vmem %s1, %s367
      %p369 = scmp.lt.s32.totalorder %s21, 0
      %s370 = scalar_select %p369, %s21, 0
      %p371 = scmp.lt.s32.totalorder %s23, 0
      %s372 = scalar_select %p371, %s23, 0
      %s373 = sadd.s32 %s372, %s370
      %s374 = scalar_lea.vmem %s2, %s373
      %p375 = scmp.lt.s32.totalorder %s21, 0
      %s376 = scalar_select %p375, %s21, 0
      %p377 = scmp.lt.s32.totalorder %s23, 0
      %s378 = scalar_select %p377, %s23, 0
      %s379 = sadd.s32 %s378, %s376
      %s380 = scalar_lea.vmem %s3, %s379
      %s381 = smul.u32 32, %s22
      %p382 = scmp.lt.s32.totalorder %s21, 0
      %s383 = scalar_select %p382, %s21, 0
      %p384 = scmp.lt.s32.totalorder %s381, 63
      %s385 = scalar_select %p384, %s381, 63
      %p386 = scmp.lt.s32.totalorder %s23, 0
      %s387 = scalar_select %p386, %s23, 0
      %s388 = sadd.s32 %s387, %s385
      %s389 = smul.addr %s383, 64
      %s390 = sadd.s32 %s388, %s389
      %s391 = smul.addr %s390, 8
      %s392 = scalar_lea.vmem %s4, %s391
      %s393 = smul.u32 32, %s22
      %s394 = smul.u32 32, %s22
      %p395 = scmp.lt.s32.totalorder %s21, 0
      %s396 = scalar_select %p395, %s21, 0
      %p397 = scmp.lt.s32.totalorder %s394, 63
      %s398 = scalar_select %p397, %s394, 63
      %p399 = scmp.lt.s32.totalorder %s23, 0
      %s400 = scalar_select %p399, %s23, 0
      %s401 = sadd.s32 %s400, %s398
      %s402 = smul.addr %s396, 64
      %s403 = sadd.s32 %s401, %s402
      %s404 = smul.addr %s403, 8
      %s405 = scalar_lea.vmem %s5, %s404
      %s406 = smul.u32 32, %s22
      %v407 = vld [vmem:[%s359] sm:$0xf]
      %v408 = vld [vmem:[%s359 + $0x4] sm:$0xf]
      %v409 = vld [vmem:[%s359 + $0x8] sm:$0xf]
      %v410 = vld [vmem:[%s359 + $0xc] sm:$0xf]
      %v411 = vld [vmem:[%s359 + $0x10] sm:$0xf]
      %v412 = vld [vmem:[%s359 + $0x14] sm:$0xf]
      %v413 = vld [vmem:[%s359 + $0x18] sm:$0xf]
      %v414 = vld [vmem:[%s359 + $0x1c] sm:$0xf]
      %v415 = vld [vmem:[%s359 + $0x20] sm:$0xf]
      %v416 = vld [vmem:[%s359 + $0x24] sm:$0xf]
      %v417 = vld [vmem:[%s359 + $0x28] sm:$0xf]
      %v418 = vld [vmem:[%s359 + $0x2c] sm:$0xf]
      %v419 = vld [vmem:[%s359 + $0x30] sm:$0xf]
      %v420 = vld [vmem:[%s359 + $0x34] sm:$0xf]
      %v421 = vld [vmem:[%s359 + $0x38] sm:$0xf]
      %v422 = vld [vmem:[%s359 + $0x3c] sm:$0xf]
      %v423 = vld [vmem:[%s359 + $0x40] sm:$0xf]
      %v424 = vld [vmem:[%s359 + $0x44] sm:$0xf]
      %v425 = vld [vmem:[%s359 + $0x48] sm:$0xf]
      %v426 = vld [vmem:[%s359 + $0x4c] sm:$0xf]
      %v427 = vld [vmem:[%s359 + $0x50] sm:$0xf]
      %v428 = vld [vmem:[%s359 + $0x54] sm:$0xf]
      %v429 = vld [vmem:[%s359 + $0x58] sm:$0xf]
      %v430 = vld [vmem:[%s359 + $0x5c] sm:$0xf]
      %v431 = vld [vmem:[%s359 + $0x60] sm:$0xf]
      %v432 = vld [vmem:[%s359 + $0x64] sm:$0xf]
      %v433 = vld [vmem:[%s359 + $0x68] sm:$0xf]
      %v434 = vld [vmem:[%s359 + $0x6c] sm:$0xf]
      %v435 = vld [vmem:[%s359 + $0x70] sm:$0xf]
      %v436 = vld [vmem:[%s359 + $0x74] sm:$0xf]
      %v437 = vld [vmem:[%s359 + $0x78] sm:$0xf]
      %v438 = vld [vmem:[%s359 + $0x7c] sm:$0xf]
      %v439 = vld [vmem:[%s368] sm:$0xf]
      %v440 = vld [vmem:[%s368 + $0x4] sm:$0xf]
      %v441 = vld [vmem:[%s368 + $0x8] sm:$0xf]
      %v442 = vld [vmem:[%s368 + $0xc] sm:$0xf]
      %v443 = vld [vmem:[%s368 + $0x10] sm:$0xf]
      %v444 = vld [vmem:[%s368 + $0x14] sm:$0xf]
      %v445 = vld [vmem:[%s368 + $0x18] sm:$0xf]
      %v446 = vld [vmem:[%s368 + $0x1c] sm:$0xf]
      %v447 = vld [vmem:[%s368 + $0x20] sm:$0xf]
      %v448 = vld [vmem:[%s368 + $0x24] sm:$0xf]
      %v449 = vld [vmem:[%s368 + $0x28] sm:$0xf]
      %v450 = vld [vmem:[%s368 + $0x2c] sm:$0xf]
      %v451 = vld [vmem:[%s368 + $0x30] sm:$0xf]
      %v452 = vld [vmem:[%s368 + $0x34] sm:$0xf]
      %v453 = vld [vmem:[%s368 + $0x38] sm:$0xf]
      %v454 = vld [vmem:[%s368 + $0x3c] sm:$0xf]
      %v487 = vunpack.c.l.b16 %v407
      %v488 = vunpack.c.l.b16 %v408
      %v489 = vunpack.c.l.b16 %v409
      %v490 = vunpack.c.l.b16 %v410
      %v491 = vunpack.c.l.b16 %v411
      %v492 = vunpack.c.l.b16 %v412
      %v493 = vunpack.c.l.b16 %v413
      %v494 = vunpack.c.l.b16 %v414
      %v495 = vunpack.c.l.b16 %v415
      %v496 = vunpack.c.l.b16 %v416
      %v497 = vunpack.c.l.b16 %v417
      %v498 = vunpack.c.l.b16 %v418
      %v499 = vunpack.c.l.b16 %v419
      %v500 = vunpack.c.l.b16 %v420
      %v501 = vunpack.c.l.b16 %v421
      %v502 = vunpack.c.l.b16 %v422
      %v503 = vunpack.c.l.b16 %v423
      %v504 = vunpack.c.l.b16 %v424
      %v505 = vunpack.c.l.b16 %v425
      %v506 = vunpack.c.l.b16 %v426
      %v507 = vunpack.c.l.b16 %v427
      %v508 = vunpack.c.l.b16 %v428
      %v509 = vunpack.c.l.b16 %v429
      %v510 = vunpack.c.l.b16 %v430
      %v511 = vunpack.c.l.b16 %v431
      %v512 = vunpack.c.l.b16 %v432
      %v513 = vunpack.c.l.b16 %v433
      %v514 = vunpack.c.l.b16 %v434
      %v515 = vunpack.c.l.b16 %v435
      %v516 = vunpack.c.l.b16 %v436
      %v517 = vunpack.c.l.b16 %v437
      %v518 = vunpack.c.l.b16 %v438
      %v519 = vpack.c.b16 %v488, %v487
      %v520 = vpack.c.b16 %v490, %v489
      %v521 = vpack.c.b16 %v492, %v491
      %v522 = vpack.c.b16 %v494, %v493
      %v523 = vpack.c.b16 %v496, %v495
      %v524 = vpack.c.b16 %v498, %v497
      %v525 = vpack.c.b16 %v500, %v499
      %v526 = vpack.c.b16 %v502, %v501
      %v527 = vpack.c.b16 %v504, %v503
      %v528 = vpack.c.b16 %v506, %v505
      %v529 = vpack.c.b16 %v508, %v507
      %v530 = vpack.c.b16 %v510, %v509
      %v531 = vpack.c.b16 %v512, %v511
      %v532 = vpack.c.b16 %v514, %v513
      %v533 = vpack.c.b16 %v516, %v515
      %v534 = vpack.c.b16 %v518, %v517
      %v567 = vunpack.c.l.b16 %v439
      %v568 = vunpack.c.l.b16 %v440
      %v569 = vunpack.c.l.b16 %v441
      %v570 = vunpack.c.l.b16 %v442
      %v571 = vunpack.c.l.b16 %v443
      %v572 = vunpack.c.l.b16 %v444
      %v573 = vunpack.c.l.b16 %v445
      %v574 = vunpack.c.l.b16 %v446
      %v575 = vunpack.c.l.b16 %v447
      %v576 = vunpack.c.l.b16 %v448
      %v577 = vunpack.c.l.b16 %v449
      %v578 = vunpack.c.l.b16 %v450
      %v579 = vunpack.c.l.b16 %v451
      %v580 = vunpack.c.l.b16 %v452
      %v581 = vunpack.c.l.b16 %v453
      %v582 = vunpack.c.l.b16 %v454
      %v583 = vpack.c.b16 %v568, %v567
      %v584 = vpack.c.b16 %v570, %v569
      %v585 = vpack.c.b16 %v572, %v571
      %v586 = vpack.c.b16 %v574, %v573
      %v587 = vpack.c.b16 %v576, %v575
      %v588 = vpack.c.b16 %v578, %v577
      %v589 = vpack.c.b16 %v580, %v579
      %v590 = vpack.c.b16 %v582, %v581
      %599 = vmatpush.bf16.msra.mxu0 %v590
      %600 = vmatpush.bf16.msra.mxu0 %v589
      %601 = vmatpush.bf16.msra.mxu0 %v588
      %602 = vmatpush.bf16.msra.mxu0 %v587
      %603 = vmatpush.bf16.msra.mxu0 %v586
      %604 = vmatpush.bf16.msra.mxu0 %v585
      %605 = vmatpush.bf16.msra.mxu0 %v584
      %606 = vmatpush.bf16.msra.mxu0 %v583
      %607 = vmatmul.bf16.gmra.mxu0 %v519
      %v608 = vpop.f32.mrf.mxu0
      %v609 = vadd.f32 0.0, %v608
      %v610 = vpop.f32.mrf.mxu0
      %v611 = vadd.f32 0.0, %v610
      %612 = vmatmul.bf16.gmra.mxu0 %v520
      %v613 = vpop.f32.mrf.mxu0
      %v614 = vadd.f32 0.0, %v613
      %v615 = vpop.f32.mrf.mxu0
      %v616 = vadd.f32 0.0, %v615
      %617 = vmatmul.bf16.gmra.mxu0 %v521
      %v618 = vpop.f32.mrf.mxu0
      %v619 = vadd.f32 0.0, %v618
      %v620 = vpop.f32.mrf.mxu0
      %v621 = vadd.f32 0.0, %v620
      %622 = vmatmul.bf16.gmra.mxu0 %v522
      %v623 = vpop.f32.mrf.mxu0
      %v624 = vadd.f32 0.0, %v623
      %v625 = vpop.f32.mrf.mxu0
      %v626 = vadd.f32 0.0, %v625
      %627 = vmatmul.bf16.gmra.mxu0 %v523
      %v628 = vpop.f32.mrf.mxu0
      %v629 = vadd.f32 0.0, %v628
      %v630 = vpop.f32.mrf.mxu0
      %v631 = vadd.f32 0.0, %v630
      %632 = vmatmul.bf16.gmra.mxu0 %v524
      %v633 = vpop.f32.mrf.mxu0
      %v634 = vadd.f32 0.0, %v633
      %v635 = vpop.f32.mrf.mxu0
      %v636 = vadd.f32 0.0, %v635
      %637 = vmatmul.bf16.gmra.mxu0 %v525
      %v638 = vpop.f32.mrf.mxu0
      %v639 = vadd.f32 0.0, %v638
      %v640 = vpop.f32.mrf.mxu0
      %v641 = vadd.f32 0.0, %v640
      %642 = vmatmul.bf16.gmra.mxu0 %v526
      %v643 = vpop.f32.mrf.mxu0
      %v644 = vadd.f32 0.0, %v643
      %v645 = vpop.f32.mrf.mxu0
      %v646 = vadd.f32 0.0, %v645
      %647 = vmatmul.bf16.gmra.mxu0 %v527
      %v648 = vpop.f32.mrf.mxu0
      %v649 = vadd.f32 0.0, %v648
      %v650 = vpop.f32.mrf.mxu0
      %v651 = vadd.f32 0.0, %v650
      %652 = vmatmul.bf16.gmra.mxu0 %v528
      %v653 = vpop.f32.mrf.mxu0
      %v654 = vadd.f32 0.0, %v653
      %v655 = vpop.f32.mrf.mxu0
      %v656 = vadd.f32 0.0, %v655
      %657 = vmatmul.bf16.gmra.mxu0 %v529
      %v658 = vpop.f32.mrf.mxu0
      %v659 = vadd.f32 0.0, %v658
      %v660 = vpop.f32.mrf.mxu0
      %v661 = vadd.f32 0.0, %v660
      %662 = vmatmul.bf16.gmra.mxu0 %v530
      %v663 = vpop.f32.mrf.mxu0
      %v664 = vadd.f32 0.0, %v663
      %v665 = vpop.f32.mrf.mxu0
      %v666 = vadd.f32 0.0, %v665
      %667 = vmatmul.bf16.gmra.mxu0 %v531
      %v668 = vpop.f32.mrf.mxu0
      %v669 = vadd.f32 0.0, %v668
      %v670 = vpop.f32.mrf.mxu0
      %v671 = vadd.f32 0.0, %v670
      %672 = vmatmul.bf16.gmra.mxu0 %v532
      %v673 = vpop.f32.mrf.mxu0
      %v674 = vadd.f32 0.0, %v673
      %v675 = vpop.f32.mrf.mxu0
      %v676 = vadd.f32 0.0, %v675
      %677 = vmatmul.bf16.gmra.mxu0 %v533
      %v678 = vpop.f32.mrf.mxu0
      %v679 = vadd.f32 0.0, %v678
      %v680 = vpop.f32.mrf.mxu0
      %v681 = vadd.f32 0.0, %v680
      %682 = vmatmul.bf16.gmra.mxu0 %v534
      %v683 = vpop.f32.mrf.mxu0
      %v684 = vadd.f32 0.0, %v683
      %v685 = vpop.f32.mrf.mxu0
      %v686 = vadd.f32 0.0, %v685
      %687 = vdwg.mxu0
      %v688 = vld [vmem:[%s374] sm:$0x1]
      %v690 = vperm.slane %v688, 0
      %v692 = vmul.f32 %v609, %v690
      %v693 = vmul.f32 %v611, %v690
      %v694 = vmul.f32 %v614, %v690
      %v695 = vmul.f32 %v616, %v690
      %v696 = vmul.f32 %v619, %v690
      %v697 = vmul.f32 %v621, %v690
      %v698 = vmul.f32 %v624, %v690
      %v699 = vmul.f32 %v626, %v690
      %v700 = vmul.f32 %v629, %v690
      %v701 = vmul.f32 %v631, %v690
      %v702 = vmul.f32 %v634, %v690
      %v703 = vmul.f32 %v636, %v690
      %v704 = vmul.f32 %v639, %v690
      %v705 = vmul.f32 %v641, %v690
      %v706 = vmul.f32 %v644, %v690
      %v707 = vmul.f32 %v646, %v690
      %v708 = vmul.f32 %v649, %v690
      %v709 = vmul.f32 %v651, %v690
      %v710 = vmul.f32 %v654, %v690
      %v711 = vmul.f32 %v656, %v690
      %v712 = vmul.f32 %v659, %v690
      %v713 = vmul.f32 %v661, %v690
      %v714 = vmul.f32 %v664, %v690
      %v715 = vmul.f32 %v666, %v690
      %v716 = vmul.f32 %v669, %v690
      %v717 = vmul.f32 %v671, %v690
      %v718 = vmul.f32 %v674, %v690
      %v719 = vmul.f32 %v676, %v690
      %v720 = vmul.f32 %v679, %v690
      %v721 = vmul.f32 %v681, %v690
      %v722 = vmul.f32 %v684, %v690
      %v723 = vmul.f32 %v686, %v690
      %v724 = vld [vmem:[%s380] sm:$0x1]
      %v726 = vperm.slane %v724, 0
      %v728 = vadd.f32 %v692, %v726
      %v729 = vadd.f32 %v693, %v726
      %v730 = vadd.f32 %v694, %v726
      %v731 = vadd.f32 %v695, %v726
      %v732 = vadd.f32 %v696, %v726
      %v733 = vadd.f32 %v697, %v726
      %v734 = vadd.f32 %v698, %v726
      %v735 = vadd.f32 %v699, %v726
      %v736 = vadd.f32 %v700, %v726
      %v737 = vadd.f32 %v701, %v726
      %v738 = vadd.f32 %v702, %v726
      %v739 = vadd.f32 %v703, %v726
      %v740 = vadd.f32 %v704, %v726
      %v741 = vadd.f32 %v705, %v726
      %v742 = vadd.f32 %v706, %v726
      %v743 = vadd.f32 %v707, %v726
      %v744 = vadd.f32 %v708, %v726
      %v745 = vadd.f32 %v709, %v726
      %v746 = vadd.f32 %v710, %v726
      %v747 = vadd.f32 %v711, %v726
      %v748 = vadd.f32 %v712, %v726
      %v749 = vadd.f32 %v713, %v726
      %v750 = vadd.f32 %v714, %v726
      %v751 = vadd.f32 %v715, %v726
      %v752 = vadd.f32 %v716, %v726
      %v753 = vadd.f32 %v717, %v726
      %v754 = vadd.f32 %v718, %v726
      %v755 = vadd.f32 %v719, %v726
      %v756 = vadd.f32 %v720, %v726
      %v757 = vadd.f32 %v721, %v726
      %v758 = vadd.f32 %v722, %v726
      %v759 = vadd.f32 %v723, %v726
      %v760 = vld [vmem:[%s392] sm:$0xff]
      %v761 = vld [vmem:[%s392 + $0x8] sm:$0xff]
      %v762 = vld [vmem:[%s392 + $0x10] sm:$0xff]
      %v763 = vld [vmem:[%s392 + $0x18] sm:$0xff]
      %v764 = vld [vmem:[%s392 + $0x20] sm:$0xff]
      %v765 = vld [vmem:[%s392 + $0x28] sm:$0xff]
      %v766 = vld [vmem:[%s392 + $0x30] sm:$0xff]
      %v767 = vld [vmem:[%s392 + $0x38] sm:$0xff]
      %v768 = vld [vmem:[%s392 + $0x40] sm:$0xff]
      %v769 = vld [vmem:[%s392 + $0x48] sm:$0xff]
      %v770 = vld [vmem:[%s392 + $0x50] sm:$0xff]
      %v771 = vld [vmem:[%s392 + $0x58] sm:$0xff]
      %v772 = vld [vmem:[%s392 + $0x60] sm:$0xff]
      %v773 = vld [vmem:[%s392 + $0x68] sm:$0xff]
      %v774 = vld [vmem:[%s392 + $0x70] sm:$0xff]
      %v775 = vld [vmem:[%s392 + $0x78] sm:$0xff]
      %v776 = vld [vmem:[%s392 + $0x80] sm:$0xff]
      %v777 = vld [vmem:[%s392 + $0x88] sm:$0xff]
      %v778 = vld [vmem:[%s392 + $0x90] sm:$0xff]
      %v779 = vld [vmem:[%s392 + $0x98] sm:$0xff]
      %v780 = vld [vmem:[%s392 + $0xa0] sm:$0xff]
      %v781 = vld [vmem:[%s392 + $0xa8] sm:$0xff]
      %v782 = vld [vmem:[%s392 + $0xb0] sm:$0xff]
      %v783 = vld [vmem:[%s392 + $0xb8] sm:$0xff]
      %v784 = vld [vmem:[%s392 + $0xc0] sm:$0xff]
      %v785 = vld [vmem:[%s392 + $0xc8] sm:$0xff]
      %v786 = vld [vmem:[%s392 + $0xd0] sm:$0xff]
      %v787 = vld [vmem:[%s392 + $0xd8] sm:$0xff]
      %v788 = vld [vmem:[%s392 + $0xe0] sm:$0xff]
      %v789 = vld [vmem:[%s392 + $0xe8] sm:$0xff]
      %v790 = vld [vmem:[%s392 + $0xf0] sm:$0xff]
      %v791 = vld [vmem:[%s392 + $0xf8] sm:$0xff]
      %v792 = vadd.f32 %v728, %v760
      %v793 = vadd.f32 %v729, %v761
      %v794 = vadd.f32 %v730, %v762
      %v795 = vadd.f32 %v731, %v763
      %v796 = vadd.f32 %v732, %v764
      %v797 = vadd.f32 %v733, %v765
      %v798 = vadd.f32 %v734, %v766
      %v799 = vadd.f32 %v735, %v767
      %v800 = vadd.f32 %v736, %v768
      %v801 = vadd.f32 %v737, %v769
      %v802 = vadd.f32 %v738, %v770
      %v803 = vadd.f32 %v739, %v771
      %v804 = vadd.f32 %v740, %v772
      %v805 = vadd.f32 %v741, %v773
      %v806 = vadd.f32 %v742, %v774
      %v807 = vadd.f32 %v743, %v775
      %v808 = vadd.f32 %v744, %v776
      %v809 = vadd.f32 %v745, %v777
      %v810 = vadd.f32 %v746, %v778
      %v811 = vadd.f32 %v747, %v779
      %v812 = vadd.f32 %v748, %v780
      %v813 = vadd.f32 %v749, %v781
      %v814 = vadd.f32 %v750, %v782
      %v815 = vadd.f32 %v751, %v783
      %v816 = vadd.f32 %v752, %v784
      %v817 = vadd.f32 %v753, %v785
      %v818 = vadd.f32 %v754, %v786
      %v819 = vadd.f32 %v755, %v787
      %v820 = vadd.f32 %v756, %v788
      %v821 = vadd.f32 %v757, %v789
      %v822 = vadd.f32 %v758, %v790
      %v823 = vadd.f32 %v759, %v791
      %v824 = vmax.f32 %v792, 0.0
      %v825 = vmax.f32 %v793, 0.0
      %v826 = vmax.f32 %v794, 0.0
      %v827 = vmax.f32 %v795, 0.0
      %v828 = vmax.f32 %v796, 0.0
      %v829 = vmax.f32 %v797, 0.0
      %v830 = vmax.f32 %v798, 0.0
      %v831 = vmax.f32 %v799, 0.0
      %v832 = vmax.f32 %v800, 0.0
      %v833 = vmax.f32 %v801, 0.0
      %v834 = vmax.f32 %v802, 0.0
      %v835 = vmax.f32 %v803, 0.0
      %v836 = vmax.f32 %v804, 0.0
      %v837 = vmax.f32 %v805, 0.0
      %v838 = vmax.f32 %v806, 0.0
      %v839 = vmax.f32 %v807, 0.0
      %v840 = vmax.f32 %v808, 0.0
      %v841 = vmax.f32 %v809, 0.0
      %v842 = vmax.f32 %v810, 0.0
      %v843 = vmax.f32 %v811, 0.0
      %v844 = vmax.f32 %v812, 0.0
      %v845 = vmax.f32 %v813, 0.0
      %v846 = vmax.f32 %v814, 0.0
      %v847 = vmax.f32 %v815, 0.0
      %v848 = vmax.f32 %v816, 0.0
      %v849 = vmax.f32 %v817, 0.0
      %v850 = vmax.f32 %v818, 0.0
      %v851 = vmax.f32 %v819, 0.0
      %v852 = vmax.f32 %v820, 0.0
      %v853 = vmax.f32 %v821, 0.0
      %v854 = vmax.f32 %v822, 0.0
      %v855 = vmax.f32 %v823, 0.0
      %856 = vst [vmem:[%s405] sm:$0xff] %v824
      %857 = vst [vmem:[%s405 + $0x8] sm:$0xff] %v825
      %858 = vst [vmem:[%s405 + $0x10] sm:$0xff] %v826
      %859 = vst [vmem:[%s405 + $0x18] sm:$0xff] %v827
      %860 = vst [vmem:[%s405 + $0x20] sm:$0xff] %v828
      %861 = vst [vmem:[%s405 + $0x28] sm:$0xff] %v829
      %862 = vst [vmem:[%s405 + $0x30] sm:$0xff] %v830
      %863 = vst [vmem:[%s405 + $0x38] sm:$0xff] %v831
      %864 = vst [vmem:[%s405 + $0x40] sm:$0xff] %v832
      %865 = vst [vmem:[%s405 + $0x48] sm:$0xff] %v833
      %866 = vst [vmem:[%s405 + $0x50] sm:$0xff] %v834
      %867 = vst [vmem:[%s405 + $0x58] sm:$0xff] %v835
      %868 = vst [vmem:[%s405 + $0x60] sm:$0xff] %v836
      %869 = vst [vmem:[%s405 + $0x68] sm:$0xff] %v837
      %870 = vst [vmem:[%s405 + $0x70] sm:$0xff] %v838
      %871 = vst [vmem:[%s405 + $0x78] sm:$0xff] %v839
      %872 = vst [vmem:[%s405 + $0x80] sm:$0xff] %v840
      %873 = vst [vmem:[%s405 + $0x88] sm:$0xff] %v841
      %874 = vst [vmem:[%s405 + $0x90] sm:$0xff] %v842
      %875 = vst [vmem:[%s405 + $0x98] sm:$0xff] %v843
      %876 = vst [vmem:[%s405 + $0xa0] sm:$0xff] %v844
      %877 = vst [vmem:[%s405 + $0xa8] sm:$0xff] %v845
      %878 = vst [vmem:[%s405 + $0xb0] sm:$0xff] %v846
      %879 = vst [vmem:[%s405 + $0xb8] sm:$0xff] %v847
      %880 = vst [vmem:[%s405 + $0xc0] sm:$0xff] %v848
      %881 = vst [vmem:[%s405 + $0xc8] sm:$0xff] %v849
      %882 = vst [vmem:[%s405 + $0xd0] sm:$0xff] %v850
      %883 = vst [vmem:[%s405 + $0xd8] sm:$0xff] %v851
      %884 = vst [vmem:[%s405 + $0xe0] sm:$0xff] %v852
      %885 = vst [vmem:[%s405 + $0xe8] sm:$0xff] %v853
      %886 = vst [vmem:[%s405 + $0xf0] sm:$0xff] %v854
      %887 = vst [vmem:[%s405 + $0xf8] sm:$0xff] %v855
      %s888 = smul.u32 32, %s22
      %p889 = scmp.lt.s32.totalorder %s21, 0
      %s890 = scalar_select %p889, %s21, 0
      %p891 = scmp.lt.s32.totalorder %s888, 63
      %s892 = scalar_select %p891, %s888, 63
      %p893 = scmp.lt.s32.totalorder %s23, 0
      %s894 = scalar_select %p893, %s23, 0
      %s895 = sadd.s32 %s894, %s892
      %s896 = smul.addr %s890, 64
      %s897 = sadd.s32 %s895, %s896
      %s898 = smul.addr %s897, 8
      %s899 = scalar_lea.vmem %s5, %s898
      // Predicated region
      $region41: #{run.9} parent=39 // pred_check
        %p900 = pneg %p199
      $region42: #{run.9} parent=39 // pred_check_branch
        %902 = sbr.rel (%p900) target = $region44
      $region43: #{run.9} parent=39 // pred_region
        %s903 = smul.u32 32, %s22
      $region44: #{run.9} parent=39 // pred_fallthru
        _
    $region40: #{run.9} parent=5 // pred_fallthru
      _
    %p904 = scmp.le.s32.totalorder 2, %s11
    // Predicated region
    $region45: #{run.9} parent=5 // pred_check
      %p905 = pneg %p904
    $region46: #{run.9} parent=5 // pred_check_branch
      %907 = sbr.rel (%p905) target = $region48
    $region47: #{run.9} parent=5 // pred_region
      %s908 = ssub.s32 %s11, 2
      // Predicated region
      $region49: #{run.9} parent=47 // pred_check
        %p909 = pneg %p205
      $region50: #{run.9} parent=47 // pred_check_branch
        %911 = sbr.rel (%p909) target = $region52
      $region51: #{run.9} parent=47 // pred_region
        %s912 = smul.u32 32, %s25
        %p913 = scmp.lt.s32.totalorder %s24, 0
        %s914 = scalar_select %p913, %s24, 0
        %p915 = scmp.lt.s32.totalorder %s912, 63
        %s916 = scalar_select %p915, %s912, 63
        %p917 = scmp.lt.s32.totalorder %s26, 0
        %s918 = scalar_select %p917, %s26, 0
        %s919 = sadd.s32 %s918, %s916
        %s920 = smul.addr %s914, 64
        %s921 = sadd.s32 %s919, %s920
        %s922 = smul.addr %s921, 8
        %s923 = scalar_lea.vmem %s5, %s922
      $region52: #{run.9} parent=47 // pred_fallthru
        _
    $region48: #{run.9} parent=5 // pred_fallthru
      _
  $region6: #{run.9} parent=0 // loop_footer
    %s15 = sadd.s32 1, %s11
  $region7: #{run.9} parent=0 // loop_footer_branch
    %10 = sbr.rel target = $region3
  $region8: #{run.9} parent=0 // loop_exit
    _

// kernel: run.10
$region0: #{run.10}
  #allocation0 [shape = 'u32[]', space=smem, size = 0x4, offset = 0x4, fixed_abs, tag = 'smem constant byte address 0x4 - core index']
  #allocation1 [shape = 'u32[72,128]{1,0:T(1,128)}', space=vmem, size = 0x9000, scoped, tag = 'internal scratch']
  %s0 = inlined_call_operand.vmem [shape: bf16[1,512,128], index: 0, kind: input, shape index: {}]
  %s1 = inlined_call_operand.vmem [shape: bf16[1,128,128], index: 1, kind: input, shape index: {}]
  %s2 = inlined_call_operand.vmem [shape: f32[1,1,128], index: 2, kind: input, shape index: {}]
  %s3 = inlined_call_operand.vmem [shape: f32[1,1,128], index: 3, kind: input, shape index: {}]
  %s4 = inlined_call_operand.vmem [shape: f32[1,512,128], index: 4, kind: output, shape index: {}]
  %s5 = sld [smem:[#allocation0]]
  $region49: #{run.10} parent=0
    _
  %s7 = ssub.s32 1, %s5
  %s8 = scalar_select 0, %s7, %s5
  loop: start=0, step=1, limit=4
  $region2: #{run.10} parent=0 // loop_pre_header
    _
  $region3: #{run.10} parent=0 // loop_header
    %s10 = sphi 0, %s14
    %p11 = scmp.ge.s32.totalorder %s10, 4
    %s17 = sphi 0, %s36
    %s18 = sphi 0, %s32
    %s19 = sphi 0, %s28
    %s20 = sphi 0, %s17
    %s21 = sphi 0, %s18
    %s22 = sphi 0, %s19
    %s23 = sphi 0, %s20
    %s24 = sphi 0, %s21
    %s25 = sphi 0, %s22
    %s41 = sphi 0, %s43
    %s44 = sphi 0, %s41
    %s45 = sphi 0, %s44
    %s61 = sphi 0, %s45
    %s69 = sphi 0, %s71
    %s72 = sphi 0, %s69
    %s73 = sphi 0, %s72
    %s89 = sphi 0, %s73
    %s97 = sphi 0, %s99
    %s100 = sphi 0, %s97
    %s101 = sphi 0, %s100
    %s117 = sphi 0, %s101
    %s125 = sphi 0, %s127
    %s128 = sphi 0, %s125
    %s129 = sphi 0, %s128
    %s145 = sphi 0, %s129
    %s155 = sphi 0, %s157
    %s158 = sphi 0, %s155
    %s159 = sphi 0, %s158
    %s175 = sphi 0, %s159
  $region4: #{run.10} parent=0 // loop_header_branch
    %13 = sbr.rel (%p11) target = $region8
  $region5: #{run.10} parent=0 // loop_body
    %s15 = ssub.s32 %s10, 1
    %s16 = ssub.s32 %s10, 2
    %s26 = sadd.s32 1, %s19
    %p27 = scmp.ge.s32.totalorder %s26, 1
    %s28 = scalar_select %p27, 0, %s26
    %s29 = sadd.s32 1, %s18
    %s30 = scalar_select %p27, %s29, %s18
    %p31 = scmp.ge.s32.totalorder %s30, 2
    %s32 = scalar_select %p31, 0, %s30
    %s33 = sadd.s32 1, %s17
    %s34 = scalar_select %p31, %s33, %s17
    %p35 = scmp.ge.s32.totalorder %s34, 1
    %s36 = scalar_select %p35, 0, %s34
    %s37 = ssub.s32 %s17, %s36
    %s38 = ssub.s32 %s18, %s32
    %s39 = sor.u32 %s37, %s38
    %p40 = scmp.eq.s32.totalorder %s39, 0
    %s42 = sadd.s32 %s41, 1
    %s43 = scalar_select %p40, %s41, %s42
    %p46 = pneg %p40
    %p47 = scmp.eq.s32.totalorder %s10, 1
    %p48 = por %p46, %p47
    %p49 = scmp.ne.s32.totalorder %s41, %s44
    %p50 = scmp.eq.s32.totalorder %s10, 0
    %p51 = por %p49, %p50
    %p52 = scmp.ne.s32.totalorder %s41, %s44
    %p53 = scmp.eq.s32.totalorder %s15, 1
    %p54 = por %p52, %p53
    %p55 = scmp.ne.s32.totalorder %s44, %s45
    %p56 = scmp.eq.s32.totalorder %s15, 0
    %p57 = por %p55, %p56
    %p58 = scmp.ne.s32.totalorder %s44, %s45
    %p59 = scmp.eq.s32.totalorder %s16, 1
    %p60 = por %p58, %p59
    %p62 = scmp.ne.s32.totalorder %s45, %s61
    %p63 = scmp.eq.s32.totalorder %s16, 0
    %p64 = por %p62, %p63
    %s65 = ssub.s32 %s17, %s36
    %s66 = ssub.s32 %s19, %s28
    %s67 = sor.u32 %s65, %s66
    %p68 = scmp.eq.s32.totalorder %s67, 0
    %s70 = sadd.s32 %s69, 1
    %s71 = scalar_select %p68, %s69, %s70
    %p74 = pneg %p68
    %p75 = scmp.eq.s32.totalorder %s10, 1
    %p76 = por %p74, %p75
    %p77 = scmp.ne.s32.totalorder %s69, %s72
    %p78 = scmp.eq.s32.totalorder %s10, 0
    %p79 = por %p77, %p78
    %p80 = scmp.ne.s32.totalorder %s69, %s72
    %p81 = scmp.eq.s32.totalorder %s15, 1
    %p82 = por %p80, %p81
    %p83 = scmp.ne.s32.totalorder %s72, %s73
    %p84 = scmp.eq.s32.totalorder %s15, 0
    %p85 = por %p83, %p84
    %p86 = scmp.ne.s32.totalorder %s72, %s73
    %p87 = scmp.eq.s32.totalorder %s16, 1
    %p88 = por %p86, %p87
    %p90 = scmp.ne.s32.totalorder %s73, %s89
    %p91 = scmp.eq.s32.totalorder %s16, 0
    %p92 = por %p90, %p91
    %s93 = ssub.s32 %s17, %s36
    %s94 = ssub.s32 %s19, %s28
    %s95 = sor.u32 %s93, %s94
    %p96 = scmp.eq.s32.totalorder %s95, 0
    %s98 = sadd.s32 %s97, 1
    %s99 = scalar_select %p96, %s97, %s98
    %p102 = pneg %p96
    %p103 = scmp.eq.s32.totalorder %s10, 1
    %p104 = por %p102, %p103
    %p105 = scmp.ne.s32.totalorder %s97, %s100
    %p106 = scmp.eq.s32.totalorder %s10, 0
    %p107 = por %p105, %p106
    %p108 = scmp.ne.s32.totalorder %s97, %s100
    %p109 = scmp.eq.s32.totalorder %s15, 1
    %p110 = por %p108, %p109
    %p111 = scmp.ne.s32.totalorder %s100, %s101
    %p112 = scmp.eq.s32.totalorder %s15, 0
    %p113 = por %p111, %p112
    %p114 = scmp.ne.s32.totalorder %s100, %s101
    %p115 = scmp.eq.s32.totalorder %s16, 1
    %p116 = por %p114, %p115
    %p118 = scmp.ne.s32.totalorder %s101, %s117
    %p119 = scmp.eq.s32.totalorder %s16, 0
    %p120 = por %p118, %p119
    %s121 = ssub.s32 %s17, %s36
    %s122 = ssub.s32 %s19, %s28
    %s123 = sor.u32 %s121, %s122
    %p124 = scmp.eq.s32.totalorder %s123, 0
    %s126 = sadd.s32 %s125, 1
    %s127 = scalar_select %p124, %s125, %s126
    %p130 = pneg %p124
    %p131 = scmp.eq.s32.totalorder %s10, 1
    %p132 = por %p130, %p131
    %p133 = scmp.ne.s32.totalorder %s125, %s128
    %p134 = scmp.eq.s32.totalorder %s10, 0
    %p135 = por %p133, %p134
    %p136 = scmp.ne.s32.totalorder %s125, %s128
    %p137 = scmp.eq.s32.totalorder %s15, 1
    %p138 = por %p136, %p137
    %p139 = scmp.ne.s32.totalorder %s128, %s129
    %p140 = scmp.eq.s32.totalorder %s15, 0
    %p141 = por %p139, %p140
    %p142 = scmp.ne.s32.totalorder %s128, %s129
    %p143 = scmp.eq.s32.totalorder %s16, 1
    %p144 = por %p142, %p143
    %p146 = scmp.ne.s32.totalorder %s129, %s145
    %p147 = scmp.eq.s32.totalorder %s16, 0
    %p148 = por %p146, %p147
    %s149 = ssub.s32 %s17, %s36
    %s150 = ssub.s32 %s18, %s32
    %s151 = sor.u32 %s149, %s150
    %s152 = ssub.s32 %s19, %s28
    %s153 = sor.u32 %s151, %s152
    %p154 = scmp.eq.s32.totalorder %s153, 0
    %s156 = sadd.s32 %s155, 1
    %s157 = scalar_select %p154, %s155, %s156
    %p160 = pneg %p154
    %p161 = scmp.eq.s32.totalorder %s10, 1
    %p162 = por %p160, %p161
    %p163 = scmp.ne.s32.totalorder %s155, %s158
    %p164 = scmp.eq.s32.totalorder %s10, 0
    %p165 = por %p163, %p164
    %p166 = scmp.ne.s32.totalorder %s155, %s158
    %p167 = scmp.eq.s32.totalorder %s15, 1
    %p168 = por %p166, %p167
    %p169 = scmp.ne.s32.totalorder %s158, %s159
    %p170 = scmp.eq.s32.totalorder %s15, 0
    %p171 = por %p169, %p170
    %p172 = scmp.ne.s32.totalorder %s158, %s159
    %p173 = scmp.eq.s32.totalorder %s16, 1
    %p174 = por %p172, %p173
    %p176 = scmp.ne.s32.totalorder %s159, %s175
    %p177 = scmp.eq.s32.totalorder %s16, 0
    %p178 = por %p176, %p177
    %p179 = scmp.le.s32.totalorder 1, %s10
    %p180 = scmp.lt.s32.totalorder %s10, 3
    %p181 = pnand %p179, %p180
    %p182 = pneg %p181
    // Predicated region
    $region9: #{run.10} parent=5 // pred_check
      _
    $region10: #{run.10} parent=5 // pred_check_branch
      %184 = sbr.rel (%p181) target = $region12
    $region11: #{run.10} parent=5 // pred_region
      %s185 = ssub.s32 %s10, 1
      // Predicated region
      $region13: #{run.10} parent=11 // pred_check
        %p186 = pneg %p85
      $region14: #{run.10} parent=11 // pred_check_branch
        %188 = sbr.rel (%p186) target = $region16
      $region15: #{run.10} parent=11 // pred_region
        %p189 = scmp.lt.s32.totalorder %s20, 0
        %s190 = scalar_select %p189, %s20, 0
        %p191 = scmp.lt.s32.totalorder %s22, 0
        %s192 = scalar_select %p191, %s22, 0
        %s193 = smul.addr %s190, 16
        %s194 = sadd.s32 %s192, %s193
        %s195 = smul.addr %s194, 4
        %s196 = scalar_lea.vmem %s1, %s195
      $region16: #{run.10} parent=11 // pred_fallthru
        _
      // Predicated region
      $region17: #{run.10} parent=11 // pred_check
        %p197 = pneg %p113
      $region18: #{run.10} parent=11 // pred_check_branch
        %199 = sbr.rel (%p197) target = $region20
      $region19: #{run.10} parent=11 // pred_region
        %p200 = scmp.lt.s32.totalorder %s20, 0
        %s201 = scalar_select %p200, %s20, 0
        %p202 = scmp.lt.s32.totalorder %s22, 0
        %s203 = scalar_select %p202, %s22, 0
        %s204 = sadd.s32 %s203, %s201
        %s205 = scalar_lea.vmem %s2, %s204
      $region20: #{run.10} parent=11 // pred_fallthru
        _
      // Predicated region
      $region21: #{run.10} parent=11 // pred_check
        %p206 = pneg %p141
      $region22: #{run.10} parent=11 // pred_check_branch
        %208 = sbr.rel (%p206) target = $region24
      $region23: #{run.10} parent=11 // pred_region
        %p209 = scmp.lt.s32.totalorder %s20, 0
        %s210 = scalar_select %p209, %s20, 0
        %p211 = scmp.lt.s32.totalorder %s22, 0
        %s212 = scalar_select %p211, %s22, 0
        %s213 = sadd.s32 %s212, %s210
        %s214 = scalar_lea.vmem %s3, %s213
      $region24: #{run.10} parent=11 // pred_fallthru
        _
    $region12: #{run.10} parent=5 // pred_fallthru
      _
    %p215 = scmp.lt.s32.totalorder %s10, 2
    // Predicated region
    $region25: #{run.10} parent=5 // pred_check
      %p216 = pneg %p215
    $region26: #{run.10} parent=5 // pred_check_branch
      %218 = sbr.rel (%p216) target = $region28
    $region27: #{run.10} parent=5 // pred_region
      // Predicated region
      $region29: #{run.10} parent=27 // pred_check
        %p219 = pneg %p51
      $region30: #{run.10} parent=27 // pred_check_branch
        %221 = sbr.rel (%p219) target = $region32
      $region31: #{run.10} parent=27 // pred_region
        %s222 = smul.u32 32, %s18
        %p223 = scmp.lt.s32.totalorder %s17, 0
        %s224 = scalar_select %p223, %s17, 0
        %p225 = scmp.lt.s32.totalorder %s222, 63
        %s226 = scalar_select %p225, %s222, 63
        %s227 = smul.addr %s224, 64
        %s228 = sadd.s32 %s226, %s227
        %s229 = smul.addr %s228, 4
        %s230 = scalar_lea.vmem %s0, %s229
        %s231 = smul.u32 32, %s18
      $region32: #{run.10} parent=27 // pred_fallthru
        _
    $region28: #{run.10} parent=5 // pred_fallthru
      _
    %p232 = scmp.le.s32.totalorder 1, %s10
    %p233 = scmp.lt.s32.totalorder %s10, 3
    %p234 = pnand %p232, %p233
    %p235 = pneg %p234
    // Predicated region
    $region33: #{run.10} parent=5 // pred_check
      _
    $region34: #{run.10} parent=5 // pred_check_branch
      %237 = sbr.rel (%p234) target = $region36
    $region35: #{run.10} parent=5 // pred_region
      %s238 = ssub.s32 %s10, 1
      %s239 = smul.u32 32, %s21
      %p240 = scmp.lt.s32.totalorder %s20, 0
      %s241 = scalar_select %p240, %s20, 0
      %p242 = scmp.lt.s32.totalorder %s239, 63
      %s243 = scalar_select %p242, %s239, 63
      %s244 = smul.addr %s241, 64
      %s245 = sadd.s32 %s243, %s244
      %s246 = smul.addr %s245, 4
      %s247 = scalar_lea.vmem %s0, %s246
      %p248 = pneg %p57
      %p249 = pneg %p54
      %p250 = scmp.lt.s32.totalorder %s20, 0
      %s251 = scalar_select %p250, %s20, 0
      %p252 = scmp.lt.s32.totalorder %s22, 0
      %s253 = scalar_select %p252, %s22, 0
      %s254 = smul.addr %s251, 16
      %s255 = sadd.s32 %s253, %s254
      %s256 = smul.addr %s255, 4
      %s257 = scalar_lea.vmem %s1, %s256
      %p258 = pneg %p85
      %p259 = pneg %p82
      %p260 = scmp.lt.s32.totalorder %s20, 0
      %s261 = scalar_select %p260, %s20, 0
      %p262 = scmp.lt.s32.totalorder %s22, 0
      %s263 = scalar_select %p262, %s22, 0
      %s264 = sadd.s32 %s263, %s261
      %s265 = scalar_lea.vmem %s2, %s264
      %p266 = pneg %p113
      %p267 = pneg %p110
      %p268 = scmp.lt.s32.totalorder %s20, 0
      %s269 = scalar_select %p268, %s20, 0
      %p270 = scmp.lt.s32.totalorder %s22, 0
      %s271 = scalar_select %p270, %s22, 0
      %s272 = sadd.s32 %s271, %s269
      %s273 = scalar_lea.vmem %s3, %s272
      %p274 = pneg %p141
      %p275 = pneg %p138
      %p276 = pneg %p171
      %p277 = pneg %p168
      %s278 = smul.u32 32, %s21
      %p279 = scmp.lt.s32.totalorder %s20, 0
      %s280 = scalar_select %p279, %s20, 0
      %p281 = scmp.lt.s32.totalorder %s278, 63
      %s282 = scalar_select %p281, %s278, 63
      %p283 = scmp.lt.s32.totalorder %s22, 0
      %s284 = scalar_select %p283, %s22, 0
      %s285 = sadd.s32 %s284, %s282
      %s286 = smul.addr %s280, 64
      %s287 = sadd.s32 %s285, %s286
      %s288 = smul.addr %s287, 8
      %s289 = scalar_lea.vmem %s4, %s288
      %s290 = smul.u32 32, %s21
      %p291 = scmp.lt.s32.totalorder %s20, 0
      %s292 = scalar_select %p291, %s20, 0
      %p293 = scmp.lt.s32.totalorder %s290, 63
      %s294 = scalar_select %p293, %s290, 63
      %s295 = smul.addr %s292, 64
      %s296 = sadd.s32 %s294, %s295
      %s297 = smul.addr %s296, 4
      %s298 = scalar_lea.vmem %s0, %s297
      %s299 = smul.u32 32, %s21
      %p300 = scmp.lt.s32.totalorder %s20, 0
      %s301 = scalar_select %p300, %s20, 0
      %p302 = scmp.lt.s32.totalorder %s22, 0
      %s303 = scalar_select %p302, %s22, 0
      %s304 = smul.addr %s301, 16
      %s305 = sadd.s32 %s303, %s304
      %s306 = smul.addr %s305, 4
      %s307 = scalar_lea.vmem %s1, %s306
      %p308 = scmp.lt.s32.totalorder %s20, 0
      %s309 = scalar_select %p308, %s20, 0
      %p310 = scmp.lt.s32.totalorder %s22, 0
      %s311 = scalar_select %p310, %s22, 0
      %s312 = sadd.s32 %s311, %s309
      %s313 = scalar_lea.vmem %s2, %s312
      %p314 = scmp.lt.s32.totalorder %s20, 0
      %s315 = scalar_select %p314, %s20, 0
      %p316 = scmp.lt.s32.totalorder %s22, 0
      %s317 = scalar_select %p316, %s22, 0
      %s318 = sadd.s32 %s317, %s315
      %s319 = scalar_lea.vmem %s3, %s318
      %s320 = smul.u32 32, %s21
      %p321 = scmp.lt.s32.totalorder %s20, 0
      %s322 = scalar_select %p321, %s20, 0
      %p323 = scmp.lt.s32.totalorder %s320, 63
      %s324 = scalar_select %p323, %s320, 63
      %p325 = scmp.lt.s32.totalorder %s22, 0
      %s326 = scalar_select %p325, %s22, 0
      %s327 = sadd.s32 %s326, %s324
      %s328 = smul.addr %s322, 64
      %s329 = sadd.s32 %s327, %s328
      %s330 = smul.addr %s329, 8
      %s331 = scalar_lea.vmem %s4, %s330
      %s332 = smul.u32 32, %s21
      %v333 = vld [vmem:[%s298] sm:$0xf]
      %v334 = vld [vmem:[%s298 + $0x4] sm:$0xf]
      %v335 = vld [vmem:[%s298 + $0x8] sm:$0xf]
      %v336 = vld [vmem:[%s298 + $0xc] sm:$0xf]
      %v337 = vld [vmem:[%s298 + $0x10] sm:$0xf]
      %v338 = vld [vmem:[%s298 + $0x14] sm:$0xf]
      %v339 = vld [vmem:[%s298 + $0x18] sm:$0xf]
      %v340 = vld [vmem:[%s298 + $0x1c] sm:$0xf]
      %v341 = vld [vmem:[%s298 + $0x20] sm:$0xf]
      %v342 = vld [vmem:[%s298 + $0x24] sm:$0xf]
      %v343 = vld [vmem:[%s298 + $0x28] sm:$0xf]
      %v344 = vld [vmem:[%s298 + $0x2c] sm:$0xf]
      %v345 = vld [vmem:[%s298 + $0x30] sm:$0xf]
      %v346 = vld [vmem:[%s298 + $0x34] sm:$0xf]
      %v347 = vld [vmem:[%s298 + $0x38] sm:$0xf]
      %v348 = vld [vmem:[%s298 + $0x3c] sm:$0xf]
      %v349 = vld [vmem:[%s298 + $0x40] sm:$0xf]
      %v350 = vld [vmem:[%s298 + $0x44] sm:$0xf]
      %v351 = vld [vmem:[%s298 + $0x48] sm:$0xf]
      %v352 = vld [vmem:[%s298 + $0x4c] sm:$0xf]
      %v353 = vld [vmem:[%s298 + $0x50] sm:$0xf]
      %v354 = vld [vmem:[%s298 + $0x54] sm:$0xf]
      %v355 = vld [vmem:[%s298 + $0x58] sm:$0xf]
      %v356 = vld [vmem:[%s298 + $0x5c] sm:$0xf]
      %v357 = vld [vmem:[%s298 + $0x60] sm:$0xf]
      %v358 = vld [vmem:[%s298 + $0x64] sm:$0xf]
      %v359 = vld [vmem:[%s298 + $0x68] sm:$0xf]
      %v360 = vld [vmem:[%s298 + $0x6c] sm:$0xf]
      %v361 = vld [vmem:[%s298 + $0x70] sm:$0xf]
      %v362 = vld [vmem:[%s298 + $0x74] sm:$0xf]
      %v363 = vld [vmem:[%s298 + $0x78] sm:$0xf]
      %v364 = vld [vmem:[%s298 + $0x7c] sm:$0xf]
      %v365 = vld [vmem:[%s307] sm:$0xf]
      %v366 = vld [vmem:[%s307 + $0x4] sm:$0xf]
      %v367 = vld [vmem:[%s307 + $0x8] sm:$0xf]
      %v368 = vld [vmem:[%s307 + $0xc] sm:$0xf]
      %v369 = vld [vmem:[%s307 + $0x10] sm:$0xf]
      %v370 = vld [vmem:[%s307 + $0x14] sm:$0xf]
      %v371 = vld [vmem:[%s307 + $0x18] sm:$0xf]
      %v372 = vld [vmem:[%s307 + $0x1c] sm:$0xf]
      %v373 = vld [vmem:[%s307 + $0x20] sm:$0xf]
      %v374 = vld [vmem:[%s307 + $0x24] sm:$0xf]
      %v375 = vld [vmem:[%s307 + $0x28] sm:$0xf]
      %v376 = vld [vmem:[%s307 + $0x2c] sm:$0xf]
      %v377 = vld [vmem:[%s307 + $0x30] sm:$0xf]
      %v378 = vld [vmem:[%s307 + $0x34] sm:$0xf]
      %v379 = vld [vmem:[%s307 + $0x38] sm:$0xf]
      %v380 = vld [vmem:[%s307 + $0x3c] sm:$0xf]
      %v413 = vunpack.c.l.b16 %v333
      %v414 = vunpack.c.l.b16 %v334
      %v415 = vunpack.c.l.b16 %v335
      %v416 = vunpack.c.l.b16 %v336
      %v417 = vunpack.c.l.b16 %v337
      %v418 = vunpack.c.l.b16 %v338
      %v419 = vunpack.c.l.b16 %v339
      %v420 = vunpack.c.l.b16 %v340
      %v421 = vunpack.c.l.b16 %v341
      %v422 = vunpack.c.l.b16 %v342
      %v423 = vunpack.c.l.b16 %v343
      %v424 = vunpack.c.l.b16 %v344
      %v425 = vunpack.c.l.b16 %v345
      %v426 = vunpack.c.l.b16 %v346
      %v427 = vunpack.c.l.b16 %v347
      %v428 = vunpack.c.l.b16 %v348
      %v429 = vunpack.c.l.b16 %v349
      %v430 = vunpack.c.l.b16 %v350
      %v431 = vunpack.c.l.b16 %v351
      %v432 = vunpack.c.l.b16 %v352
      %v433 = vunpack.c.l.b16 %v353
      %v434 = vunpack.c.l.b16 %v354
      %v435 = vunpack.c.l.b16 %v355
      %v436 = vunpack.c.l.b16 %v356
      %v437 = vunpack.c.l.b16 %v357
      %v438 = vunpack.c.l.b16 %v358
      %v439 = vunpack.c.l.b16 %v359
      %v440 = vunpack.c.l.b16 %v360
      %v441 = vunpack.c.l.b16 %v361
      %v442 = vunpack.c.l.b16 %v362
      %v443 = vunpack.c.l.b16 %v363
      %v444 = vunpack.c.l.b16 %v364
      %v445 = vpack.c.b16 %v414, %v413
      %v446 = vpack.c.b16 %v416, %v415
      %v447 = vpack.c.b16 %v418, %v417
      %v448 = vpack.c.b16 %v420, %v419
      %v449 = vpack.c.b16 %v422, %v421
      %v450 = vpack.c.b16 %v424, %v423
      %v451 = vpack.c.b16 %v426, %v425
      %v452 = vpack.c.b16 %v428, %v427
      %v453 = vpack.c.b16 %v430, %v429
      %v454 = vpack.c.b16 %v432, %v431
      %v455 = vpack.c.b16 %v434, %v433
      %v456 = vpack.c.b16 %v436, %v435
      %v457 = vpack.c.b16 %v438, %v437
      %v458 = vpack.c.b16 %v440, %v439
      %v459 = vpack.c.b16 %v442, %v441
      %v460 = vpack.c.b16 %v444, %v443
      %v493 = vunpack.c.l.b16 %v365
      %v494 = vunpack.c.l.b16 %v366
      %v495 = vunpack.c.l.b16 %v367
      %v496 = vunpack.c.l.b16 %v368
      %v497 = vunpack.c.l.b16 %v369
      %v498 = vunpack.c.l.b16 %v370
      %v499 = vunpack.c.l.b16 %v371
      %v500 = vunpack.c.l.b16 %v372
      %v501 = vunpack.c.l.b16 %v373
      %v502 = vunpack.c.l.b16 %v374
      %v503 = vunpack.c.l.b16 %v375
      %v504 = vunpack.c.l.b16 %v376
      %v505 = vunpack.c.l.b16 %v377
      %v506 = vunpack.c.l.b16 %v378
      %v507 = vunpack.c.l.b16 %v379
      %v508 = vunpack.c.l.b16 %v380
      %v509 = vpack.c.b16 %v494, %v493
      %v510 = vpack.c.b16 %v496, %v495
      %v511 = vpack.c.b16 %v498, %v497
      %v512 = vpack.c.b16 %v500, %v499
      %v513 = vpack.c.b16 %v502, %v501
      %v514 = vpack.c.b16 %v504, %v503
      %v515 = vpack.c.b16 %v506, %v505
      %v516 = vpack.c.b16 %v508, %v507
      %525 = vmatpush.bf16.msra.mxu0 %v516
      %526 = vmatpush.bf16.msra.mxu0 %v515
      %527 = vmatpush.bf16.msra.mxu0 %v514
      %528 = vmatpush.bf16.msra.mxu0 %v513
      %529 = vmatpush.bf16.msra.mxu0 %v512
      %530 = vmatpush.bf16.msra.mxu0 %v511
      %531 = vmatpush.bf16.msra.mxu0 %v510
      %532 = vmatpush.bf16.msra.mxu0 %v509
      %533 = vmatmul.bf16.gmra.mxu0 %v445
      %v534 = vpop.f32.mrf.mxu0
      %v535 = vadd.f32 0.0, %v534
      %v536 = vpop.f32.mrf.mxu0
      %v537 = vadd.f32 0.0, %v536
      %538 = vmatmul.bf16.gmra.mxu0 %v446
      %v539 = vpop.f32.mrf.mxu0
      %v540 = vadd.f32 0.0, %v539
      %v541 = vpop.f32.mrf.mxu0
      %v542 = vadd.f32 0.0, %v541
      %543 = vmatmul.bf16.gmra.mxu0 %v447
      %v544 = vpop.f32.mrf.mxu0
      %v545 = vadd.f32 0.0, %v544
      %v546 = vpop.f32.mrf.mxu0
      %v547 = vadd.f32 0.0, %v546
      %548 = vmatmul.bf16.gmra.mxu0 %v448
      %v549 = vpop.f32.mrf.mxu0
      %v550 = vadd.f32 0.0, %v549
      %v551 = vpop.f32.mrf.mxu0
      %v552 = vadd.f32 0.0, %v551
      %553 = vmatmul.bf16.gmra.mxu0 %v449
      %v554 = vpop.f32.mrf.mxu0
      %v555 = vadd.f32 0.0, %v554
      %v556 = vpop.f32.mrf.mxu0
      %v557 = vadd.f32 0.0, %v556
      %558 = vmatmul.bf16.gmra.mxu0 %v450
      %v559 = vpop.f32.mrf.mxu0
      %v560 = vadd.f32 0.0, %v559
      %v561 = vpop.f32.mrf.mxu0
      %v562 = vadd.f32 0.0, %v561
      %563 = vmatmul.bf16.gmra.mxu0 %v451
      %v564 = vpop.f32.mrf.mxu0
      %v565 = vadd.f32 0.0, %v564
      %v566 = vpop.f32.mrf.mxu0
      %v567 = vadd.f32 0.0, %v566
      %568 = vmatmul.bf16.gmra.mxu0 %v452
      %v569 = vpop.f32.mrf.mxu0
      %v570 = vadd.f32 0.0, %v569
      %v571 = vpop.f32.mrf.mxu0
      %v572 = vadd.f32 0.0, %v571
      %573 = vmatmul.bf16.gmra.mxu0 %v453
      %v574 = vpop.f32.mrf.mxu0
      %v575 = vadd.f32 0.0, %v574
      %v576 = vpop.f32.mrf.mxu0
      %v577 = vadd.f32 0.0, %v576
      %578 = vmatmul.bf16.gmra.mxu0 %v454
      %v579 = vpop.f32.mrf.mxu0
      %v580 = vadd.f32 0.0, %v579
      %v581 = vpop.f32.mrf.mxu0
      %v582 = vadd.f32 0.0, %v581
      %583 = vmatmul.bf16.gmra.mxu0 %v455
      %v584 = vpop.f32.mrf.mxu0
      %v585 = vadd.f32 0.0, %v584
      %v586 = vpop.f32.mrf.mxu0
      %v587 = vadd.f32 0.0, %v586
      %588 = vmatmul.bf16.gmra.mxu0 %v456
      %v589 = vpop.f32.mrf.mxu0
      %v590 = vadd.f32 0.0, %v589
      %v591 = vpop.f32.mrf.mxu0
      %v592 = vadd.f32 0.0, %v591
      %593 = vmatmul.bf16.gmra.mxu0 %v457
      %v594 = vpop.f32.mrf.mxu0
      %v595 = vadd.f32 0.0, %v594
      %v596 = vpop.f32.mrf.mxu0
      %v597 = vadd.f32 0.0, %v596
      %598 = vmatmul.bf16.gmra.mxu0 %v458
      %v599 = vpop.f32.mrf.mxu0
      %v600 = vadd.f32 0.0, %v599
      %v601 = vpop.f32.mrf.mxu0
      %v602 = vadd.f32 0.0, %v601
      %603 = vmatmul.bf16.gmra.mxu0 %v459
      %v604 = vpop.f32.mrf.mxu0
      %v605 = vadd.f32 0.0, %v604
      %v606 = vpop.f32.mrf.mxu0
      %v607 = vadd.f32 0.0, %v606
      %608 = vmatmul.bf16.gmra.mxu0 %v460
      %v609 = vpop.f32.mrf.mxu0
      %v610 = vadd.f32 0.0, %v609
      %v611 = vpop.f32.mrf.mxu0
      %v612 = vadd.f32 0.0, %v611
      %613 = vdwg.mxu0
      %v614 = vld [vmem:[%s313] sm:$0x1]
      %v616 = vperm.slane %v614, 0
      %v618 = vmul.f32 %v535, %v616
      %v619 = vmul.f32 %v537, %v616
      %v620 = vmul.f32 %v540, %v616
      %v621 = vmul.f32 %v542, %v616
      %v622 = vmul.f32 %v545, %v616
      %v623 = vmul.f32 %v547, %v616
      %v624 = vmul.f32 %v550, %v616
      %v625 = vmul.f32 %v552, %v616
      %v626 = vmul.f32 %v555, %v616
      %v627 = vmul.f32 %v557, %v616
      %v628 = vmul.f32 %v560, %v616
      %v629 = vmul.f32 %v562, %v616
      %v630 = vmul.f32 %v565, %v616
      %v631 = vmul.f32 %v567, %v616
      %v632 = vmul.f32 %v570, %v616
      %v633 = vmul.f32 %v572, %v616
      %v634 = vmul.f32 %v575, %v616
      %v635 = vmul.f32 %v577, %v616
      %v636 = vmul.f32 %v580, %v616
      %v637 = vmul.f32 %v582, %v616
      %v638 = vmul.f32 %v585, %v616
      %v639 = vmul.f32 %v587, %v616
      %v640 = vmul.f32 %v590, %v616
      %v641 = vmul.f32 %v592, %v616
      %v642 = vmul.f32 %v595, %v616
      %v643 = vmul.f32 %v597, %v616
      %v644 = vmul.f32 %v600, %v616
      %v645 = vmul.f32 %v602, %v616
      %v646 = vmul.f32 %v605, %v616
      %v647 = vmul.f32 %v607, %v616
      %v648 = vmul.f32 %v610, %v616
      %v649 = vmul.f32 %v612, %v616
      %v650 = vld [vmem:[%s319] sm:$0x1]
      %v652 = vperm.slane %v650, 0
      %v654 = vadd.f32 %v618, %v652
      %v655 = vadd.f32 %v619, %v652
      %v656 = vadd.f32 %v620, %v652
      %v657 = vadd.f32 %v621, %v652
      %v658 = vadd.f32 %v622, %v652
      %v659 = vadd.f32 %v623, %v652
      %v660 = vadd.f32 %v624, %v652
      %v661 = vadd.f32 %v625, %v652
      %v662 = vadd.f32 %v626, %v652
      %v663 = vadd.f32 %v627, %v652
      %v664 = vadd.f32 %v628, %v652
      %v665 = vadd.f32 %v629, %v652
      %v666 = vadd.f32 %v630, %v652
      %v667 = vadd.f32 %v631, %v652
      %v668 = vadd.f32 %v632, %v652
      %v669 = vadd.f32 %v633, %v652
      %v670 = vadd.f32 %v634, %v652
      %v671 = vadd.f32 %v635, %v652
      %v672 = vadd.f32 %v636, %v652
      %v673 = vadd.f32 %v637, %v652
      %v674 = vadd.f32 %v638, %v652
      %v675 = vadd.f32 %v639, %v652
      %v676 = vadd.f32 %v640, %v652
      %v677 = vadd.f32 %v641, %v652
      %v678 = vadd.f32 %v642, %v652
      %v679 = vadd.f32 %v643, %v652
      %v680 = vadd.f32 %v644, %v652
      %v681 = vadd.f32 %v645, %v652
      %v682 = vadd.f32 %v646, %v652
      %v683 = vadd.f32 %v647, %v652
      %v684 = vadd.f32 %v648, %v652
      %v685 = vadd.f32 %v649, %v652
      %v686 = vmax.f32 %v654, 0.0
      %v687 = vmax.f32 %v655, 0.0
      %v688 = vmax.f32 %v656, 0.0
      %v689 = vmax.f32 %v657, 0.0
      %v690 = vmax.f32 %v658, 0.0
      %v691 = vmax.f32 %v659, 0.0
      %v692 = vmax.f32 %v660, 0.0
      %v693 = vmax.f32 %v661, 0.0
      %v694 = vmax.f32 %v662, 0.0
      %v695 = vmax.f32 %v663, 0.0
      %v696 = vmax.f32 %v664, 0.0
      %v697 = vmax.f32 %v665, 0.0
      %v698 = vmax.f32 %v666, 0.0
      %v699 = vmax.f32 %v667, 0.0
      %v700 = vmax.f32 %v668, 0.0
      %v701 = vmax.f32 %v669, 0.0
      %v702 = vmax.f32 %v670, 0.0
      %v703 = vmax.f32 %v671, 0.0
      %v704 = vmax.f32 %v672, 0.0
      %v705 = vmax.f32 %v673, 0.0
      %v706 = vmax.f32 %v674, 0.0
      %v707 = vmax.f32 %v675, 0.0
      %v708 = vmax.f32 %v676, 0.0
      %v709 = vmax.f32 %v677, 0.0
      %v710 = vmax.f32 %v678, 0.0
      %v711 = vmax.f32 %v679, 0.0
      %v712 = vmax.f32 %v680, 0.0
      %v713 = vmax.f32 %v681, 0.0
      %v714 = vmax.f32 %v682, 0.0
      %v715 = vmax.f32 %v683, 0.0
      %v716 = vmax.f32 %v684, 0.0
      %v717 = vmax.f32 %v685, 0.0
      %718 = vst [vmem:[%s331] sm:$0xff] %v686
      %719 = vst [vmem:[%s331 + $0x8] sm:$0xff] %v687
      %720 = vst [vmem:[%s331 + $0x10] sm:$0xff] %v688
      %721 = vst [vmem:[%s331 + $0x18] sm:$0xff] %v689
      %722 = vst [vmem:[%s331 + $0x20] sm:$0xff] %v690
      %723 = vst [vmem:[%s331 + $0x28] sm:$0xff] %v691
      %724 = vst [vmem:[%s331 + $0x30] sm:$0xff] %v692
      %725 = vst [vmem:[%s331 + $0x38] sm:$0xff] %v693
      %726 = vst [vmem:[%s331 + $0x40] sm:$0xff] %v694
      %727 = vst [vmem:[%s331 + $0x48] sm:$0xff] %v695
      %728 = vst [vmem:[%s331 + $0x50] sm:$0xff] %v696
      %729 = vst [vmem:[%s331 + $0x58] sm:$0xff] %v697
      %730 = vst [vmem:[%s331 + $0x60] sm:$0xff] %v698
      %731 = vst [vmem:[%s331 + $0x68] sm:$0xff] %v699
      %732 = vst [vmem:[%s331 + $0x70] sm:$0xff] %v700
      %733 = vst [vmem:[%s331 + $0x78] sm:$0xff] %v701
      %734 = vst [vmem:[%s331 + $0x80] sm:$0xff] %v702
      %735 = vst [vmem:[%s331 + $0x88] sm:$0xff] %v703
      %736 = vst [vmem:[%s331 + $0x90] sm:$0xff] %v704
      %737 = vst [vmem:[%s331 + $0x98] sm:$0xff] %v705
      %738 = vst [vmem:[%s331 + $0xa0] sm:$0xff] %v706
      %739 = vst [vmem:[%s331 + $0xa8] sm:$0xff] %v707
      %740 = vst [vmem:[%s331 + $0xb0] sm:$0xff] %v708
      %741 = vst [vmem:[%s331 + $0xb8] sm:$0xff] %v709
      %742 = vst [vmem:[%s331 + $0xc0] sm:$0xff] %v710
      %743 = vst [vmem:[%s331 + $0xc8] sm:$0xff] %v711
      %744 = vst [vmem:[%s331 + $0xd0] sm:$0xff] %v712
      %745 = vst [vmem:[%s331 + $0xd8] sm:$0xff] %v713
      %746 = vst [vmem:[%s331 + $0xe0] sm:$0xff] %v714
      %747 = vst [vmem:[%s331 + $0xe8] sm:$0xff] %v715
      %748 = vst [vmem:[%s331 + $0xf0] sm:$0xff] %v716
      %749 = vst [vmem:[%s331 + $0xf8] sm:$0xff] %v717
      %s750 = smul.u32 32, %s21
      %p751 = scmp.lt.s32.totalorder %s20, 0
      %s752 = scalar_select %p751, %s20, 0
      %p753 = scmp.lt.s32.totalorder %s750, 63
      %s754 = scalar_select %p753, %s750, 63
      %p755 = scmp.lt.s32.totalorder %s22, 0
      %s756 = scalar_select %p755, %s22, 0
      %s757 = sadd.s32 %s756, %s754
      %s758 = smul.addr %s752, 64
      %s759 = sadd.s32 %s757, %s758
      %s760 = smul.addr %s759, 8
      %s761 = scalar_lea.vmem %s4, %s760
      // Predicated region
      $region37: #{run.10} parent=35 // pred_check
        %p762 = pneg %p168
      $region38: #{run.10} parent=35 // pred_check_branch
        %764 = sbr.rel (%p762) target = $region40
      $region39: #{run.10} parent=35 // pred_region
        %s765 = smul.u32 32, %s21
      $region40: #{run.10} parent=35 // pred_fallthru
        _
    $region36: #{run.10} parent=5 // pred_fallthru
      _
    %p766 = scmp.le.s32.totalorder 2, %s10
    // Predicated region
    $region41: #{run.10} parent=5 // pred_check
      %p767 = pneg %p766
    $region42: #{run.10} parent=5 // pred_check_branch
      %769 = sbr.rel (%p767) target = $region44
    $region43: #{run.10} parent=5 // pred_region
      %s770 = ssub.s32 %s10, 2
      // Predicated region
      $region45: #{run.10} parent=43 // pred_check
        %p771 = pneg %p174
      $region46: #{run.10} parent=43 // pred_check_branch
        %773 = sbr.rel (%p771) target = $region48
      $region47: #{run.10} parent=43 // pred_region
        %s774 = smul.u32 32, %s24
        %p775 = scmp.lt.s32.totalorder %s23, 0
        %s776 = scalar_select %p775, %s23, 0
        %p777 = scmp.lt.s32.totalorder %s774, 63
        %s778 = scalar_select %p777, %s774, 63
        %p779 = scmp.lt.s32.totalorder %s25, 0
        %s780 = scalar_select %p779, %s25, 0
        %s781 = sadd.s32 %s780, %s778
        %s782 = smul.addr %s776, 64
        %s783 = sadd.s32 %s781, %s782
        %s784 = smul.addr %s783, 8
        %s785 = scalar_lea.vmem %s4, %s784
      $region48: #{run.10} parent=43 // pred_fallthru
        _
    $region44: #{run.10} parent=5 // pred_fallthru
      _
  $region6: #{run.10} parent=0 // loop_footer
    %s14 = sadd.s32 1, %s10
  $region7: #{run.10} parent=0 // loop_footer_branch
    %9 = sbr.rel target = $region3
  $region8: #{run.10} parent=0 // loop_exit
    _

// kernel: run.11
$region0: #{run.11}
  #allocation0 [shape = 'u32[]', space=smem, size = 0x4, offset = 0x4, fixed_abs, tag = 'smem constant byte address 0x4 - core index']
  #allocation1 [shape = 'u32[72,128]{1,0:T(1,128)}', space=vmem, size = 0x9000, scoped, tag = 'internal scratch']
  %s0 = inlined_call_operand.vmem [shape: bf16[2,128,384], index: 0, kind: input, shape index: {}]
  %s1 = inlined_call_operand.vmem [shape: bf16[2,384,128], index: 1, kind: input, shape index: {}]
  %s2 = inlined_call_operand.vmem [shape: f32[2,1,128], index: 2, kind: input, shape index: {}]
  %s3 = inlined_call_operand.vmem [shape: f32[2,1,128], index: 3, kind: input, shape index: {}]
  %s4 = inlined_call_operand.vmem [shape: f32[2,128,128], index: 4, kind: output, shape index: {}]
  %s5 = sld [smem:[#allocation0]]
  $region49: #{run.11} parent=0
    _
  %s7 = ssub.s32 1, %s5
  %s8 = scalar_select 0, %s7, %s5
  loop: start=0, step=1, limit=4
  $region2: #{run.11} parent=0 // loop_pre_header
    _
  $region3: #{run.11} parent=0 // loop_header
    %s10 = sphi 0, %s14
    %p11 = scmp.ge.s32.totalorder %s10, 4
    %s17 = sphi 0, %s36
    %s18 = sphi 0, %s32
    %s19 = sphi 0, %s28
    %s20 = sphi 0, %s17
    %s21 = sphi 0, %s18
    %s22 = sphi 0, %s19
    %s23 = sphi 0, %s20
    %s24 = sphi 0, %s21
    %s25 = sphi 0, %s22
    %s41 = sphi 0, %s43
    %s44 = sphi 0, %s41
    %s45 = sphi 0, %s44
    %s61 = sphi 0, %s45
    %s69 = sphi 0, %s71
    %s72 = sphi 0, %s69
    %s73 = sphi 0, %s72
    %s89 = sphi 0, %s73
    %s97 = sphi 0, %s99
    %s100 = sphi 0, %s97
    %s101 = sphi 0, %s100
    %s117 = sphi 0, %s101
    %s125 = sphi 0, %s127
    %s128 = sphi 0, %s125
    %s129 = sphi 0, %s128
    %s145 = sphi 0, %s129
    %s155 = sphi 0, %s157
    %s158 = sphi 0, %s155
    %s159 = sphi 0, %s158
    %s175 = sphi 0, %s159
  $region4: #{run.11} parent=0 // loop_header_branch
    %13 = sbr.rel (%p11) target = $region8
  $region5: #{run.11} parent=0 // loop_body
    %s15 = ssub.s32 %s10, 1
    %s16 = ssub.s32 %s10, 2
    %s26 = sadd.s32 1, %s19
    %p27 = scmp.ge.s32.totalorder %s26, 1
    %s28 = scalar_select %p27, 0, %s26
    %s29 = sadd.s32 1, %s18
    %s30 = scalar_select %p27, %s29, %s18
    %p31 = scmp.ge.s32.totalorder %s30, 1
    %s32 = scalar_select %p31, 0, %s30
    %s33 = sadd.s32 1, %s17
    %s34 = scalar_select %p31, %s33, %s17
    %p35 = scmp.ge.s32.totalorder %s34, 2
    %s36 = scalar_select %p35, 0, %s34
    %s37 = ssub.s32 %s17, %s36
    %s38 = ssub.s32 %s18, %s32
    %s39 = sor.u32 %s37, %s38
    %p40 = scmp.eq.s32.totalorder %s39, 0
    %s42 = sadd.s32 %s41, 1
    %s43 = scalar_select %p40, %s41, %s42
    %p46 = pneg %p40
    %p47 = scmp.eq.s32.totalorder %s10, 1
    %p48 = por %p46, %p47
    %p49 = scmp.ne.s32.totalorder %s41, %s44
    %p50 = scmp.eq.s32.totalorder %s10, 0
    %p51 = por %p49, %p50
    %p52 = scmp.ne.s32.totalorder %s41, %s44
    %p53 = scmp.eq.s32.totalorder %s15, 1
    %p54 = por %p52, %p53
    %p55 = scmp.ne.s32.totalorder %s44, %s45
    %p56 = scmp.eq.s32.totalorder %s15, 0
    %p57 = por %p55, %p56
    %p58 = scmp.ne.s32.totalorder %s44, %s45
    %p59 = scmp.eq.s32.totalorder %s16, 1
    %p60 = por %p58, %p59
    %p62 = scmp.ne.s32.totalorder %s45, %s61
    %p63 = scmp.eq.s32.totalorder %s16, 0
    %p64 = por %p62, %p63
    %s65 = ssub.s32 %s17, %s36
    %s66 = ssub.s32 %s19, %s28
    %s67 = sor.u32 %s65, %s66
    %p68 = scmp.eq.s32.totalorder %s67, 0
    %s70 = sadd.s32 %s69, 1
    %s71 = scalar_select %p68, %s69, %s70
    %p74 = pneg %p68
    %p75 = scmp.eq.s32.totalorder %s10, 1
    %p76 = por %p74, %p75
    %p77 = scmp.ne.s32.totalorder %s69, %s72
    %p78 = scmp.eq.s32.totalorder %s10, 0
    %p79 = por %p77, %p78
    %p80 = scmp.ne.s32.totalorder %s69, %s72
    %p81 = scmp.eq.s32.totalorder %s15, 1
    %p82 = por %p80, %p81
    %p83 = scmp.ne.s32.totalorder %s72, %s73
    %p84 = scmp.eq.s32.totalorder %s15, 0
    %p85 = por %p83, %p84
    %p86 = scmp.ne.s32.totalorder %s72, %s73
    %p87 = scmp.eq.s32.totalorder %s16, 1
    %p88 = por %p86, %p87
    %p90 = scmp.ne.s32.totalorder %s73, %s89
    %p91 = scmp.eq.s32.totalorder %s16, 0
    %p92 = por %p90, %p91
    %s93 = ssub.s32 %s17, %s36
    %s94 = ssub.s32 %s19, %s28
    %s95 = sor.u32 %s93, %s94
    %p96 = scmp.eq.s32.totalorder %s95, 0
    %s98 = sadd.s32 %s97, 1
    %s99 = scalar_select %p96, %s97, %s98
    %p102 = pneg %p96
    %p103 = scmp.eq.s32.totalorder %s10, 1
    %p104 = por %p102, %p103
    %p105 = scmp.ne.s32.totalorder %s97, %s100
    %p106 = scmp.eq.s32.totalorder %s10, 0
    %p107 = por %p105, %p106
    %p108 = scmp.ne.s32.totalorder %s97, %s100
    %p109 = scmp.eq.s32.totalorder %s15, 1
    %p110 = por %p108, %p109
    %p111 = scmp.ne.s32.totalorder %s100, %s101
    %p112 = scmp.eq.s32.totalorder %s15, 0
    %p113 = por %p111, %p112
    %p114 = scmp.ne.s32.totalorder %s100, %s101
    %p115 = scmp.eq.s32.totalorder %s16, 1
    %p116 = por %p114, %p115
    %p118 = scmp.ne.s32.totalorder %s101, %s117
    %p119 = scmp.eq.s32.totalorder %s16, 0
    %p120 = por %p118, %p119
    %s121 = ssub.s32 %s17, %s36
    %s122 = ssub.s32 %s19, %s28
    %s123 = sor.u32 %s121, %s122
    %p124 = scmp.eq.s32.totalorder %s123, 0
    %s126 = sadd.s32 %s125, 1
    %s127 = scalar_select %p124, %s125, %s126
    %p130 = pneg %p124
    %p131 = scmp.eq.s32.totalorder %s10, 1
    %p132 = por %p130, %p131
    %p133 = scmp.ne.s32.totalorder %s125, %s128
    %p134 = scmp.eq.s32.totalorder %s10, 0
    %p135 = por %p133, %p134
    %p136 = scmp.ne.s32.totalorder %s125, %s128
    %p137 = scmp.eq.s32.totalorder %s15, 1
    %p138 = por %p136, %p137
    %p139 = scmp.ne.s32.totalorder %s128, %s129
    %p140 = scmp.eq.s32.totalorder %s15, 0
    %p141 = por %p139, %p140
    %p142 = scmp.ne.s32.totalorder %s128, %s129
    %p143 = scmp.eq.s32.totalorder %s16, 1
    %p144 = por %p142, %p143
    %p146 = scmp.ne.s32.totalorder %s129, %s145
    %p147 = scmp.eq.s32.totalorder %s16, 0
    %p148 = por %p146, %p147
    %s149 = ssub.s32 %s17, %s36
    %s150 = ssub.s32 %s18, %s32
    %s151 = sor.u32 %s149, %s150
    %s152 = ssub.s32 %s19, %s28
    %s153 = sor.u32 %s151, %s152
    %p154 = scmp.eq.s32.totalorder %s153, 0
    %s156 = sadd.s32 %s155, 1
    %s157 = scalar_select %p154, %s155, %s156
    %p160 = pneg %p154
    %p161 = scmp.eq.s32.totalorder %s10, 1
    %p162 = por %p160, %p161
    %p163 = scmp.ne.s32.totalorder %s155, %s158
    %p164 = scmp.eq.s32.totalorder %s10, 0
    %p165 = por %p163, %p164
    %p166 = scmp.ne.s32.totalorder %s155, %s158
    %p167 = scmp.eq.s32.totalorder %s15, 1
    %p168 = por %p166, %p167
    %p169 = scmp.ne.s32.totalorder %s158, %s159
    %p170 = scmp.eq.s32.totalorder %s15, 0
    %p171 = por %p169, %p170
    %p172 = scmp.ne.s32.totalorder %s158, %s159
    %p173 = scmp.eq.s32.totalorder %s16, 1
    %p174 = por %p172, %p173
    %p176 = scmp.ne.s32.totalorder %s159, %s175
    %p177 = scmp.eq.s32.totalorder %s16, 0
    %p178 = por %p176, %p177
    %p179 = scmp.le.s32.totalorder 1, %s10
    %p180 = scmp.lt.s32.totalorder %s10, 3
    %p181 = pnand %p179, %p180
    %p182 = pneg %p181
    // Predicated region
    $region9: #{run.11} parent=5 // pred_check
      _
    $region10: #{run.11} parent=5 // pred_check_branch
      %184 = sbr.rel (%p181) target = $region12
    $region11: #{run.11} parent=5 // pred_region
      %s185 = ssub.s32 %s10, 1
    $region12: #{run.11} parent=5 // pred_fallthru
      _
    %p186 = scmp.lt.s32.totalorder %s10, 2
    // Predicated region
    $region13: #{run.11} parent=5 // pred_check
      %p187 = pneg %p186
    $region14: #{run.11} parent=5 // pred_check_branch
      %189 = sbr.rel (%p187) target = $region16
    $region15: #{run.11} parent=5 // pred_region
      // Predicated region
      $region17: #{run.11} parent=15 // pred_check
        %p190 = pneg %p51
      $region18: #{run.11} parent=15 // pred_check_branch
        %192 = sbr.rel (%p190) target = $region20
      $region19: #{run.11} parent=15 // pred_region
        %s193 = smul.u32 16, %s18
        %p194 = scmp.lt.s32.totalorder %s17, 1
        %s195 = scalar_select %p194, %s17, 1
        %p196 = scmp.lt.s32.totalorder %s193, 15
        %s197 = scalar_select %p196, %s193, 15
        %s198 = smul.addr %s197, 3
        %s199 = smul.addr %s195, 48
        %s200 = sadd.s32 %s198, %s199
        %s201 = smul.addr %s200, 4
        %s202 = scalar_lea.vmem %s0, %s201
        %s203 = smul.u32 16, %s18
      $region20: #{run.11} parent=15 // pred_fallthru
        _
      // Predicated region
      $region21: #{run.11} parent=15 // pred_check
        %p204 = pneg %p79
      $region22: #{run.11} parent=15 // pred_check_branch
        %206 = sbr.rel (%p204) target = $region24
      $region23: #{run.11} parent=15 // pred_region
        %p207 = scmp.lt.s32.totalorder %s17, 1
        %s208 = scalar_select %p207, %s17, 1
        %p209 = scmp.lt.s32.totalorder %s19, 0
        %s210 = scalar_select %p209, %s19, 0
        %s211 = smul.addr %s208, 48
        %s212 = sadd.s32 %s210, %s211
        %s213 = smul.addr %s212, 4
        %s214 = scalar_lea.vmem %s1, %s213
      $region24: #{run.11} parent=15 // pred_fallthru
        _
      // Predicated region
      $region25: #{run.11} parent=15 // pred_check
        %p215 = pneg %p107
      $region26: #{run.11} parent=15 // pred_check_branch
        %217 = sbr.rel (%p215) target = $region28
      $region27: #{run.11} parent=15 // pred_region
        %p218 = scmp.lt.s32.totalorder %s17, 1
        %s219 = scalar_select %p218, %s17, 1
        %p220 = scmp.lt.s32.totalorder %s19, 0
        %s221 = scalar_select %p220, %s19, 0
        %s222 = sadd.s32 %s221, %s219
        %s223 = scalar_lea.vmem %s2, %s222
      $region28: #{run.11} parent=15 // pred_fallthru
        _
      // Predicated region
      $region29: #{run.11} parent=15 // pred_check
        %p224 = pneg %p135
      $region30: #{run.11} parent=15 // pred_check_branch
        %226 = sbr.rel (%p224) target = $region32
      $region31: #{run.11} parent=15 // pred_region
        %p227 = scmp.lt.s32.totalorder %s17, 1
        %s228 = scalar_select %p227, %s17, 1
        %p229 = scmp.lt.s32.totalorder %s19, 0
        %s230 = scalar_select %p229, %s19, 0
        %s231 = sadd.s32 %s230, %s228
        %s232 = scalar_lea.vmem %s3, %s231
      $region32: #{run.11} parent=15 // pred_fallthru
        _
    $region16: #{run.11} parent=5 // pred_fallthru
      _
    %p233 = scmp.le.s32.totalorder 1, %s10
    %p234 = scmp.lt.s32.totalorder %s10, 3
    %p235 = pnand %p233, %p234
    %p236 = pneg %p235
    // Predicated region
    $region33: #{run.11} parent=5 // pred_check
      _
    $region34: #{run.11} parent=5 // pred_check_branch
      %238 = sbr.rel (%p235) target = $region36
    $region35: #{run.11} parent=5 // pred_region
      %s239 = ssub.s32 %s10, 1
      %s240 = smul.u32 16, %s21
      %p241 = scmp.lt.s32.totalorder %s20, 1
      %s242 = scalar_select %p241, %s20, 1
      %p243 = scmp.lt.s32.totalorder %s240, 15
      %s244 = scalar_select %p243, %s240, 15
      %s245 = smul.addr %s244, 3
      %s246 = smul.addr %s242, 48
      %s247 = sadd.s32 %s245, %s246
      %s248 = smul.addr %s247, 4
      %s249 = scalar_lea.vmem %s0, %s248
      %p250 = pneg %p57
      %p251 = pneg %p54
      %p252 = scmp.lt.s32.totalorder %s20, 1
      %s253 = scalar_select %p252, %s20, 1
      %p254 = scmp.lt.s32.totalorder %s22, 0
      %s255 = scalar_select %p254, %s22, 0
      %s256 = smul.addr %s253, 48
      %s257 = sadd.s32 %s255, %s256
      %s258 = smul.addr %s257, 4
      %s259 = scalar_lea.vmem %s1, %s258
      %p260 = pneg %p85
      %p261 = pneg %p82
      %p262 = scmp.lt.s32.totalorder %s20, 1
      %s263 = scalar_select %p262, %s20, 1
      %p264 = scmp.lt.s32.totalorder %s22, 0
      %s265 = scalar_select %p264, %s22, 0
      %s266 = sadd.s32 %s265, %s263
      %s267 = scalar_lea.vmem %s2, %s266
      %p268 = pneg %p113
      %p269 = pneg %p110
      %p270 = scmp.lt.s32.totalorder %s20, 1
      %s271 = scalar_select %p270, %s20, 1
      %p272 = scmp.lt.s32.totalorder %s22, 0
      %s273 = scalar_select %p272, %s22, 0
      %s274 = sadd.s32 %s273, %s271
      %s275 = scalar_lea.vmem %s3, %s274
      %p276 = pneg %p141
      %p277 = pneg %p138
      %p278 = pneg %p171
      %p279 = pneg %p168
      %s280 = smul.u32 16, %s21
      %p281 = scmp.lt.s32.totalorder %s20, 1
      %s282 = scalar_select %p281, %s20, 1
      %p283 = scmp.lt.s32.totalorder %s280, 15
      %s284 = scalar_select %p283, %s280, 15
      %p285 = scmp.lt.s32.totalorder %s22, 0
      %s286 = scalar_select %p285, %s22, 0
      %s287 = sadd.s32 %s286, %s284
      %s288 = smul.addr %s282, 16
      %s289 = sadd.s32 %s287, %s288
      %s290 = smul.addr %s289, 8
      %s291 = scalar_lea.vmem %s4, %s290
      %s292 = smul.u32 16, %s21
      %p293 = scmp.lt.s32.totalorder %s20, 1
      %s294 = scalar_select %p293, %s20, 1
      %p295 = scmp.lt.s32.totalorder %s292, 15
      %s296 = scalar_select %p295, %s292, 15
      %s297 = smul.addr %s296, 3
      %s298 = smul.addr %s294, 48
      %s299 = sadd.s32 %s297, %s298
      %s300 = smul.addr %s299, 4
      %s301 = scalar_lea.vmem %s0, %s300
      %s302 = smul.u32 16, %s21
      %p303 = scmp.lt.s32.totalorder %s20, 1
      %s304 = scalar_select %p303, %s20, 1
      %p305 = scmp.lt.s32.totalorder %s22, 0
      %s306 = scalar_select %p305, %s22, 0
      %s307 = smul.addr %s304, 48
      %s308 = sadd.s32 %s306, %s307
      %s309 = smul.addr %s308, 4
      %s310 = scalar_lea.vmem %s1, %s309
      %p311 = scmp.lt.s32.totalorder %s20, 1
      %s312 = scalar_select %p311, %s20, 1
      %p313 = scmp.lt.s32.totalorder %s22, 0
      %s314 = scalar_select %p313, %s22, 0
      %s315 = sadd.s32 %s314, %s312
      %s316 = scalar_lea.vmem %s2, %s315
      %p317 = scmp.lt.s32.totalorder %s20, 1
      %s318 = scalar_select %p317, %s20, 1
      %p319 = scmp.lt.s32.totalorder %s22, 0
      %s320 = scalar_select %p319, %s22, 0
      %s321 = sadd.s32 %s320, %s318
      %s322 = scalar_lea.vmem %s3, %s321
      %s323 = smul.u32 16, %s21
      %p324 = scmp.lt.s32.totalorder %s20, 1
      %s325 = scalar_select %p324, %s20, 1
      %p326 = scmp.lt.s32.totalorder %s323, 15
      %s327 = scalar_select %p326, %s323, 15
      %p328 = scmp.lt.s32.totalorder %s22, 0
      %s329 = scalar_select %p328, %s22, 0
      %s330 = sadd.s32 %s329, %s327
      %s331 = smul.addr %s325, 16
      %s332 = sadd.s32 %s330, %s331
      %s333 = smul.addr %s332, 8
      %s334 = scalar_lea.vmem %s4, %s333
      %s335 = smul.u32 16, %s21
      %v336 = vld [vmem:[%s301] sm:$0xff]
      %v337 = vld [vmem:[%s301 + $0x8] sm:$0xf]
      %v338 = vld [vmem:[%s301 + $0xc] sm:$0xff]
      %v339 = vld [vmem:[%s301 + $0x14] sm:$0xf]
      %v340 = vld [vmem:[%s301 + $0x18] sm:$0xff]
      %v341 = vld [vmem:[%s301 + $0x20] sm:$0xf]
      %v342 = vld [vmem:[%s301 + $0x24] sm:$0xff]
      %v343 = vld [vmem:[%s301 + $0x2c] sm:$0xf]
      %v344 = vld [vmem:[%s301 + $0x30] sm:$0xff]
      %v345 = vld [vmem:[%s301 + $0x38] sm:$0xf]
      %v346 = vld [vmem:[%s301 + $0x3c] sm:$0xff]
      %v347 = vld [vmem:[%s301 + $0x44] sm:$0xf]
      %v348 = vld [vmem:[%s301 + $0x48] sm:$0xff]
      %v349 = vld [vmem:[%s301 + $0x50] sm:$0xf]
      %v350 = vld [vmem:[%s301 + $0x54] sm:$0xff]
      %v351 = vld [vmem:[%s301 + $0x5c] sm:$0xf]
      %v352 = vld [vmem:[%s301 + $0x60] sm:$0xff]
      %v353 = vld [vmem:[%s301 + $0x68] sm:$0xf]
      %v354 = vld [vmem:[%s301 + $0x6c] sm:$0xff]
      %v355 = vld [vmem:[%s301 + $0x74] sm:$0xf]
      %v356 = vld [vmem:[%s301 + $0x78] sm:$0xff]
      %v357 = vld [vmem:[%s301 + $0x80] sm:$0xf]
      %v358 = vld [vmem:[%s301 + $0x84] sm:$0xff]
      %v359 = vld [vmem:[%s301 + $0x8c] sm:$0xf]
      %v360 = vld [vmem:[%s301 + $0x90] sm:$0xff]
      %v361 = vld [vmem:[%s301 + $0x98] sm:$0xf]
      %v362 = vld [vmem:[%s301 + $0x9c] sm:$0xff]
      %v363 = vld [vmem:[%s301 + $0xa4] sm:$0xf]
      %v364 = vld [vmem:[%s301 + $0xa8] sm:$0xff]
      %v365 = vld [vmem:[%s301 + $0xb0] sm:$0xf]
      %v366 = vld [vmem:[%s301 + $0xb4] sm:$0xff]
      %v367 = vld [vmem:[%s301 + $0xbc] sm:$0xf]
      %v368 = vld [vmem:[%s310] sm:$0xf]
      %v369 = vld [vmem:[%s310 + $0x4] sm:$0xf]
      %v370 = vld [vmem:[%s310 + $0x8] sm:$0xf]
      %v371 = vld [vmem:[%s310 + $0xc] sm:$0xf]
      %v372 = vld [vmem:[%s310 + $0x10] sm:$0xf]
      %v373 = vld [vmem:[%s310 + $0x14] sm:$0xf]
      %v374 = vld [vmem:[%s310 + $0x18] sm:$0xf]
      %v375 = vld [vmem:[%s310 + $0x1c] sm:$0xf]
      %v376 = vld [vmem:[%s310 + $0x20] sm:$0xf]
      %v377 = vld [vmem:[%s310 + $0x24] sm:$0xf]
      %v378 = vld [vmem:[%s310 + $0x28] sm:$0xf]
      %v379 = vld [vmem:[%s310 + $0x2c] sm:$0xf]
      %v380 = vld [vmem:[%s310 + $0x30] sm:$0xf]
      %v381 = vld [vmem:[%s310 + $0x34] sm:$0xf]
      %v382 = vld [vmem:[%s310 + $0x38] sm:$0xf]
      %v383 = vld [vmem:[%s310 + $0x3c] sm:$0xf]
      %v384 = vld [vmem:[%s310 + $0x40] sm:$0xf]
      %v385 = vld [vmem:[%s310 + $0x44] sm:$0xf]
      %v386 = vld [vmem:[%s310 + $0x48] sm:$0xf]
      %v387 = vld [vmem:[%s310 + $0x4c] sm:$0xf]
      %v388 = vld [vmem:[%s310 + $0x50] sm:$0xf]
      %v389 = vld [vmem:[%s310 + $0x54] sm:$0xf]
      %v390 = vld [vmem:[%s310 + $0x58] sm:$0xf]
      %v391 = vld [vmem:[%s310 + $0x5c] sm:$0xf]
      %v392 = vld [vmem:[%s310 + $0x60] sm:$0xf]
      %v393 = vld [vmem:[%s310 + $0x64] sm:$0xf]
      %v394 = vld [vmem:[%s310 + $0x68] sm:$0xf]
      %v395 = vld [vmem:[%s310 + $0x6c] sm:$0xf]
      %v396 = vld [vmem:[%s310 + $0x70] sm:$0xf]
      %v397 = vld [vmem:[%s310 + $0x74] sm:$0xf]
      %v398 = vld [vmem:[%s310 + $0x78] sm:$0xf]
      %v399 = vld [vmem:[%s310 + $0x7c] sm:$0xf]
      %v400 = vld [vmem:[%s310 + $0x80] sm:$0xf]
      %v401 = vld [vmem:[%s310 + $0x84] sm:$0xf]
      %v402 = vld [vmem:[%s310 + $0x88] sm:$0xf]
      %v403 = vld [vmem:[%s310 + $0x8c] sm:$0xf]
      %v404 = vld [vmem:[%s310 + $0x90] sm:$0xf]
      %v405 = vld [vmem:[%s310 + $0x94] sm:$0xf]
      %v406 = vld [vmem:[%s310 + $0x98] sm:$0xf]
      %v407 = vld [vmem:[%s310 + $0x9c] sm:$0xf]
      %v408 = vld [vmem:[%s310 + $0xa0] sm:$0xf]
      %v409 = vld [vmem:[%s310 + $0xa4] sm:$0xf]
      %v410 = vld [vmem:[%s310 + $0xa8] sm:$0xf]
      %v411 = vld [vmem:[%s310 + $0xac] sm:$0xf]
      %v412 = vld [vmem:[%s310 + $0xb0] sm:$0xf]
      %v413 = vld [vmem:[%s310 + $0xb4] sm:$0xf]
      %v414 = vld [vmem:[%s310 + $0xb8] sm:$0xf]
      %v415 = vld [vmem:[%s310 + $0xbc] sm:$0xf]
      %v448 = vunpack.c.l.b16 %v336
      %v449 = vunpack.c.h.b16 %v336
      %v450 = vunpack.c.l.b16 %v337
      %v451 = vunpack.c.l.b16 %v338
      %v452 = vunpack.c.h.b16 %v338
      %v453 = vunpack.c.l.b16 %v339
      %v454 = vunpack.c.l.b16 %v340
      %v455 = vunpack.c.h.b16 %v340
      %v456 = vunpack.c.l.b16 %v341
      %v457 = vunpack.c.l.b16 %v342
      %v458 = vunpack.c.h.b16 %v342
      %v459 = vunpack.c.l.b16 %v343
      %v460 = vunpack.c.l.b16 %v344
      %v461 = vunpack.c.h.b16 %v344
      %v462 = vunpack.c.l.b16 %v345
      %v463 = vunpack.c.l.b16 %v346
      %v464 = vunpack.c.h.b16 %v346
      %v465 = vunpack.c.l.b16 %v347
      %v466 = vunpack.c.l.b16 %v348
      %v467 = vunpack.c.h.b16 %v348
      %v468 = vunpack.c.l.b16 %v349
      %v469 = vunpack.c.l.b16 %v350
      %v470 = vunpack.c.h.b16 %v350
      %v471 = vunpack.c.l.b16 %v351
      %v472 = vunpack.c.l.b16 %v352
      %v473 = vunpack.c.h.b16 %v352
      %v474 = vunpack.c.l.b16 %v353
      %v475 = vunpack.c.l.b16 %v354
      %v476 = vunpack.c.h.b16 %v354
      %v477 = vunpack.c.l.b16 %v355
      %v478 = vunpack.c.l.b16 %v356
      %v479 = vunpack.c.h.b16 %v356
      %v480 = vunpack.c.l.b16 %v357
      %v481 = vunpack.c.l.b16 %v358
      %v482 = vunpack.c.h.b16 %v358
      %v483 = vunpack.c.l.b16 %v359
      %v484 = vunpack.c.l.b16 %v360
      %v485 = vunpack.c.h.b16 %v360
      %v486 = vunpack.c.l.b16 %v361
      %v487 = vunpack.c.l.b16 %v362
      %v488 = vunpack.c.h.b16 %v362
      %v489 = vunpack.c.l.b16 %v363
      %v490 = vunpack.c.l.b16 %v364
      %v491 = vunpack.c.h.b16 %v364
      %v492 = vunpack.c.l.b16 %v365
      %v493 = vunpack.c.l.b16 %v366
      %v494 = vunpack.c.h.b16 %v366
      %v495 = vunpack.c.l.b16 %v367
      %v496 = vpack.c.b16 %v451, %v448
      %v497 = vpack.c.b16 %v452, %v449
      %v498 = vpack.c.b16 %v453, %v450
      %v499 = vpack.c.b16 %v457, %v454
      %v500 = vpack.c.b16 %v458, %v455
      %v501 = vpack.c.b16 %v459, %v456
      %v502 = vpack.c.b16 %v463, %v460
      %v503 = vpack.c.b16 %v464, %v461
      %v504 = vpack.c.b16 %v465, %v462
      %v505 = vpack.c.b16 %v469, %v466
      %v506 = vpack.c.b16 %v470, %v467
      %v507 = vpack.c.b16 %v471, %v468
      %v508 = vpack.c.b16 %v475, %v472
      %v509 = vpack.c.b16 %v476, %v473
      %v510 = vpack.c.b16 %v477, %v474
      %v511 = vpack.c.b16 %v481, %v478
      %v512 = vpack.c.b16 %v482, %v479
      %v513 = vpack.c.b16 %v483, %v480
      %v514 = vpack.c.b16 %v487, %v484
      %v515 = vpack.c.b16 %v488, %v485
      %v516 = vpack.c.b16 %v489, %v486
      %v517 = vpack.c.b16 %v493, %v490
      %v518 = vpack.c.b16 %v494, %v491
      %v519 = vpack.c.b16 %v495, %v492
      %v592 = vunpack.c.l.b16 %v368
      %v593 = vunpack.c.l.b16 %v369
      %v594 = vunpack.c.l.b16 %v370
      %v595 = vunpack.c.l.b16 %v371
      %v596 = vunpack.c.l.b16 %v372
      %v597 = vunpack.c.l.b16 %v373
      %v598 = vunpack.c.l.b16 %v374
      %v599 = vunpack.c.l.b16 %v375
      %v600 = vunpack.c.l.b16 %v376
      %v601 = vunpack.c.l.b16 %v377
      %v602 = vunpack.c.l.b16 %v378
      %v603 = vunpack.c.l.b16 %v379
      %v604 = vunpack.c.l.b16 %v380
      %v605 = vunpack.c.l.b16 %v381
      %v606 = vunpack.c.l.b16 %v382
      %v607 = vunpack.c.l.b16 %v383
      %v608 = vunpack.c.l.b16 %v384
      %v609 = vunpack.c.l.b16 %v385
      %v610 = vunpack.c.l.b16 %v386
      %v611 = vunpack.c.l.b16 %v387
      %v612 = vunpack.c.l.b16 %v388
      %v613 = vunpack.c.l.b16 %v389
      %v614 = vunpack.c.l.b16 %v390
      %v615 = vunpack.c.l.b16 %v391
      %v616 = vunpack.c.l.b16 %v392
      %v617 = vunpack.c.l.b16 %v393
      %v618 = vunpack.c.l.b16 %v394
      %v619 = vunpack.c.l.b16 %v395
      %v620 = vunpack.c.l.b16 %v396
      %v621 = vunpack.c.l.b16 %v397
      %v622 = vunpack.c.l.b16 %v398
      %v623 = vunpack.c.l.b16 %v399
      %v624 = vunpack.c.l.b16 %v400
      %v625 = vunpack.c.l.b16 %v401
      %v626 = vunpack.c.l.b16 %v402
      %v627 = vunpack.c.l.b16 %v403
      %v628 = vunpack.c.l.b16 %v404
      %v629 = vunpack.c.l.b16 %v405
      %v630 = vunpack.c.l.b16 %v406
      %v631 = vunpack.c.l.b16 %v407
      %v632 = vunpack.c.l.b16 %v408
      %v633 = vunpack.c.l.b16 %v409
      %v634 = vunpack.c.l.b16 %v410
      %v635 = vunpack.c.l.b16 %v411
      %v636 = vunpack.c.l.b16 %v412
      %v637 = vunpack.c.l.b16 %v413
      %v638 = vunpack.c.l.b16 %v414
      %v639 = vunpack.c.l.b16 %v415
      %v640 = vpack.c.b16 %v593, %v592
      %v641 = vpack.c.b16 %v595, %v594
      %v642 = vpack.c.b16 %v597, %v596
      %v643 = vpack.c.b16 %v599, %v598
      %v644 = vpack.c.b16 %v601, %v600
      %v645 = vpack.c.b16 %v603, %v602
      %v646 = vpack.c.b16 %v605, %v604
      %v647 = vpack.c.b16 %v607, %v606
      %v648 = vpack.c.b16 %v609, %v608
      %v649 = vpack.c.b16 %v611, %v610
      %v650 = vpack.c.b16 %v613, %v612
      %v651 = vpack.c.b16 %v615, %v614
      %v652 = vpack.c.b16 %v617, %v616
      %v653 = vpack.c.b16 %v619, %v618
      %v654 = vpack.c.b16 %v621, %v620
      %v655 = vpack.c.b16 %v623, %v622
      %v656 = vpack.c.b16 %v625, %v624
      %v657 = vpack.c.b16 %v627, %v626
      %v658 = vpack.c.b16 %v629, %v628
      %v659 = vpack.c.b16 %v631, %v630
      %v660 = vpack.c.b16 %v633, %v632
      %v661 = vpack.c.b16 %v635, %v634
      %v662 = vpack.c.b16 %v637, %v636
      %v663 = vpack.c.b16 %v639, %v638
      %688 = vmatpush.bf16.msra.mxu0 %v647
      %689 = vmatpush.bf16.msra.mxu0 %v646
      %690 = vmatpush.bf16.msra.mxu0 %v645
      %691 = vmatpush.bf16.msra.mxu0 %v644
      %692 = vmatpush.bf16.msra.mxu0 %v643
      %693 = vmatpush.bf16.msra.mxu0 %v642
      %694 = vmatpush.bf16.msra.mxu0 %v641
      %695 = vmatpush.bf16.msra.mxu0 %v640
      %696 = vmatmul.bf16.gmra.mxu0 %v496
      %v697 = vpop.f32.mrf.mxu0
      %v698 = vadd.f32 0.0, %v697
      %v699 = vpop.f32.mrf.mxu0
      %v700 = vadd.f32 0.0, %v699
      %701 = vmatmul.bf16.gmra.mxu0 %v499
      %v702 = vpop.f32.mrf.mxu0
      %v703 = vadd.f32 0.0, %v702
      %v704 = vpop.f32.mrf.mxu0
      %v705 = vadd.f32 0.0, %v704
      %706 = vmatmul.bf16.gmra.mxu0 %v502
      %v707 = vpop.f32.mrf.mxu0
      %v708 = vadd.f32 0.0, %v707
      %v709 = vpop.f32.mrf.mxu0
      %v710 = vadd.f32 0.0, %v709
      %711 = vmatmul.bf16.gmra.mxu0 %v505
      %v712 = vpop.f32.mrf.mxu0
      %v713 = vadd.f32 0.0, %v712
      %v714 = vpop.f32.mrf.mxu0
      %v715 = vadd.f32 0.0, %v714
      %716 = vmatmul.bf16.gmra.mxu0 %v508
      %v717 = vpop.f32.mrf.mxu0
      %v718 = vadd.f32 0.0, %v717
      %v719 = vpop.f32.mrf.mxu0
      %v720 = vadd.f32 0.0, %v719
      %721 = vmatmul.bf16.gmra.mxu0 %v511
      %v722 = vpop.f32.mrf.mxu0
      %v723 = vadd.f32 0.0, %v722
      %v724 = vpop.f32.mrf.mxu0
      %v725 = vadd.f32 0.0, %v724
      %726 = vmatmul.bf16.gmra.mxu0 %v514
      %v727 = vpop.f32.mrf.mxu0
      %v728 = vadd.f32 0.0, %v727
      %v729 = vpop.f32.mrf.mxu0
      %v730 = vadd.f32 0.0, %v729
      %731 = vmatmul.bf16.gmra.mxu0 %v517
      %v732 = vpop.f32.mrf.mxu0
      %v733 = vadd.f32 0.0, %v732
      %v734 = vpop.f32.mrf.mxu0
      %v735 = vadd.f32 0.0, %v734
      %736 = vdwg.mxu0
      %737 = vmatpush.bf16.msra.mxu0 %v655
      %738 = vmatpush.bf16.msra.mxu0 %v654
      %739 = vmatpush.bf16.msra.mxu0 %v653
      %740 = vmatpush.bf16.msra.mxu0 %v652
      %741 = vmatpush.bf16.msra.mxu0 %v651
      %742 = vmatpush.bf16.msra.mxu0 %v650
      %743 = vmatpush.bf16.msra.mxu0 %v649
      %744 = vmatpush.bf16.msra.mxu0 %v648
      %745 = vmatmul.bf16.gmra.mxu0 %v497
      %v746 = vpop.f32.mrf.mxu0
      %v747 = vadd.f32 %v698, %v746
      %v748 = vpop.f32.mrf.mxu0
      %v749 = vadd.f32 %v700, %v748
      %750 = vmatmul.bf16.gmra.mxu0 %v500
      %v751 = vpop.f32.mrf.mxu0
      %v752 = vadd.f32 %v703, %v751
      %v753 = vpop.f32.mrf.mxu0
      %v754 = vadd.f32 %v705, %v753
      %755 = vmatmul.bf16.gmra.mxu0 %v503
      %v756 = vpop.f32.mrf.mxu0
      %v757 = vadd.f32 %v708, %v756
      %v758 = vpop.f32.mrf.mxu0
      %v759 = vadd.f32 %v710, %v758
      %760 = vmatmul.bf16.gmra.mxu0 %v506
      %v761 = vpop.f32.mrf.mxu0
      %v762 = vadd.f32 %v713, %v761
      %v763 = vpop.f32.mrf.mxu0
      %v764 = vadd.f32 %v715, %v763
      %765 = vmatmul.bf16.gmra.mxu0 %v509
      %v766 = vpop.f32.mrf.mxu0
      %v767 = vadd.f32 %v718, %v766
      %v768 = vpop.f32.mrf.mxu0
      %v769 = vadd.f32 %v720, %v768
      %770 = vmatmul.bf16.gmra.mxu0 %v512
      %v771 = vpop.f32.mrf.mxu0
      %v772 = vadd.f32 %v723, %v771
      %v773 = vpop.f32.mrf.mxu0
      %v774 = vadd.f32 %v725, %v773
      %775 = vmatmul.bf16.gmra.mxu0 %v515
      %v776 = vpop.f32.mrf.mxu0
      %v777 = vadd.f32 %v728, %v776
      %v778 = vpop.f32.mrf.mxu0
      %v779 = vadd.f32 %v730, %v778
      %780 = vmatmul.bf16.gmra.mxu0 %v518
      %v781 = vpop.f32.mrf.mxu0
      %v782 = vadd.f32 %v733, %v781
      %v783 = vpop.f32.mrf.mxu0
      %v784 = vadd.f32 %v735, %v783
      %785 = vdwg.mxu0
      %786 = vmatpush.bf16.msra.mxu0 %v663
      %787 = vmatpush.bf16.msra.mxu0 %v662
      %788 = vmatpush.bf16.msra.mxu0 %v661
      %789 = vmatpush.bf16.msra.mxu0 %v660
      %790 = vmatpush.bf16.msra.mxu0 %v659
      %791 = vmatpush.bf16.msra.mxu0 %v658
      %792 = vmatpush.bf16.msra.mxu0 %v657
      %793 = vmatpush.bf16.msra.mxu0 %v656
      %794 = vmatmul.bf16.gmra.mxu0 %v498
      %v795 = vpop.f32.mrf.mxu0
      %v796 = vadd.f32 %v747, %v795
      %v797 = vpop.f32.mrf.mxu0
      %v798 = vadd.f32 %v749, %v797
      %799 = vmatmul.bf16.gmra.mxu0 %v501
      %v800 = vpop.f32.mrf.mxu0
      %v801 = vadd.f32 %v752, %v800
      %v802 = vpop.f32.mrf.mxu0
      %v803 = vadd.f32 %v754, %v802
      %804 = vmatmul.bf16.gmra.mxu0 %v504
      %v805 = vpop.f32.mrf.mxu0
      %v806 = vadd.f32 %v757, %v805
      %v807 = vpop.f32.mrf.mxu0
      %v808 = vadd.f32 %v759, %v807
      %809 = vmatmul.bf16.gmra.mxu0 %v507
      %v810 = vpop.f32.mrf.mxu0
      %v811 = vadd.f32 %v762, %v810
      %v812 = vpop.f32.mrf.mxu0
      %v813 = vadd.f32 %v764, %v812
      %814 = vmatmul.bf16.gmra.mxu0 %v510
      %v815 = vpop.f32.mrf.mxu0
      %v816 = vadd.f32 %v767, %v815
      %v817 = vpop.f32.mrf.mxu0
      %v818 = vadd.f32 %v769, %v817
      %819 = vmatmul.bf16.gmra.mxu0 %v513
      %v820 = vpop.f32.mrf.mxu0
      %v821 = vadd.f32 %v772, %v820
      %v822 = vpop.f32.mrf.mxu0
      %v823 = vadd.f32 %v774, %v822
      %824 = vmatmul.bf16.gmra.mxu0 %v516
      %v825 = vpop.f32.mrf.mxu0
      %v826 = vadd.f32 %v777, %v825
      %v827 = vpop.f32.mrf.mxu0
      %v828 = vadd.f32 %v779, %v827
      %829 = vmatmul.bf16.gmra.mxu0 %v519
      %v830 = vpop.f32.mrf.mxu0
      %v831 = vadd.f32 %v782, %v830
      %v832 = vpop.f32.mrf.mxu0
      %v833 = vadd.f32 %v784, %v832
      %834 = vdwg.mxu0
      %v835 = vld [vmem:[%s316] sm:$0x1]
      %v837 = vperm.slane %v835, 0
      %v839 = vmul.f32 %v796, %v837
      %v840 = vmul.f32 %v798, %v837
      %v841 = vmul.f32 %v801, %v837
      %v842 = vmul.f32 %v803, %v837
      %v843 = vmul.f32 %v806, %v837
      %v844 = vmul.f32 %v808, %v837
      %v845 = vmul.f32 %v811, %v837
      %v846 = vmul.f32 %v813, %v837
      %v847 = vmul.f32 %v816, %v837
      %v848 = vmul.f32 %v818, %v837
      %v849 = vmul.f32 %v821, %v837
      %v850 = vmul.f32 %v823, %v837
      %v851 = vmul.f32 %v826, %v837
      %v852 = vmul.f32 %v828, %v837
      %v853 = vmul.f32 %v831, %v837
      %v854 = vmul.f32 %v833, %v837
      %v855 = vld [vmem:[%s322] sm:$0x1]
      %v857 = vperm.slane %v855, 0
      %v859 = vadd.f32 %v839, %v857
      %v860 = vadd.f32 %v840, %v857
      %v861 = vadd.f32 %v841, %v857
      %v862 = vadd.f32 %v842, %v857
      %v863 = vadd.f32 %v843, %v857
      %v864 = vadd.f32 %v844, %v857
      %v865 = vadd.f32 %v845, %v857
      %v866 = vadd.f32 %v846, %v857
      %v867 = vadd.f32 %v847, %v857
      %v868 = vadd.f32 %v848, %v857
      %v869 = vadd.f32 %v849, %v857
      %v870 = vadd.f32 %v850, %v857
      %v871 = vadd.f32 %v851, %v857
      %v872 = vadd.f32 %v852, %v857
      %v873 = vadd.f32 %v853, %v857
      %v874 = vadd.f32 %v854, %v857
      %v875 = vmax.f32 %v859, 0.0
      %v876 = vmax.f32 %v860, 0.0
      %v877 = vmax.f32 %v861, 0.0
      %v878 = vmax.f32 %v862, 0.0
      %v879 = vmax.f32 %v863, 0.0
      %v880 = vmax.f32 %v864, 0.0
      %v881 = vmax.f32 %v865, 0.0
      %v882 = vmax.f32 %v866, 0.0
      %v883 = vmax.f32 %v867, 0.0
      %v884 = vmax.f32 %v868, 0.0
      %v885 = vmax.f32 %v869, 0.0
      %v886 = vmax.f32 %v870, 0.0
      %v887 = vmax.f32 %v871, 0.0
      %v888 = vmax.f32 %v872, 0.0
      %v889 = vmax.f32 %v873, 0.0
      %v890 = vmax.f32 %v874, 0.0
      %891 = vst [vmem:[%s334] sm:$0xff] %v875
      %892 = vst [vmem:[%s334 + $0x8] sm:$0xff] %v876
      %893 = vst [vmem:[%s334 + $0x10] sm:$0xff] %v877
      %894 = vst [vmem:[%s334 + $0x18] sm:$0xff] %v878
      %895 = vst [vmem:[%s334 + $0x20] sm:$0xff] %v879
      %896 = vst [vmem:[%s334 + $0x28] sm:$0xff] %v880
      %897 = vst [vmem:[%s334 + $0x30] sm:$0xff] %v881
      %898 = vst [vmem:[%s334 + $0x38] sm:$0xff] %v882
      %899 = vst [vmem:[%s334 + $0x40] sm:$0xff] %v883
      %900 = vst [vmem:[%s334 + $0x48] sm:$0xff] %v884
      %901 = vst [vmem:[%s334 + $0x50] sm:$0xff] %v885
      %902 = vst [vmem:[%s334 + $0x58] sm:$0xff] %v886
      %903 = vst [vmem:[%s334 + $0x60] sm:$0xff] %v887
      %904 = vst [vmem:[%s334 + $0x68] sm:$0xff] %v888
      %905 = vst [vmem:[%s334 + $0x70] sm:$0xff] %v889
      %906 = vst [vmem:[%s334 + $0x78] sm:$0xff] %v890
      %s907 = smul.u32 16, %s21
      %p908 = scmp.lt.s32.totalorder %s20, 1
      %s909 = scalar_select %p908, %s20, 1
      %p910 = scmp.lt.s32.totalorder %s907, 15
      %s911 = scalar_select %p910, %s907, 15
      %p912 = scmp.lt.s32.totalorder %s22, 0
      %s913 = scalar_select %p912, %s22, 0
      %s914 = sadd.s32 %s913, %s911
      %s915 = smul.addr %s909, 16
      %s916 = sadd.s32 %s914, %s915
      %s917 = smul.addr %s916, 8
      %s918 = scalar_lea.vmem %s4, %s917
      // Predicated region
      $region37: #{run.11} parent=35 // pred_check
        %p919 = pneg %p168
      $region38: #{run.11} parent=35 // pred_check_branch
        %921 = sbr.rel (%p919) target = $region40
      $region39: #{run.11} parent=35 // pred_region
        %s922 = smul.u32 16, %s21
      $region40: #{run.11} parent=35 // pred_fallthru
        _
    $region36: #{run.11} parent=5 // pred_fallthru
      _
    %p923 = scmp.le.s32.totalorder 2, %s10
    // Predicated region
    $region41: #{run.11} parent=5 // pred_check
      %p924 = pneg %p923
    $region42: #{run.11} parent=5 // pred_check_branch
      %926 = sbr.rel (%p924) target = $region44
    $region43: #{run.11} parent=5 // pred_region
      %s927 = ssub.s32 %s10, 2
      // Predicated region
      $region45: #{run.11} parent=43 // pred_check
        %p928 = pneg %p174
      $region46: #{run.11} parent=43 // pred_check_branch
        %930 = sbr.rel (%p928) target = $region48
      $region47: #{run.11} parent=43 // pred_region
        %s931 = smul.u32 16, %s24
        %p932 = scmp.lt.s32.totalorder %s23, 1
        %s933 = scalar_select %p932, %s23, 1
        %p934 = scmp.lt.s32.totalorder %s931, 15
        %s935 = scalar_select %p934, %s931, 15
        %p936 = scmp.lt.s32.totalorder %s25, 0
        %s937 = scalar_select %p936, %s25, 0
        %s938 = sadd.s32 %s937, %s935
        %s939 = smul.addr %s933, 16
        %s940 = sadd.s32 %s938, %s939
        %s941 = smul.addr %s940, 8
        %s942 = scalar_lea.vmem %s4, %s941
      $region48: #{run.11} parent=43 // pred_fallthru
        _
    $region44: #{run.11} parent=5 // pred_fallthru
      _
  $region6: #{run.11} parent=0 // loop_footer
    %s14 = sadd.s32 1, %s10
  $region7: #{run.11} parent=0 // loop_footer_branch
    %9 = sbr.rel target = $region3
  $region8: #{run.11} parent=0 // loop_exit
    _

// kernel: run.12
$region0: #{run.12}
  #allocation0 [shape = 'u32[]', space=smem, size = 0x4, offset = 0x4, fixed_abs, tag = 'smem constant byte address 0x4 - core index']
  #allocation1 [shape = 'u32[72,128]{1,0:T(1,128)}', space=vmem, size = 0x9000, scoped, tag = 'internal scratch']
  %s0 = inlined_call_operand.vmem [shape: bf16[1,128,128], index: 0, kind: input, shape index: {}]
  %s1 = inlined_call_operand.vmem [shape: bf16[1,128,128], index: 1, kind: input, shape index: {}]
  %s2 = inlined_call_operand.vmem [shape: f32[1,1,128], index: 2, kind: input, shape index: {}]
  %s3 = inlined_call_operand.vmem [shape: f32[1,1,128], index: 3, kind: input, shape index: {}]
  %s4 = inlined_call_operand.vmem [shape: f32[1,128,128], index: 4, kind: output, shape index: {}]
  %s5 = sld [smem:[#allocation0]]
  $region26: #{run.12} parent=0
    _
  %s7 = ssub.s32 1, %s5
  %s8 = scalar_select 0, %s7, %s5
  // Predicated region
  $region2: #{run.12} parent=0 // pred_check
    _
  $region3: #{run.12} parent=0 // pred_check_branch
    %10 = sbr.rel (0) target = $region5
  $region4: #{run.12} parent=0 // pred_region
    _
  $region5: #{run.12} parent=0 // pred_fallthru
    _
  // Predicated region
  $region6: #{run.12} parent=0 // pred_check
    _
  $region7: #{run.12} parent=0 // pred_check_branch
    %12 = sbr.rel (0) target = $region9
  $region8: #{run.12} parent=0 // pred_region
    _
  $region9: #{run.12} parent=0 // pred_fallthru
    _
  // Predicated region
  $region10: #{run.12} parent=0 // pred_check
    _
  $region11: #{run.12} parent=0 // pred_check_branch
    %14 = sbr.rel (0) target = $region13
  $region12: #{run.12} parent=0 // pred_region
    _
  $region13: #{run.12} parent=0 // pred_fallthru
    _
  // Predicated region
  $region14: #{run.12} parent=0 // pred_check
    _
  $region15: #{run.12} parent=0 // pred_check_branch
    %16 = sbr.rel (0) target = $region17
  $region16: #{run.12} parent=0 // pred_region
    _
  $region17: #{run.12} parent=0 // pred_fallthru
    _
  %v17 = vld [vmem:[%s0] sm:$0xf]
  %v18 = vld [vmem:[%s0 + $0x4] sm:$0xf]
  %v19 = vld [vmem:[%s0 + $0x8] sm:$0xf]
  %v20 = vld [vmem:[%s0 + $0xc] sm:$0xf]
  %v21 = vld [vmem:[%s0 + $0x10] sm:$0xf]
  %v22 = vld [vmem:[%s0 + $0x14] sm:$0xf]
  %v23 = vld [vmem:[%s0 + $0x18] sm:$0xf]
  %v24 = vld [vmem:[%s0 + $0x1c] sm:$0xf]
  %v25 = vld [vmem:[%s0 + $0x20] sm:$0xf]
  %v26 = vld [vmem:[%s0 + $0x24] sm:$0xf]
  %v27 = vld [vmem:[%s0 + $0x28] sm:$0xf]
  %v28 = vld [vmem:[%s0 + $0x2c] sm:$0xf]
  %v29 = vld [vmem:[%s0 + $0x30] sm:$0xf]
  %v30 = vld [vmem:[%s0 + $0x34] sm:$0xf]
  %v31 = vld [vmem:[%s0 + $0x38] sm:$0xf]
  %v32 = vld [vmem:[%s0 + $0x3c] sm:$0xf]
  %v33 = vld [vmem:[%s1] sm:$0xf]
  %v34 = vld [vmem:[%s1 + $0x4] sm:$0xf]
  %v35 = vld [vmem:[%s1 + $0x8] sm:$0xf]
  %v36 = vld [vmem:[%s1 + $0xc] sm:$0xf]
  %v37 = vld [vmem:[%s1 + $0x10] sm:$0xf]
  %v38 = vld [vmem:[%s1 + $0x14] sm:$0xf]
  %v39 = vld [vmem:[%s1 + $0x18] sm:$0xf]
  %v40 = vld [vmem:[%s1 + $0x1c] sm:$0xf]
  %v41 = vld [vmem:[%s1 + $0x20] sm:$0xf]
  %v42 = vld [vmem:[%s1 + $0x24] sm:$0xf]
  %v43 = vld [vmem:[%s1 + $0x28] sm:$0xf]
  %v44 = vld [vmem:[%s1 + $0x2c] sm:$0xf]
  %v45 = vld [vmem:[%s1 + $0x30] sm:$0xf]
  %v46 = vld [vmem:[%s1 + $0x34] sm:$0xf]
  %v47 = vld [vmem:[%s1 + $0x38] sm:$0xf]
  %v48 = vld [vmem:[%s1 + $0x3c] sm:$0xf]
  %v65 = vunpack.c.l.b16 %v17
  %v66 = vunpack.c.l.b16 %v18
  %v67 = vunpack.c.l.b16 %v19
  %v68 = vunpack.c.l.b16 %v20
  %v69 = vunpack.c.l.b16 %v21
  %v70 = vunpack.c.l.b16 %v22
  %v71 = vunpack.c.l.b16 %v23
  %v72 = vunpack.c.l.b16 %v24
  %v73 = vunpack.c.l.b16 %v25
  %v74 = vunpack.c.l.b16 %v26
  %v75 = vunpack.c.l.b16 %v27
  %v76 = vunpack.c.l.b16 %v28
  %v77 = vunpack.c.l.b16 %v29
  %v78 = vunpack.c.l.b16 %v30
  %v79 = vunpack.c.l.b16 %v31
  %v80 = vunpack.c.l.b16 %v32
  %v81 = vpack.c.b16 %v66, %v65
  %v82 = vpack.c.b16 %v68, %v67
  %v83 = vpack.c.b16 %v70, %v69
  %v84 = vpack.c.b16 %v72, %v71
  %v85 = vpack.c.b16 %v74, %v73
  %v86 = vpack.c.b16 %v76, %v75
  %v87 = vpack.c.b16 %v78, %v77
  %v88 = vpack.c.b16 %v80, %v79
  %v113 = vunpack.c.l.b16 %v33
  %v114 = vunpack.c.l.b16 %v34
  %v115 = vunpack.c.l.b16 %v35
  %v116 = vunpack.c.l.b16 %v36
  %v117 = vunpack.c.l.b16 %v37
  %v118 = vunpack.c.l.b16 %v38
  %v119 = vunpack.c.l.b16 %v39
  %v120 = vunpack.c.l.b16 %v40
  %v121 = vunpack.c.l.b16 %v41
  %v122 = vunpack.c.l.b16 %v42
  %v123 = vunpack.c.l.b16 %v43
  %v124 = vunpack.c.l.b16 %v44
  %v125 = vunpack.c.l.b16 %v45
  %v126 = vunpack.c.l.b16 %v46
  %v127 = vunpack.c.l.b16 %v47
  %v128 = vunpack.c.l.b16 %v48
  %v129 = vpack.c.b16 %v114, %v113
  %v130 = vpack.c.b16 %v116, %v115
  %v131 = vpack.c.b16 %v118, %v117
  %v132 = vpack.c.b16 %v120, %v119
  %v133 = vpack.c.b16 %v122, %v121
  %v134 = vpack.c.b16 %v124, %v123
  %v135 = vpack.c.b16 %v126, %v125
  %v136 = vpack.c.b16 %v128, %v127
  %145 = vmatpush.bf16.msra.mxu0 %v136
  %146 = vmatpush.bf16.msra.mxu0 %v135
  %147 = vmatpush.bf16.msra.mxu0 %v134
  %148 = vmatpush.bf16.msra.mxu0 %v133
  %149 = vmatpush.bf16.msra.mxu0 %v132
  %150 = vmatpush.bf16.msra.mxu0 %v131
  %151 = vmatpush.bf16.msra.mxu0 %v130
  %152 = vmatpush.bf16.msra.mxu0 %v129
  %153 = vmatmul.bf16.gmra.mxu0 %v81
  %v154 = vpop.f32.mrf.mxu0
  %v155 = vadd.f32 0.0, %v154
  %v156 = vpop.f32.mrf.mxu0
  %v157 = vadd.f32 0.0, %v156
  %158 = vmatmul.bf16.gmra.mxu0 %v82
  %v159 = vpop.f32.mrf.mxu0
  %v160 = vadd.f32 0.0, %v159
  %v161 = vpop.f32.mrf.mxu0
  %v162 = vadd.f32 0.0, %v161
  %163 = vmatmul.bf16.gmra.mxu0 %v83
  %v164 = vpop.f32.mrf.mxu0
  %v165 = vadd.f32 0.0, %v164
  %v166 = vpop.f32.mrf.mxu0
  %v167 = vadd.f32 0.0, %v166
  %168 = vmatmul.bf16.gmra.mxu0 %v84
  %v169 = vpop.f32.mrf.mxu0
  %v170 = vadd.f32 0.0, %v169
  %v171 = vpop.f32.mrf.mxu0
  %v172 = vadd.f32 0.0, %v171
  %173 = vmatmul.bf16.gmra.mxu0 %v85
  %v174 = vpop.f32.mrf.mxu0
  %v175 = vadd.f32 0.0, %v174
  %v176 = vpop.f32.mrf.mxu0
  %v177 = vadd.f32 0.0, %v176
  %178 = vmatmul.bf16.gmra.mxu0 %v86
  %v179 = vpop.f32.mrf.mxu0
  %v180 = vadd.f32 0.0, %v179
  %v181 = vpop.f32.mrf.mxu0
  %v182 = vadd.f32 0.0, %v181
  %183 = vmatmul.bf16.gmra.mxu0 %v87
  %v184 = vpop.f32.mrf.mxu0
  %v185 = vadd.f32 0.0, %v184
  %v186 = vpop.f32.mrf.mxu0
  %v187 = vadd.f32 0.0, %v186
  %188 = vmatmul.bf16.gmra.mxu0 %v88
  %v189 = vpop.f32.mrf.mxu0
  %v190 = vadd.f32 0.0, %v189
  %v191 = vpop.f32.mrf.mxu0
  %v192 = vadd.f32 0.0, %v191
  %193 = vdwg.mxu0
  %v194 = vld [vmem:[%s2] sm:$0x1]
  %v196 = vperm.slane %v194, 0
  %v198 = vmul.f32 %v155, %v196
  %v199 = vmul.f32 %v157, %v196
  %v200 = vmul.f32 %v160, %v196
  %v201 = vmul.f32 %v162, %v196
  %v202 = vmul.f32 %v165, %v196
  %v203 = vmul.f32 %v167, %v196
  %v204 = vmul.f32 %v170, %v196
  %v205 = vmul.f32 %v172, %v196
  %v206 = vmul.f32 %v175, %v196
  %v207 = vmul.f32 %v177, %v196
  %v208 = vmul.f32 %v180, %v196
  %v209 = vmul.f32 %v182, %v196
  %v210 = vmul.f32 %v185, %v196
  %v211 = vmul.f32 %v187, %v196
  %v212 = vmul.f32 %v190, %v196
  %v213 = vmul.f32 %v192, %v196
  %v214 = vld [vmem:[%s3] sm:$0x1]
  %v216 = vperm.slane %v214, 0
  %v218 = vadd.f32 %v198, %v216
  %v219 = vadd.f32 %v199, %v216
  %v220 = vadd.f32 %v200, %v216
  %v221 = vadd.f32 %v201, %v216
  %v222 = vadd.f32 %v202, %v216
  %v223 = vadd.f32 %v203, %v216
  %v224 = vadd.f32 %v204, %v216
  %v225 = vadd.f32 %v205, %v216
  %v226 = vadd.f32 %v206, %v216
  %v227 = vadd.f32 %v207, %v216
  %v228 = vadd.f32 %v208, %v216
  %v229 = vadd.f32 %v209, %v216
  %v230 = vadd.f32 %v210, %v216
  %v231 = vadd.f32 %v211, %v216
  %v232 = vadd.f32 %v212, %v216
  %v233 = vadd.f32 %v213, %v216
  %234 = vst [vmem:[%s4] sm:$0xff] %v218
  %235 = vst [vmem:[%s4 + $0x8] sm:$0xff] %v219
  %236 = vst [vmem:[%s4 + $0x10] sm:$0xff] %v220
  %237 = vst [vmem:[%s4 + $0x18] sm:$0xff] %v221
  %238 = vst [vmem:[%s4 + $0x20] sm:$0xff] %v222
  %239 = vst [vmem:[%s4 + $0x28] sm:$0xff] %v223
  %240 = vst [vmem:[%s4 + $0x30] sm:$0xff] %v224
  %241 = vst [vmem:[%s4 + $0x38] sm:$0xff] %v225
  %242 = vst [vmem:[%s4 + $0x40] sm:$0xff] %v226
  %243 = vst [vmem:[%s4 + $0x48] sm:$0xff] %v227
  %244 = vst [vmem:[%s4 + $0x50] sm:$0xff] %v228
  %245 = vst [vmem:[%s4 + $0x58] sm:$0xff] %v229
  %246 = vst [vmem:[%s4 + $0x60] sm:$0xff] %v230
  %247 = vst [vmem:[%s4 + $0x68] sm:$0xff] %v231
  %248 = vst [vmem:[%s4 + $0x70] sm:$0xff] %v232
  %249 = vst [vmem:[%s4 + $0x78] sm:$0xff] %v233
  // Predicated region
  $region18: #{run.12} parent=0 // pred_check
    _
  $region19: #{run.12} parent=0 // pred_check_branch
    %251 = sbr.rel (0) target = $region21
  $region20: #{run.12} parent=0 // pred_region
    _
  $region21: #{run.12} parent=0 // pred_fallthru
    _
  // Predicated region
  $region22: #{run.12} parent=0 // pred_check
    _
  $region23: #{run.12} parent=0 // pred_check_branch
    %253 = sbr.rel (0) target = $region25
  $region24: #{run.12} parent=0 // pred_region
    _
  $region25: #{run.12} parent=0 // pred_fallthru
    _

// kernel: run.13
$region0: #{run.13}
  #allocation0 [shape = 'u32[]', space=smem, size = 0x4, offset = 0x4, fixed_abs, tag = 'smem constant byte address 0x4 - core index']
  #allocation1 [shape = 'u32[72,128]{1,0:T(1,128)}', space=vmem, size = 0x9000, scoped, tag = 'internal scratch']
  %s0 = inlined_call_operand.vmem [shape: bf16[1,128,128], index: 0, kind: input, shape index: {}]
  %s1 = inlined_call_operand.vmem [shape: bf16[1,128,128], index: 1, kind: input, shape index: {}]
  %s2 = inlined_call_operand.vmem [shape: f32[1,1,128], index: 2, kind: input, shape index: {}]
  %s3 = inlined_call_operand.vmem [shape: f32[1,1,128], index: 3, kind: input, shape index: {}]
  %s4 = inlined_call_operand.vmem [shape: f32[1,128,128], index: 4, kind: input, shape index: {}]
  %s5 = inlined_call_operand.hbm [shape: f32[1,128,128], index: 5, kind: output, shape index: {}]
  %s6 = sld [smem:[#allocation0]]
  $region30: #{run.13} parent=0
    _
  %s8 = ssub.s32 1, %s6
  %s9 = scalar_select 0, %s8, %s6
  $region1: #{run.13} parent=0
    #allocation2 [shape = 'u8[65536]{0}', space=vmem, size = 0x10000, scoped, tag = 'output window, operand 0, single buffered']
    #allocation3 [shape = 's32[1]{0}', space=sflag, size = 0x4, scoped, tag = 'scoped memory for run.13']
    %10 = vsyncpa [#allocation3], 0
    // Predicated region
    $region2: #{run.13} parent=1 // pred_check
      _
    $region3: #{run.13} parent=1 // pred_check_branch
      %12 = sbr.rel (0) target = $region5
    $region4: #{run.13} parent=1 // pred_region
      _
    $region5: #{run.13} parent=1 // pred_fallthru
      _
    // Predicated region
    $region6: #{run.13} parent=1 // pred_check
      _
    $region7: #{run.13} parent=1 // pred_check_branch
      %14 = sbr.rel (0) target = $region9
    $region8: #{run.13} parent=1 // pred_region
      _
    $region9: #{run.13} parent=1 // pred_fallthru
      _
    // Predicated region
    $region10: #{run.13} parent=1 // pred_check
      _
    $region11: #{run.13} parent=1 // pred_check_branch
      %16 = sbr.rel (0) target = $region13
    $region12: #{run.13} parent=1 // pred_region
      _
    $region13: #{run.13} parent=1 // pred_fallthru
      _
    // Predicated region
    $region14: #{run.13} parent=1 // pred_check
      _
    $region15: #{run.13} parent=1 // pred_check_branch
      %18 = sbr.rel (0) target = $region17
    $region16: #{run.13} parent=1 // pred_region
      _
    $region17: #{run.13} parent=1 // pred_fallthru
      _
    // Predicated region
    $region18: #{run.13} parent=1 // pred_check
      _
    $region19: #{run.13} parent=1 // pred_check_branch
      %20 = sbr.rel (0) target = $region21
    $region20: #{run.13} parent=1 // pred_region
      _
    $region21: #{run.13} parent=1 // pred_fallthru
      _
    %v21 = vld [vmem:[%s0] sm:$0xf]
    %v22 = vld [vmem:[%s0 + $0x4] sm:$0xf]
    %v23 = vld [vmem:[%s0 + $0x8] sm:$0xf]
    %v24 = vld [vmem:[%s0 + $0xc] sm:$0xf]
    %v25 = vld [vmem:[%s0 + $0x10] sm:$0xf]
    %v26 = vld [vmem:[%s0 + $0x14] sm:$0xf]
    %v27 = vld [vmem:[%s0 + $0x18] sm:$0xf]
    %v28 = vld [vmem:[%s0 + $0x1c] sm:$0xf]
    %v29 = vld [vmem:[%s0 + $0x20] sm:$0xf]
    %v30 = vld [vmem:[%s0 + $0x24] sm:$0xf]
    %v31 = vld [vmem:[%s0 + $0x28] sm:$0xf]
    %v32 = vld [vmem:[%s0 + $0x2c] sm:$0xf]
    %v33 = vld [vmem:[%s0 + $0x30] sm:$0xf]
    %v34 = vld [vmem:[%s0 + $0x34] sm:$0xf]
    %v35 = vld [vmem:[%s0 + $0x38] sm:$0xf]
    %v36 = vld [vmem:[%s0 + $0x3c] sm:$0xf]
    %v37 = vld [vmem:[%s1] sm:$0xf]
    %v38 = vld [vmem:[%s1 + $0x4] sm:$0xf]
    %v39 = vld [vmem:[%s1 + $0x8] sm:$0xf]
    %v40 = vld [vmem:[%s1 + $0xc] sm:$0xf]
    %v41 = vld [vmem:[%s1 + $0x10] sm:$0xf]
    %v42 = vld [vmem:[%s1 + $0x14] sm:$0xf]
    %v43 = vld [vmem:[%s1 + $0x18] sm:$0xf]
    %v44 = vld [vmem:[%s1 + $0x1c] sm:$0xf]
    %v45 = vld [vmem:[%s1 + $0x20] sm:$0xf]
    %v46 = vld [vmem:[%s1 + $0x24] sm:$0xf]
    %v47 = vld [vmem:[%s1 + $0x28] sm:$0xf]
    %v48 = vld [vmem:[%s1 + $0x2c] sm:$0xf]
    %v49 = vld [vmem:[%s1 + $0x30] sm:$0xf]
    %v50 = vld [vmem:[%s1 + $0x34] sm:$0xf]
    %v51 = vld [vmem:[%s1 + $0x38] sm:$0xf]
    %v52 = vld [vmem:[%s1 + $0x3c] sm:$0xf]
    %v69 = vunpack.c.l.b16 %v21
    %v70 = vunpack.c.l.b16 %v22
    %v71 = vunpack.c.l.b16 %v23
    %v72 = vunpack.c.l.b16 %v24
    %v73 = vunpack.c.l.b16 %v25
    %v74 = vunpack.c.l.b16 %v26
    %v75 = vunpack.c.l.b16 %v27
    %v76 = vunpack.c.l.b16 %v28
    %v77 = vunpack.c.l.b16 %v29
    %v78 = vunpack.c.l.b16 %v30
    %v79 = vunpack.c.l.b16 %v31
    %v80 = vunpack.c.l.b16 %v32
    %v81 = vunpack.c.l.b16 %v33
    %v82 = vunpack.c.l.b16 %v34
    %v83 = vunpack.c.l.b16 %v35
    %v84 = vunpack.c.l.b16 %v36
    %v85 = vpack.c.b16 %v70, %v69
    %v86 = vpack.c.b16 %v72, %v71
    %v87 = vpack.c.b16 %v74, %v73
    %v88 = vpack.c.b16 %v76, %v75
    %v89 = vpack.c.b16 %v78, %v77
    %v90 = vpack.c.b16 %v80, %v79
    %v91 = vpack.c.b16 %v82, %v81
    %v92 = vpack.c.b16 %v84, %v83
    %v117 = vunpack.c.l.b16 %v37
    %v118 = vunpack.c.l.b16 %v38
    %v119 = vunpack.c.l.b16 %v39
    %v120 = vunpack.c.l.b16 %v40
    %v121 = vunpack.c.l.b16 %v41
    %v122 = vunpack.c.l.b16 %v42
    %v123 = vunpack.c.l.b16 %v43
    %v124 = vunpack.c.l.b16 %v44
    %v125 = vunpack.c.l.b16 %v45
    %v126 = vunpack.c.l.b16 %v46
    %v127 = vunpack.c.l.b16 %v47
    %v128 = vunpack.c.l.b16 %v48
    %v129 = vunpack.c.l.b16 %v49
    %v130 = vunpack.c.l.b16 %v50
    %v131 = vunpack.c.l.b16 %v51
    %v132 = vunpack.c.l.b16 %v52
    %v133 = vpack.c.b16 %v118, %v117
    %v134 = vpack.c.b16 %v120, %v119
    %v135 = vpack.c.b16 %v122, %v121
    %v136 = vpack.c.b16 %v124, %v123
    %v137 = vpack.c.b16 %v126, %v125
    %v138 = vpack.c.b16 %v128, %v127
    %v139 = vpack.c.b16 %v130, %v129
    %v140 = vpack.c.b16 %v132, %v131
    %149 = vmatpush.bf16.msra.mxu0 %v140
    %150 = vmatpush.bf16.msra.mxu0 %v139
    %151 = vmatpush.bf16.msra.mxu0 %v138
    %152 = vmatpush.bf16.msra.mxu0 %v137
    %153 = vmatpush.bf16.msra.mxu0 %v136
    %154 = vmatpush.bf16.msra.mxu0 %v135
    %155 = vmatpush.bf16.msra.mxu0 %v134
    %156 = vmatpush.bf16.msra.mxu0 %v133
    %157 = vmatmul.bf16.gmra.mxu0 %v85
    %v158 = vpop.f32.mrf.mxu0
    %v159 = vadd.f32 0.0, %v158
    %v160 = vpop.f32.mrf.mxu0
    %v161 = vadd.f32 0.0, %v160
    %162 = vmatmul.bf16.gmra.mxu0 %v86
    %v163 = vpop.f32.mrf.mxu0
    %v164 = vadd.f32 0.0, %v163
    %v165 = vpop.f32.mrf.mxu0
    %v166 = vadd.f32 0.0, %v165
    %167 = vmatmul.bf16.gmra.mxu0 %v87
    %v168 = vpop.f32.mrf.mxu0
    %v169 = vadd.f32 0.0, %v168
    %v170 = vpop.f32.mrf.mxu0
    %v171 = vadd.f32 0.0, %v170
    %172 = vmatmul.bf16.gmra.mxu0 %v88
    %v173 = vpop.f32.mrf.mxu0
    %v174 = vadd.f32 0.0, %v173
    %v175 = vpop.f32.mrf.mxu0
    %v176 = vadd.f32 0.0, %v175
    %177 = vmatmul.bf16.gmra.mxu0 %v89
    %v178 = vpop.f32.mrf.mxu0
    %v179 = vadd.f32 0.0, %v178
    %v180 = vpop.f32.mrf.mxu0
    %v181 = vadd.f32 0.0, %v180
    %182 = vmatmul.bf16.gmra.mxu0 %v90
    %v183 = vpop.f32.mrf.mxu0
    %v184 = vadd.f32 0.0, %v183
    %v185 = vpop.f32.mrf.mxu0
    %v186 = vadd.f32 0.0, %v185
    %187 = vmatmul.bf16.gmra.mxu0 %v91
    %v188 = vpop.f32.mrf.mxu0
    %v189 = vadd.f32 0.0, %v188
    %v190 = vpop.f32.mrf.mxu0
    %v191 = vadd.f32 0.0, %v190
    %192 = vmatmul.bf16.gmra.mxu0 %v92
    %v193 = vpop.f32.mrf.mxu0
    %v194 = vadd.f32 0.0, %v193
    %v195 = vpop.f32.mrf.mxu0
    %v196 = vadd.f32 0.0, %v195
    %197 = vdwg.mxu0
    %v198 = vld [vmem:[%s2] sm:$0x1]
    %v200 = vperm.slane %v198, 0
    %v202 = vmul.f32 %v159, %v200
    %v203 = vmul.f32 %v161, %v200
    %v204 = vmul.f32 %v164, %v200
    %v205 = vmul.f32 %v166, %v200
    %v206 = vmul.f32 %v169, %v200
    %v207 = vmul.f32 %v171, %v200
    %v208 = vmul.f32 %v174, %v200
    %v209 = vmul.f32 %v176, %v200
    %v210 = vmul.f32 %v179, %v200
    %v211 = vmul.f32 %v181, %v200
    %v212 = vmul.f32 %v184, %v200
    %v213 = vmul.f32 %v186, %v200
    %v214 = vmul.f32 %v189, %v200
    %v215 = vmul.f32 %v191, %v200
    %v216 = vmul.f32 %v194, %v200
    %v217 = vmul.f32 %v196, %v200
    %v218 = vld [vmem:[%s3] sm:$0x1]
    %v220 = vperm.slane %v218, 0
    %v222 = vadd.f32 %v202, %v220
    %v223 = vadd.f32 %v203, %v220
    %v224 = vadd.f32 %v204, %v220
    %v225 = vadd.f32 %v205, %v220
    %v226 = vadd.f32 %v206, %v220
    %v227 = vadd.f32 %v207, %v220
    %v228 = vadd.f32 %v208, %v220
    %v229 = vadd.f32 %v209, %v220
    %v230 = vadd.f32 %v210, %v220
    %v231 = vadd.f32 %v211, %v220
    %v232 = vadd.f32 %v212, %v220
    %v233 = vadd.f32 %v213, %v220
    %v234 = vadd.f32 %v214, %v220
    %v235 = vadd.f32 %v215, %v220
    %v236 = vadd.f32 %v216, %v220
    %v237 = vadd.f32 %v217, %v220
    %v238 = vld [vmem:[%s4] sm:$0xff]
    %v239 = vld [vmem:[%s4 + $0x8] sm:$0xff]
    %v240 = vld [vmem:[%s4 + $0x10] sm:$0xff]
    %v241 = vld [vmem:[%s4 + $0x18] sm:$0xff]
    %v242 = vld [vmem:[%s4 + $0x20] sm:$0xff]
    %v243 = vld [vmem:[%s4 + $0x28] sm:$0xff]
    %v244 = vld [vmem:[%s4 + $0x30] sm:$0xff]
    %v245 = vld [vmem:[%s4 + $0x38] sm:$0xff]
    %v246 = vld [vmem:[%s4 + $0x40] sm:$0xff]
    %v247 = vld [vmem:[%s4 + $0x48] sm:$0xff]
    %v248 = vld [vmem:[%s4 + $0x50] sm:$0xff]
    %v249 = vld [vmem:[%s4 + $0x58] sm:$0xff]
    %v250 = vld [vmem:[%s4 + $0x60] sm:$0xff]
    %v251 = vld [vmem:[%s4 + $0x68] sm:$0xff]
    %v252 = vld [vmem:[%s4 + $0x70] sm:$0xff]
    %v253 = vld [vmem:[%s4 + $0x78] sm:$0xff]
    %v254 = vadd.f32 %v222, %v238
    %v255 = vadd.f32 %v223, %v239
    %v256 = vadd.f32 %v224, %v240
    %v257 = vadd.f32 %v225, %v241
    %v258 = vadd.f32 %v226, %v242
    %v259 = vadd.f32 %v227, %v243
    %v260 = vadd.f32 %v228, %v244
    %v261 = vadd.f32 %v229, %v245
    %v262 = vadd.f32 %v230, %v246
    %v263 = vadd.f32 %v231, %v247
    %v264 = vadd.f32 %v232, %v248
    %v265 = vadd.f32 %v233, %v249
    %v266 = vadd.f32 %v234, %v250
    %v267 = vadd.f32 %v235, %v251
    %v268 = vadd.f32 %v236, %v252
    %v269 = vadd.f32 %v237, %v253
    %v270 = vmax.f32 %v254, 0.0
    %v271 = vmax.f32 %v255, 0.0
    %v272 = vmax.f32 %v256, 0.0
    %v273 = vmax.f32 %v257, 0.0
    %v274 = vmax.f32 %v258, 0.0
    %v275 = vmax.f32 %v259, 0.0
    %v276 = vmax.f32 %v260, 0.0
    %v277 = vmax.f32 %v261, 0.0
    %v278 = vmax.f32 %v262, 0.0
    %v279 = vmax.f32 %v263, 0.0
    %v280 = vmax.f32 %v264, 0.0
    %v281 = vmax.f32 %v265, 0.0
    %v282 = vmax.f32 %v266, 0.0
    %v283 = vmax.f32 %v267, 0.0
    %v284 = vmax.f32 %v268, 0.0
    %v285 = vmax.f32 %v269, 0.0
    %286 = vst [vmem:[#allocation2] sm:$0xff] %v270
    %287 = vst [vmem:[#allocation2 + $0x8] sm:$0xff] %v271
    %288 = vst [vmem:[#allocation2 + $0x10] sm:$0xff] %v272
    %289 = vst [vmem:[#allocation2 + $0x18] sm:$0xff] %v273
    %290 = vst [vmem:[#allocation2 + $0x20] sm:$0xff] %v274
    %291 = vst [vmem:[#allocation2 + $0x28] sm:$0xff] %v275
    %292 = vst [vmem:[#allocation2 + $0x30] sm:$0xff] %v276
    %293 = vst [vmem:[#allocation2 + $0x38] sm:$0xff] %v277
    %294 = vst [vmem:[#allocation2 + $0x40] sm:$0xff] %v278
    %295 = vst [vmem:[#allocation2 + $0x48] sm:$0xff] %v279
    %296 = vst [vmem:[#allocation2 + $0x50] sm:$0xff] %v280
    %297 = vst [vmem:[#allocation2 + $0x58] sm:$0xff] %v281
    %298 = vst [vmem:[#allocation2 + $0x60] sm:$0xff] %v282
    %299 = vst [vmem:[#allocation2 + $0x68] sm:$0xff] %v283
    %300 = vst [vmem:[#allocation2 + $0x70] sm:$0xff] %v284
    %301 = vst [vmem:[#allocation2 + $0x78] sm:$0xff] %v285
    // Predicated region
    $region22: #{run.13} parent=1 // pred_check
      _
    $region23: #{run.13} parent=1 // pred_check_branch
      %303 = sbr.rel (0) target = $region25
    $region24: #{run.13} parent=1 // pred_region
      %305 = vsyncadd [#allocation3], 0
      %s306 = sshll.u32 [#allocation2], 4
      %s307 = int_to_ptr.vmem [resolvable:$true] %s306
      %s308 = sshll.u32 %s5, 4
      %s309 = int_to_ptr.hbm [resolvable:$true] %s308
      %314 = dma.vmem_to_hbm [thread:$0]  %s307, 2048, %s309, [#allocation3], 128, 128, 8
    $region25: #{run.13} parent=1 // pred_fallthru
      _
    // Predicated region
    $region26: #{run.13} parent=1 // pred_check
      _
    $region27: #{run.13} parent=1 // pred_check_branch
      %316 = sbr.rel (0) target = $region29
    $region28: #{run.13} parent=1 // pred_region
      %318 = dma.done [#allocation3], 2048
    $region29: #{run.13} parent=1 // pred_fallthru
      _
    %319 = vsyncpa [#allocation3], 1

</llo_original>
